<compile_context>
chip_gen: v6e
topology: v6e:2x2x1
jax: 0.10.0
libtpu: 0.0.40
codegen_flags: <defaults>
</compile_context>

<pallas_src>
import functools

import jax
import jax.numpy as jnp
from jax import lax
from jax.experimental import pallas as pl
from jax.experimental.pallas import tpu as pltpu


# ----------------------------------------------------------------------------
# helpers
# ----------------------------------------------------------------------------
def _mish(v):
    # x * tanh(softplus(x)) == x * (1 - 2 / ((1+e^x)^2 + 1)); matches torch's
    # softplus threshold=20 behaviour (factor == 1.0 to f32 precision there).
    e = jnp.exp(jnp.minimum(v, 20.0))
    u = 1.0 + e
    return v * (1.0 - 2.0 * pl.reciprocal(u * u + 1.0, approx=True))


def _mish_ref(v):  # pure-JAX reference mish (torch-style)
    sp = jnp.where(v > 20.0, v, jnp.log1p(jnp.exp(jnp.minimum(v, 20.0))))
    return v * jnp.tanh(sp)


# ----------------------------------------------------------------------------
# Fused ConvBlock kernel:
#   [pos_enc(t) per-channel add] -> GroupNorm(32) -> Mish -> 3x3 conv (+bias)
#   [-> + residual]
# One grid step == one batch image (whole image resident in VMEM).
# ----------------------------------------------------------------------------
def _fused_block_kernel(*refs, H, W, gs, eps, has_add, has_res, use_im2col):
    i = 0
    if has_add:
        t_ref, pw1_ref, pb1_ref, pw2_ref, pb2_ref = refs[i:i + 5]
        i += 5
    x_ref, gamma_ref, beta_ref, gmat_ref, w_ref, b_ref = refs[i:i + 6]
    i += 6
    res_ref = refs[i] if has_res else None
    i += 1 if has_res else 0
    out_ref = refs[i]
    xpad_ref = refs[i + 1]

    x = x_ref[0].astype(jnp.float32)                       # (H, W, Cin)
    cin = x.shape[-1]
    cout = out_ref.shape[-1]
    hw = float(H * W)

    # --- time-MLP: Linear -> Mish -> Linear (tiny; recomputed per image) -----
    if has_add:
        t = t_ref[0].astype(jnp.float32)                   # (1, T)
        h1 = jnp.dot(t, pw1_ref[...], preferred_element_type=jnp.float32)
        h1 = _mish(h1 + pb1_ref[...])
        add = jnp.dot(h1, pw2_ref[...],
                      preferred_element_type=jnp.float32) + pb2_ref[...]  # (1, Cin)

    # --- GroupNorm statistics (f32; per-channel add folded analytically) -----
    xf = x.reshape(H * W, cin)
    s = jnp.sum(xf, axis=0, keepdims=True)                 # (1, Cin)
    ss = jnp.sum(xf * xf, axis=0, keepdims=True)           # (1, Cin)
    if has_add:
        ss = ss + 2.0 * add * s + hw * add * add           # uses original s
        s = s + hw * add
    stats = jnp.concatenate([s, ss], axis=0)               # (2, Cin)
    g = jnp.dot(stats, gmat_ref[...], preferred_element_type=jnp.float32)
    cnt = hw * gs
    mean = g[0:1] / cnt
    var = g[1:2] / cnt - mean * mean                       # biased var (torch GN)
    inv = lax.rsqrt(var + eps)
    scale = inv * gamma_ref[...]                           # (1, Cin)
    shift = beta_ref[...] - mean * scale
    if has_add:
        shift = shift + add * scale                        # fold the pre-norm add

    # --- normalize + Mish, write into padded VMEM scratch (halo = 0) ---------
    y = _mish(x * scale[:, None, :] + shift[:, None, :])   # (H, W, Cin) f32
    xpad_ref[...] = jnp.zeros_like(xpad_ref)
    xpad_ref[1:H + 1, 1:W + 1, :] = y.astype(xpad_ref.dtype)
    xp = xpad_ref[...]                                     # (H+2, W+2, Cin)

    # --- 3x3 conv: one big-K MXU matmul (bf16 operands, f32 accumulation) ----
    if use_im2col:
        patches = [xp[dy:dy + H, dx:dx + W, :].reshape(H * W, cin)
                   for dy in range(3) for dx in range(3)]
        patch = jnp.concatenate(patches, axis=-1).astype(jnp.bfloat16)  # (H*W, 9*Cin)
        acc = jnp.dot(patch, w_ref[...], preferred_element_type=jnp.float32)
    else:  # very large Cin: 9 shifted matmuls, K = Cin each
        acc = jnp.zeros((H * W, cout), jnp.float32)
        for k, (dy, dx) in enumerate([(a, b) for a in range(3) for b in range(3)]):
            p = xp[dy:dy + H, dx:dx + W, :].reshape(H * W, cin).astype(jnp.bfloat16)
            acc += jnp.dot(p, w_ref[k * cin:(k + 1) * cin, :],
                           preferred_element_type=jnp.float32)

    out = acc.reshape(H, W, cout) + b_ref[...][:, None, :]
    if has_res:
        out = out + res_ref[0].astype(jnp.float32)
    out_ref[...] = out[None].astype(out_ref.dtype)


def fused_block(x, gamma, beta, conv_w, conv_b, *, num_groups=32, eps=1e-5,
                posenc=None, residual=None, out_dtype=None):
    """x: (N,H,W,Cin) NHWC. conv_w: (3,3,Cin,Cout) HWIO. conv_b: (Cout,).
    posenc: optional dict(t,(N,T); w1,(T,Cin); b1; w2,(Cin,Cin); b2) added
    per-channel before the GroupNorm.  residual: optional (N,H,W,Cout)."""
    N, H, W, Cin = x.shape
    Cout = conv_w.shape[-1]
    gs = Cin // num_groups
    cid = jnp.arange(Cin) // gs
    gmat = (cid[:, None] == cid[None, :]).astype(jnp.float32)      # (Cin, Cin)
    w_r = conv_w.reshape(9 * Cin, Cout).astype(jnp.bfloat16)       # im2col weights
    has_add = posenc is not None
    has_res = residual is not None
    use_im2col = Cin < 256

    args, in_specs = [], []
    if has_add:
        t = posenc['t']
        T = t.shape[-1]
        WC = posenc['w1'].shape[-1]
        args += [t.reshape(N, 1, T), posenc['w1'], posenc['b1'].reshape(1, WC),
                 posenc['w2'], posenc['b2'].reshape(1, WC)]
        in_specs += [pl.BlockSpec((1, 1, T), lambda n: (n, 0, 0)),
                     pl.BlockSpec((T, WC), lambda n: (0, 0)),
                     pl.BlockSpec((1, WC), lambda n: (0, 0)),
                     pl.BlockSpec((WC, WC), lambda n: (0, 0)),
                     pl.BlockSpec((1, WC), lambda n: (0, 0))]
    args += [x, gamma.reshape(1, Cin), beta.reshape(1, Cin), gmat, w_r,
             conv_b.reshape(1, Cout)]
    in_specs += [pl.BlockSpec((1, H, W, Cin), lambda n: (n, 0, 0, 0)),
                 pl.BlockSpec((1, Cin), lambda n: (0, 0)),
                 pl.BlockSpec((1, Cin), lambda n: (0, 0)),
                 pl.BlockSpec((Cin, Cin), lambda n: (0, 0)),
                 pl.BlockSpec((9 * Cin, Cout), lambda n: (0, 0)),
                 pl.BlockSpec((1, Cout), lambda n: (0, 0))]
    if has_res:
        args += [residual]
        in_specs += [pl.BlockSpec((1, H, W, Cout), lambda n: (n, 0, 0, 0))]

    kernel = functools.partial(_fused_block_kernel, H=H, W=W, gs=gs, eps=eps,
                               has_add=has_add, has_res=has_res,
                               use_im2col=use_im2col)
    out_dtype = out_dtype or x.dtype
    flops = 2 * N * H * W * 9 * Cin * Cout
    bytes_acc = (x.size + N * H * W * Cout) * 4 + int(w_r.size) * 2
    return pl.pallas_call(
        kernel,
        out_shape=jax.ShapeDtypeStruct((N, H, W, Cout), out_dtype),
        grid=(N,),
        in_specs=in_specs,
        out_specs=pl.BlockSpec((1, H, W, Cout), lambda n: (n, 0, 0, 0)),
        scratch_shapes=[pltpu.VMEM((H + 2, W + 2, Cin), jnp.float32)],
        compiler_params=pltpu.CompilerParams(dimension_semantics=("parallel",)),
        cost_estimate=pl.CostEstimate(flops=flops,
                                      transcendentals=2 * N * H * W * Cin,
                                      bytes_accessed=bytes_acc),
    )(*args)


# ----------------------------------------------------------------------------
# DecodingBlock: params + forward
# ----------------------------------------------------------------------------
def init_params(key, in_dim, out_dim, width, T):
    wdim = width * in_dim
    ks = jax.random.split(key, 8)
    nrm = lambda k, shape, s: s * jax.random.normal(k, shape, jnp.float32)
    return dict(
        gn1_gamma=jnp.ones((in_dim,), jnp.float32),
        gn1_beta=jnp.zeros((in_dim,), jnp.float32),
        conv1_w=nrm(ks[0], (3, 3, in_dim, wdim), 0.05),
        conv1_b=nrm(ks[1], (wdim,), 0.05),
        pe_w1=nrm(ks[2], (T, wdim), 0.1),
        pe_b1=nrm(ks[3], (wdim,), 0.05),
        pe_w2=nrm(ks[4], (wdim, wdim), 0.05),
        pe_b2=nrm(ks[5], (wdim,), 0.05),
        gn2_gamma=jnp.ones((wdim,), jnp.float32),
        gn2_beta=jnp.zeros((wdim,), jnp.float32),
        conv2_w=nrm(ks[6], (3, 3, wdim, out_dim), 0.05),
        conv2_b=nrm(ks[7], (out_dim,), 0.05),
    )


def decoding_block(params, x_nchw, t, in_dim, out_dim, upsample=False):
    x = jnp.transpose(x_nchw, (0, 2, 3, 1))                       # NCHW -> NHWC
    # block1: GN -> Mish -> (dropout=id) -> conv3x3   (one fused kernel)
    h = fused_block(x, params['gn1_gamma'], params['gn1_beta'],
                    params['conv1_w'], params['conv1_b'])
    # block2: +pos_enc(t) -> GN -> Mish -> (dropout=id) -> conv3x3 (+residual)
    posenc = dict(t=t, w1=params['pe_w1'], b1=params['pe_b1'],
                  w2=params['pe_w2'], b2=params['pe_b2'])
    res = x if in_dim == out_dim else None
    out = fused_block(h, params['gn2_gamma'], params['gn2_beta'],
                      params['conv2_w'], params['conv2_b'],
                      posenc=posenc, residual=res, out_dtype=x.dtype)
    if upsample:
        # TODO(synk): 2x bilinear upsample (align_corners=False) not implemented
        # as a Pallas kernel; module default is upsample=False.
        raise NotImplementedError("bilinear upsample not implemented")
    return jnp.transpose(out, (0, 3, 1, 2))                       # NHWC -> NCHW


# ----------------------------------------------------------------------------
# pure-JAX reference (correctness sanity check)
# ----------------------------------------------------------------------------
def reference(params, x_nchw, t, in_dim, out_dim):
    x = jnp.transpose(x_nchw, (0, 2, 3, 1)).astype(jnp.float32)

    def gn(v, gamma, beta, groups=32, eps=1e-5):
        N, H, W, C = v.shape
        vg = v.reshape(N, H, W, groups, C // groups)
        mean = vg.mean(axis=(1, 2, 4), keepdims=True)
        var = vg.var(axis=(1, 2, 4), keepdims=True)
        vn = ((vg - mean) / jnp.sqrt(var + eps)).reshape(N, H, W, C)
        return vn * gamma + beta

    def conv(v, w, b):
        return lax.conv_general_dilated(
            v, w, (1, 1), 'SAME',
            dimension_numbers=('NHWC', 'HWIO', 'NHWC')) + b

    h = conv(_mish_ref(gn(x, params['gn1_gamma'], params['gn1_beta'])),
             params['conv1_w'], params['conv1_b'])
    pe = jnp.dot(t, params['pe_w1']) + params['pe_b1']
    pe = jnp.dot(_mish_ref(pe), params['pe_w2']) + params['pe_b2']
    h = h + pe[:, None, None, :]
    h = conv(_mish_ref(gn(h, params['gn2_gamma'], params['gn2_beta'])),
             params['conv2_w'], params['conv2_b'])
    out = x + h if in_dim == out_dim else h
    return jnp.transpose(out, (0, 3, 1, 2))


if __name__ == "__main__":
    # GroupNorm(32, C) requires C % 32 == 0 -> inDim = 32
    in_dim, out_dim, width, T = 32, 32, 4, 8
    N, H, W = 2, 8, 8

    key = jax.random.PRNGKey(0)
    k_p, k_x, k_t = jax.random.split(key, 3)
    params = init_params(k_p, in_dim, out_dim, width, T)
    x = jax.random.normal(k_x, (N, in_dim, H, W), jnp.float32)   # NCHW like torch
    t = jax.random.normal(k_t, (N, T), jnp.float32)

    fwd = jax.jit(functools.partial(decoding_block, in_dim=in_dim,
                                    out_dim=out_dim, upsample=False))
    out = jax.block_until_ready(fwd(params, x, t))

    ref = reference(params, x, t, in_dim, out_dim)
    assert out.shape == (N, out_dim, H, W)
    max_abs = float(jnp.max(jnp.abs(out - ref)))
    rel = float(jnp.sqrt(jnp.sum((out - ref) ** 2)) / jnp.sqrt(jnp.sum(ref ** 2)))
    # bf16 MXU operands -> slightly looser abs tolerance, tight relative check
    assert max_abs < 5e-2 and rel < 1e-2, (max_abs, rel)

    print("KERNEL_OK")
</pallas_src>

<mosaic_0001>
module attributes {stable_mosaic.version = 11 : i64} {
  func.func @_fused_block_kernel(%arg0: i32, %arg1: memref<1x8x8x32xf32, #tpu.memory_space<vmem>>, %arg2: memref<1x32xf32, #tpu.memory_space<vmem>>, %arg3: memref<1x32xf32, #tpu.memory_space<vmem>>, %arg4: memref<32x32xf32, #tpu.memory_space<vmem>>, %arg5: memref<288x128xbf16, #tpu.memory_space<vmem>>, %arg6: memref<1x128xf32, #tpu.memory_space<vmem>>, %arg7: memref<1x8x8x128xf32, #tpu.memory_space<vmem>>, %arg8: memref<10x10x32xf32, #tpu.memory_space<vmem>>) attributes {dimension_semantics = [#tpu.dimension_semantics<parallel>], iteration_bounds = array<i64: 2>, scalar_prefetch = 0 : i64, scratch_operands = 1 : i64, tpu.core_type = #tpu.core_type<tc>, window_params = [{transform_indices = @transform_0, window_bounds = array<i64: 1, 8, 8, 32>}, {pipeline_mode = #tpu.pipeline_mode<synchronous>, transform_indices = @transform_1, window_bounds = array<i64: 1, 32>}, {pipeline_mode = #tpu.pipeline_mode<synchronous>, transform_indices = @transform_2, window_bounds = array<i64: 1, 32>}, {pipeline_mode = #tpu.pipeline_mode<synchronous>, transform_indices = @transform_3, window_bounds = array<i64: 32, 32>}, {pipeline_mode = #tpu.pipeline_mode<synchronous>, transform_indices = @transform_4, window_bounds = array<i64: 288, 128>}, {pipeline_mode = #tpu.pipeline_mode<synchronous>, transform_indices = @transform_5, window_bounds = array<i64: 1, 128>}, {transform_indices = @transform_6, window_bounds = array<i64: 1, 8, 8, 128>}]} {
    %c0 = arith.constant 0 : index
    %c0_0 = arith.constant 0 : index
    %c0_1 = arith.constant 0 : index
    %c0_2 = arith.constant 0 : index
    %0 = vector.load %arg1[%c0, %c0_0, %c0_1, %c0_2] : memref<1x8x8x32xf32, #tpu.memory_space<vmem>>, vector<1x8x8x32xf32>
    %1 = vector.shape_cast %0 : vector<1x8x8x32xf32> to vector<8x8x32xf32>
    %2 = vector.shape_cast %1 : vector<8x8x32xf32> to vector<64x32xf32>
    %cst = arith.constant dense<0.000000e+00> : vector<32xf32>
    %3 = vector.multi_reduction <add>, %2, %cst [0] : vector<64x32xf32> to vector<32xf32>
    %4 = vector.shape_cast %3 : vector<32xf32> to vector<1x32xf32>
    %5 = arith.mulf %2, %2 : vector<64x32xf32>
    %cst_3 = arith.constant dense<0.000000e+00> : vector<32xf32>
    %6 = vector.multi_reduction <add>, %5, %cst_3 [0] : vector<64x32xf32> to vector<32xf32>
    %7 = vector.shape_cast %6 : vector<32xf32> to vector<1x32xf32>
    %8 = tpu.concatenate %4, %7 in 0 : vector<1x32xf32>, vector<1x32xf32> -> vector<2x32xf32>
    %c0_4 = arith.constant 0 : index
    %c0_5 = arith.constant 0 : index
    %9 = vector.load %arg4[%c0_4, %c0_5] : memref<32x32xf32, #tpu.memory_space<vmem>>, vector<32x32xf32>
    %cst_6 = arith.constant dense<0.000000e+00> : vector<2x32xf32>
    %10 = tpu.matmul %8, %9, %cst_6 {dimension_numbers = #tpu.dot_dimension_numbers<[1], [0], [0], [1], [0, 0, 1, 1], [], []>} : vector<2x32xf32>, vector<32x32xf32>, vector<2x32xf32> -> vector<2x32xf32>
    %11 = vector.extract_strided_slice %10 {offsets = [0, 0], sizes = [1, 32], strides = [1, 1]} : vector<2x32xf32> to vector<1x32xf32>
    %cst_7 = arith.constant 6.400000e+01 : f32
    %12 = vector.broadcast %cst_7 : f32 to vector<1x32xf32>
    %13 = arith.divf %11, %12 : vector<1x32xf32>
    %14 = vector.extract_strided_slice %10 {offsets = [1, 0], sizes = [1, 32], strides = [1, 1]} : vector<2x32xf32> to vector<1x32xf32>
    %cst_8 = arith.constant 6.400000e+01 : f32
    %15 = vector.broadcast %cst_8 : f32 to vector<1x32xf32>
    %16 = arith.divf %14, %15 : vector<1x32xf32>
    %17 = arith.mulf %13, %13 : vector<1x32xf32>
    %18 = arith.subf %16, %17 : vector<1x32xf32>
    %cst_9 = arith.constant 9.99999974E-6 : f32
    %19 = vector.broadcast %cst_9 : f32 to vector<1x32xf32>
    %20 = arith.addf %18, %19 : vector<1x32xf32>
    %21 = math.rsqrt %20 : vector<1x32xf32>
    %c0_10 = arith.constant 0 : index
    %c0_11 = arith.constant 0 : index
    %22 = vector.load %arg2[%c0_10, %c0_11] : memref<1x32xf32, #tpu.memory_space<vmem>>, vector<1x32xf32>
    %23 = arith.mulf %21, %22 : vector<1x32xf32>
    %c0_12 = arith.constant 0 : index
    %c0_13 = arith.constant 0 : index
    %24 = vector.load %arg3[%c0_12, %c0_13] : memref<1x32xf32, #tpu.memory_space<vmem>>, vector<1x32xf32>
    %25 = arith.mulf %13, %23 : vector<1x32xf32>
    %26 = arith.subf %24, %25 : vector<1x32xf32>
    %27 = vector.shape_cast %23 : vector<1x32xf32> to vector<1x1x32xf32>
    %28 = vector.broadcast %27 : vector<1x1x32xf32> to vector<8x8x32xf32>
    %29 = arith.mulf %1, %28 : vector<8x8x32xf32>
    %30 = vector.shape_cast %26 : vector<1x32xf32> to vector<1x1x32xf32>
    %31 = vector.broadcast %30 : vector<1x1x32xf32> to vector<8x8x32xf32>
    %32 = arith.addf %29, %31 : vector<8x8x32xf32>
    %cst_14 = arith.constant 2.000000e+01 : f32
    %33 = vector.broadcast %cst_14 : f32 to vector<8x8x32xf32>
    %34 = arith.minimumf %32, %33 : vector<8x8x32xf32>
    %35 = math.exp %34 : vector<8x8x32xf32>
    %cst_15 = arith.constant 1.000000e+00 : f32
    %36 = vector.broadcast %cst_15 : f32 to vector<8x8x32xf32>
    %37 = arith.addf %36, %35 : vector<8x8x32xf32>
    %38 = arith.mulf %37, %37 : vector<8x8x32xf32>
    %cst_16 = arith.constant 1.000000e+00 : f32
    %39 = vector.broadcast %cst_16 : f32 to vector<8x8x32xf32>
    %40 = arith.addf %38, %39 : vector<8x8x32xf32>
    %41 = tpu.reciprocal %40 {approx = true} : vector<8x8x32xf32> -> vector<8x8x32xf32>
    %cst_17 = arith.constant 2.000000e+00 : f32
    %42 = vector.broadcast %cst_17 : f32 to vector<8x8x32xf32>
    %43 = arith.mulf %42, %41 : vector<8x8x32xf32>
    %cst_18 = arith.constant 1.000000e+00 : f32
    %44 = vector.broadcast %cst_18 : f32 to vector<8x8x32xf32>
    %45 = arith.subf %44, %43 : vector<8x8x32xf32>
    %46 = arith.mulf %32, %45 : vector<8x8x32xf32>
    %cst_19 = arith.constant 0.000000e+00 : f32
    %47 = vector.broadcast %cst_19 : f32 to vector<10x10x32xf32>
    %c0_20 = arith.constant 0 : index
    %c0_21 = arith.constant 0 : index
    %c0_22 = arith.constant 0 : index
    %48 = vector.load %arg8[%c0_20, %c0_21, %c0_22] : memref<10x10x32xf32, #tpu.memory_space<vmem>>, vector<10x10x32xf32>
    tpu.vector_store %arg8[%c0_20, %c0_21, %c0_22], %47 {strides = array<i32>} : memref<10x10x32xf32, #tpu.memory_space<vmem>>, vector<10x10x32xf32>,
    %c1 = arith.constant 1 : index
    %c1_23 = arith.constant 1 : index
    %c0_24 = arith.constant 0 : index
    %49 = vector.load %arg8[%c1, %c1_23, %c0_24] : memref<10x10x32xf32, #tpu.memory_space<vmem>>, vector<8x8x32xf32>
    tpu.vector_store %arg8[%c1, %c1_23, %c0_24], %46 {strides = array<i32>} : memref<10x10x32xf32, #tpu.memory_space<vmem>>, vector<8x8x32xf32>,
    %c0_25 = arith.constant 0 : index
    %c0_26 = arith.constant 0 : index
    %c0_27 = arith.constant 0 : index
    %50 = vector.load %arg8[%c0_25, %c0_26, %c0_27] : memref<10x10x32xf32, #tpu.memory_space<vmem>>, vector<10x10x32xf32>
    %51 = vector.extract_strided_slice %50 {offsets = [0, 0, 0], sizes = [8, 8, 32], strides = [1, 1, 1]} : vector<10x10x32xf32> to vector<8x8x32xf32>
    %52 = vector.shape_cast %51 : vector<8x8x32xf32> to vector<64x32xf32>
    %53 = vector.extract_strided_slice %50 {offsets = [0, 1, 0], sizes = [8, 8, 32], strides = [1, 1, 1]} : vector<10x10x32xf32> to vector<8x8x32xf32>
    %54 = vector.shape_cast %53 : vector<8x8x32xf32> to vector<64x32xf32>
    %55 = vector.extract_strided_slice %50 {offsets = [0, 2, 0], sizes = [8, 8, 32], strides = [1, 1, 1]} : vector<10x10x32xf32> to vector<8x8x32xf32>
    %56 = vector.shape_cast %55 : vector<8x8x32xf32> to vector<64x32xf32>
    %57 = vector.extract_strided_slice %50 {offsets = [1, 0, 0], sizes = [8, 8, 32], strides = [1, 1, 1]} : vector<10x10x32xf32> to vector<8x8x32xf32>
    %58 = vector.shape_cast %57 : vector<8x8x32xf32> to vector<64x32xf32>
    %59 = vector.extract_strided_slice %50 {offsets = [1, 1, 0], sizes = [8, 8, 32], strides = [1, 1, 1]} : vector<10x10x32xf32> to vector<8x8x32xf32>
    %60 = vector.shape_cast %59 : vector<8x8x32xf32> to vector<64x32xf32>
    %61 = vector.extract_strided_slice %50 {offsets = [1, 2, 0], sizes = [8, 8, 32], strides = [1, 1, 1]} : vector<10x10x32xf32> to vector<8x8x32xf32>
    %62 = vector.shape_cast %61 : vector<8x8x32xf32> to vector<64x32xf32>
    %63 = vector.extract_strided_slice %50 {offsets = [2, 0, 0], sizes = [8, 8, 32], strides = [1, 1, 1]} : vector<10x10x32xf32> to vector<8x8x32xf32>
    %64 = vector.shape_cast %63 : vector<8x8x32xf32> to vector<64x32xf32>
    %65 = vector.extract_strided_slice %50 {offsets = [2, 1, 0], sizes = [8, 8, 32], strides = [1, 1, 1]} : vector<10x10x32xf32> to vector<8x8x32xf32>
    %66 = vector.shape_cast %65 : vector<8x8x32xf32> to vector<64x32xf32>
    %67 = vector.extract_strided_slice %50 {offsets = [2, 2, 0], sizes = [8, 8, 32], strides = [1, 1, 1]} : vector<10x10x32xf32> to vector<8x8x32xf32>
    %68 = vector.shape_cast %67 : vector<8x8x32xf32> to vector<64x32xf32>
    %69 = tpu.concatenate %52, %54, %56, %58, %60, %62, %64, %66, %68 in 1 : vector<64x32xf32>, vector<64x32xf32>, vector<64x32xf32>, vector<64x32xf32>, vector<64x32xf32>, vector<64x32xf32>, vector<64x32xf32>, vector<64x32xf32>, vector<64x32xf32> -> vector<64x288xf32>
    %70 = arith.truncf %69 : vector<64x288xf32> to vector<64x288xbf16>
    %c0_28 = arith.constant 0 : index
    %c0_29 = arith.constant 0 : index
    %71 = vector.load %arg5[%c0_28, %c0_29] : memref<288x128xbf16, #tpu.memory_space<vmem>>, vector<288x128xbf16>
    %cst_30 = arith.constant dense<0.000000e+00> : vector<64x128xf32>
    %72 = tpu.matmul %70, %71, %cst_30 {dimension_numbers = #tpu.dot_dimension_numbers<[1], [0], [0], [1], [0, 0, 1, 1], [], []>} : vector<64x288xbf16>, vector<288x128xbf16>, vector<64x128xf32> -> vector<64x128xf32>
    %73 = vector.shape_cast %72 : vector<64x128xf32> to vector<8x8x128xf32>
    %c0_31 = arith.constant 0 : index
    %c0_32 = arith.constant 0 : index
    %74 = vector.load %arg6[%c0_31, %c0_32] : memref<1x128xf32, #tpu.memory_space<vmem>>, vector<1x128xf32>
    %75 = vector.shape_cast %74 : vector<1x128xf32> to vector<1x1x128xf32>
    %76 = vector.broadcast %75 : vector<1x1x128xf32> to vector<8x8x128xf32>
    %77 = arith.addf %73, %76 : vector<8x8x128xf32>
    %78 = vector.shape_cast %77 : vector<8x8x128xf32> to vector<1x8x8x128xf32>
    %c0_33 = arith.constant 0 : index
    %c0_34 = arith.constant 0 : index
    %c0_35 = arith.constant 0 : index
    %c0_36 = arith.constant 0 : index
    %79 = vector.load %arg7[%c0_33, %c0_34, %c0_35, %c0_36] : memref<1x8x8x128xf32, #tpu.memory_space<vmem>>, vector<1x8x8x128xf32>
    tpu.vector_store %arg7[%c0_33, %c0_34, %c0_35, %c0_36], %78 {strides = array<i32>} : memref<1x8x8x128xf32, #tpu.memory_space<vmem>>, vector<1x8x8x128xf32>,
    return
  }
  func.func @transform_0(%arg0: i32) -> (i32, i32, i32, i32) {
    %c0_i32 = arith.constant 0 : i32
    %c0_i32_0 = arith.constant 0 : i32
    %c0_i32_1 = arith.constant 0 : i32
    %c0_i32_2 = arith.constant 0 : i32
    return %arg0, %c0_i32, %c0_i32_0, %c0_i32_1 : i32, i32, i32, i32
  }
  func.func @transform_1(%arg0: i32) -> (i32, i32) {
    %c0_i32 = arith.constant 0 : i32
    %c0_i32_0 = arith.constant 0 : i32
    %c0_i32_1 = arith.constant 0 : i32
    return %c0_i32, %c0_i32_0 : i32, i32
  }
  func.func @transform_2(%arg0: i32) -> (i32, i32) {
    %c0_i32 = arith.constant 0 : i32
    %c0_i32_0 = arith.constant 0 : i32
    %c0_i32_1 = arith.constant 0 : i32
    return %c0_i32, %c0_i32_0 : i32, i32
  }
  func.func @transform_3(%arg0: i32) -> (i32, i32) {
    %c0_i32 = arith.constant 0 : i32
    %c0_i32_0 = arith.constant 0 : i32
    %c0_i32_1 = arith.constant 0 : i32
    return %c0_i32, %c0_i32_0 : i32, i32
  }
  func.func @transform_4(%arg0: i32) -> (i32, i32) {
    %c0_i32 = arith.constant 0 : i32
    %c0_i32_0 = arith.constant 0 : i32
    %c0_i32_1 = arith.constant 0 : i32
    return %c0_i32, %c0_i32_0 : i32, i32
  }
  func.func @transform_5(%arg0: i32) -> (i32, i32) {
    %c0_i32 = arith.constant 0 : i32
    %c0_i32_0 = arith.constant 0 : i32
    %c0_i32_1 = arith.constant 0 : i32
    return %c0_i32, %c0_i32_0 : i32, i32
  }
  func.func @transform_6(%arg0: i32) -> (i32, i32, i32, i32) {
    %c0_i32 = arith.constant 0 : i32
    %c0_i32_0 = arith.constant 0 : i32
    %c0_i32_1 = arith.constant 0 : i32
    %c0_i32_2 = arith.constant 0 : i32
    return %arg0, %c0_i32, %c0_i32_0, %c0_i32_1 : i32, i32, i32, i32
  }
}

module attributes {stable_mosaic.version = 11 : i64} {
  func.func @_fused_block_kernel(%arg0: i32, %arg1: memref<1x1x8xf32, #tpu.memory_space<vmem>>, %arg2: memref<8x128xf32, #tpu.memory_space<vmem>>, %arg3: memref<1x128xf32, #tpu.memory_space<vmem>>, %arg4: memref<128x128xf32, #tpu.memory_space<vmem>>, %arg5: memref<1x128xf32, #tpu.memory_space<vmem>>, %arg6: memref<1x8x8x128xf32, #tpu.memory_space<vmem>>, %arg7: memref<1x128xf32, #tpu.memory_space<vmem>>, %arg8: memref<1x128xf32, #tpu.memory_space<vmem>>, %arg9: memref<128x128xf32, #tpu.memory_space<vmem>>, %arg10: memref<1152x32xbf16, #tpu.memory_space<vmem>>, %arg11: memref<1x32xf32, #tpu.memory_space<vmem>>, %arg12: memref<1x8x8x32xf32, #tpu.memory_space<vmem>>, %arg13: memref<1x8x8x32xf32, #tpu.memory_space<vmem>>, %arg14: memref<10x10x128xf32, #tpu.memory_space<vmem>>) attributes {dimension_semantics = [#tpu.dimension_semantics<parallel>], iteration_bounds = array<i64: 2>, scalar_prefetch = 0 : i64, scratch_operands = 1 : i64, tpu.core_type = #tpu.core_type<tc>, window_params = [{transform_indices = @transform_0, window_bounds = array<i64: 1, 1, 8>}, {pipeline_mode = #tpu.pipeline_mode<synchronous>, transform_indices = @transform_1, window_bounds = array<i64: 8, 128>}, {pipeline_mode = #tpu.pipeline_mode<synchronous>, transform_indices = @transform_2, window_bounds = array<i64: 1, 128>}, {pipeline_mode = #tpu.pipeline_mode<synchronous>, transform_indices = @transform_3, window_bounds = array<i64: 128, 128>}, {pipeline_mode = #tpu.pipeline_mode<synchronous>, transform_indices = @transform_4, window_bounds = array<i64: 1, 128>}, {transform_indices = @transform_5, window_bounds = array<i64: 1, 8, 8, 128>}, {pipeline_mode = #tpu.pipeline_mode<synchronous>, transform_indices = @transform_6, window_bounds = array<i64: 1, 128>}, {pipeline_mode = #tpu.pipeline_mode<synchronous>, transform_indices = @transform_7, window_bounds = array<i64: 1, 128>}, {pipeline_mode = #tpu.pipeline_mode<synchronous>, transform_indices = @transform_8, window_bounds = array<i64: 128, 128>}, {pipeline_mode = #tpu.pipeline_mode<synchronous>, transform_indices = @transform_9, window_bounds = array<i64: 1152, 32>}, {pipeline_mode = #tpu.pipeline_mode<synchronous>, transform_indices = @transform_10, window_bounds = array<i64: 1, 32>}, {transform_indices = @transform_11, window_bounds = array<i64: 1, 8, 8, 32>}, {transform_indices = @transform_12, window_bounds = array<i64: 1, 8, 8, 32>}]} {
    %c0 = arith.constant 0 : index
    %c0_0 = arith.constant 0 : index
    %c0_1 = arith.constant 0 : index
    %c0_2 = arith.constant 0 : index
    %0 = vector.load %arg6[%c0, %c0_0, %c0_1, %c0_2] : memref<1x8x8x128xf32, #tpu.memory_space<vmem>>, vector<1x8x8x128xf32>
    %1 = vector.shape_cast %0 : vector<1x8x8x128xf32> to vector<8x8x128xf32>
    %c0_3 = arith.constant 0 : index
    %c0_4 = arith.constant 0 : index
    %c0_5 = arith.constant 0 : index
    %2 = vector.load %arg1[%c0_3, %c0_4, %c0_5] : memref<1x1x8xf32, #tpu.memory_space<vmem>>, vector<1x1x8xf32>
    %3 = vector.shape_cast %2 : vector<1x1x8xf32> to vector<1x8xf32>
    %c0_6 = arith.constant 0 : index
    %c0_7 = arith.constant 0 : index
    %4 = vector.load %arg2[%c0_6, %c0_7] : memref<8x128xf32, #tpu.memory_space<vmem>>, vector<8x128xf32>
    %cst = arith.constant dense<0.000000e+00> : vector<1x128xf32>
    %5 = tpu.matmul %3, %4, %cst {dimension_numbers = #tpu.dot_dimension_numbers<[1], [0], [0], [1], [0, 0, 1, 1], [], []>} : vector<1x8xf32>, vector<8x128xf32>, vector<1x128xf32> -> vector<1x128xf32>
    %c0_8 = arith.constant 0 : index
    %c0_9 = arith.constant 0 : index
    %6 = vector.load %arg3[%c0_8, %c0_9] : memref<1x128xf32, #tpu.memory_space<vmem>>, vector<1x128xf32>
    %7 = arith.addf %5, %6 : vector<1x128xf32>
    %cst_10 = arith.constant 2.000000e+01 : f32
    %8 = vector.broadcast %cst_10 : f32 to vector<1x128xf32>
    %9 = arith.minimumf %7, %8 : vector<1x128xf32>
    %10 = math.exp %9 : vector<1x128xf32>
    %cst_11 = arith.constant 1.000000e+00 : f32
    %11 = vector.broadcast %cst_11 : f32 to vector<1x128xf32>
    %12 = arith.addf %11, %10 : vector<1x128xf32>
    %13 = arith.mulf %12, %12 : vector<1x128xf32>
    %cst_12 = arith.constant 1.000000e+00 : f32
    %14 = vector.broadcast %cst_12 : f32 to vector<1x128xf32>
    %15 = arith.addf %13, %14 : vector<1x128xf32>
    %16 = tpu.reciprocal %15 {approx = true} : vector<1x128xf32> -> vector<1x128xf32>
    %cst_13 = arith.constant 2.000000e+00 : f32
    %17 = vector.broadcast %cst_13 : f32 to vector<1x128xf32>
    %18 = arith.mulf %17, %16 : vector<1x128xf32>
    %cst_14 = arith.constant 1.000000e+00 : f32
    %19 = vector.broadcast %cst_14 : f32 to vector<1x128xf32>
    %20 = arith.subf %19, %18 : vector<1x128xf32>
    %21 = arith.mulf %7, %20 : vector<1x128xf32>
    %c0_15 = arith.constant 0 : index
    %c0_16 = arith.constant 0 : index
    %22 = vector.load %arg4[%c0_15, %c0_16] : memref<128x128xf32, #tpu.memory_space<vmem>>, vector<128x128xf32>
    %cst_17 = arith.constant dense<0.000000e+00> : vector<1x128xf32>
    %23 = tpu.matmul %21, %22, %cst_17 {dimension_numbers = #tpu.dot_dimension_numbers<[1], [0], [0], [1], [0, 0, 1, 1], [], []>} : vector<1x128xf32>, vector<128x128xf32>, vector<1x128xf32> -> vector<1x128xf32>
    %c0_18 = arith.constant 0 : index
    %c0_19 = arith.constant 0 : index
    %24 = vector.load %arg5[%c0_18, %c0_19] : memref<1x128xf32, #tpu.memory_space<vmem>>, vector<1x128xf32>
    %25 = arith.addf %23, %24 : vector<1x128xf32>
    %26 = vector.shape_cast %1 : vector<8x8x128xf32> to vector<64x128xf32>
    %cst_20 = arith.constant dense<0.000000e+00> : vector<128xf32>
    %27 = vector.multi_reduction <add>, %26, %cst_20 [0] : vector<64x128xf32> to vector<128xf32>
    %28 = vector.shape_cast %27 : vector<128xf32> to vector<1x128xf32>
    %29 = arith.mulf %26, %26 : vector<64x128xf32>
    %cst_21 = arith.constant dense<0.000000e+00> : vector<128xf32>
    %30 = vector.multi_reduction <add>, %29, %cst_21 [0] : vector<64x128xf32> to vector<128xf32>
    %31 = vector.shape_cast %30 : vector<128xf32> to vector<1x128xf32>
    %cst_22 = arith.constant 2.000000e+00 : f32
    %32 = vector.broadcast %cst_22 : f32 to vector<1x128xf32>
    %33 = arith.mulf %32, %25 : vector<1x128xf32>
    %34 = arith.mulf %33, %28 : vector<1x128xf32>
    %35 = arith.addf %31, %34 : vector<1x128xf32>
    %cst_23 = arith.constant 6.400000e+01 : f32
    %36 = vector.broadcast %cst_23 : f32 to vector<1x128xf32>
    %37 = arith.mulf %36, %25 : vector<1x128xf32>
    %38 = arith.mulf %37, %25 : vector<1x128xf32>
    %39 = arith.addf %35, %38 : vector<1x128xf32>
    %cst_24 = arith.constant 6.400000e+01 : f32
    %40 = vector.broadcast %cst_24 : f32 to vector<1x128xf32>
    %41 = arith.mulf %40, %25 : vector<1x128xf32>
    %42 = arith.addf %28, %41 : vector<1x128xf32>
    %43 = tpu.concatenate %42, %39 in 0 : vector<1x128xf32>, vector<1x128xf32> -> vector<2x128xf32>
    %c0_25 = arith.constant 0 : index
    %c0_26 = arith.constant 0 : index
    %44 = vector.load %arg9[%c0_25, %c0_26] : memref<128x128xf32, #tpu.memory_space<vmem>>, vector<128x128xf32>
    %cst_27 = arith.constant dense<0.000000e+00> : vector<2x128xf32>
    %45 = tpu.matmul %43, %44, %cst_27 {dimension_numbers = #tpu.dot_dimension_numbers<[1], [0], [0], [1], [0, 0, 1, 1], [], []>} : vector<2x128xf32>, vector<128x128xf32>, vector<2x128xf32> -> vector<2x128xf32>
    %46 = vector.extract_strided_slice %45 {offsets = [0, 0], sizes = [1, 128], strides = [1, 1]} : vector<2x128xf32> to vector<1x128xf32>
    %cst_28 = arith.constant 2.560000e+02 : f32
    %47 = vector.broadcast %cst_28 : f32 to vector<1x128xf32>
    %48 = arith.divf %46, %47 : vector<1x128xf32>
    %49 = vector.extract_strided_slice %45 {offsets = [1, 0], sizes = [1, 128], strides = [1, 1]} : vector<2x128xf32> to vector<1x128xf32>
    %cst_29 = arith.constant 2.560000e+02 : f32
    %50 = vector.broadcast %cst_29 : f32 to vector<1x128xf32>
    %51 = arith.divf %49, %50 : vector<1x128xf32>
    %52 = arith.mulf %48, %48 : vector<1x128xf32>
    %53 = arith.subf %51, %52 : vector<1x128xf32>
    %cst_30 = arith.constant 9.99999974E-6 : f32
    %54 = vector.broadcast %cst_30 : f32 to vector<1x128xf32>
    %55 = arith.addf %53, %54 : vector<1x128xf32>
    %56 = math.rsqrt %55 : vector<1x128xf32>
    %c0_31 = arith.constant 0 : index
    %c0_32 = arith.constant 0 : index
    %57 = vector.load %arg7[%c0_31, %c0_32] : memref<1x128xf32, #tpu.memory_space<vmem>>, vector<1x128xf32>
    %58 = arith.mulf %56, %57 : vector<1x128xf32>
    %c0_33 = arith.constant 0 : index
    %c0_34 = arith.constant 0 : index
    %59 = vector.load %arg8[%c0_33, %c0_34] : memref<1x128xf32, #tpu.memory_space<vmem>>, vector<1x128xf32>
    %60 = arith.mulf %48, %58 : vector<1x128xf32>
    %61 = arith.subf %59, %60 : vector<1x128xf32>
    %62 = arith.mulf %25, %58 : vector<1x128xf32>
    %63 = arith.addf %61, %62 : vector<1x128xf32>
    %64 = vector.shape_cast %58 : vector<1x128xf32> to vector<1x1x128xf32>
    %65 = vector.broadcast %64 : vector<1x1x128xf32> to vector<8x8x128xf32>
    %66 = arith.mulf %1, %65 : vector<8x8x128xf32>
    %67 = vector.shape_cast %63 : vector<1x128xf32> to vector<1x1x128xf32>
    %68 = vector.broadcast %67 : vector<1x1x128xf32> to vector<8x8x128xf32>
    %69 = arith.addf %66, %68 : vector<8x8x128xf32>
    %cst_35 = arith.constant 2.000000e+01 : f32
    %70 = vector.broadcast %cst_35 : f32 to vector<8x8x128xf32>
    %71 = arith.minimumf %69, %70 : vector<8x8x128xf32>
    %72 = math.exp %71 : vector<8x8x128xf32>
    %cst_36 = arith.constant 1.000000e+00 : f32
    %73 = vector.broadcast %cst_36 : f32 to vector<8x8x128xf32>
    %74 = arith.addf %73, %72 : vector<8x8x128xf32>
    %75 = arith.mulf %74, %74 : vector<8x8x128xf32>
    %cst_37 = arith.constant 1.000000e+00 : f32
    %76 = vector.broadcast %cst_37 : f32 to vector<8x8x128xf32>
    %77 = arith.addf %75, %76 : vector<8x8x128xf32>
    %78 = tpu.reciprocal %77 {approx = true} : vector<8x8x128xf32> -> vector<8x8x128xf32>
    %cst_38 = arith.constant 2.000000e+00 : f32
    %79 = vector.broadcast %cst_38 : f32 to vector<8x8x128xf32>
    %80 = arith.mulf %79, %78 : vector<8x8x128xf32>
    %cst_39 = arith.constant 1.000000e+00 : f32
    %81 = vector.broadcast %cst_39 : f32 to vector<8x8x128xf32>
    %82 = arith.subf %81, %80 : vector<8x8x128xf32>
    %83 = arith.mulf %69, %82 : vector<8x8x128xf32>
    %cst_40 = arith.constant 0.000000e+00 : f32
    %84 = vector.broadcast %cst_40 : f32 to vector<10x10x128xf32>
    %c0_41 = arith.constant 0 : index
    %c0_42 = arith.constant 0 : index
    %c0_43 = arith.constant 0 : index
    %85 = vector.load %arg14[%c0_41, %c0_42, %c0_43] : memref<10x10x128xf32, #tpu.memory_space<vmem>>, vector<10x10x128xf32>
    tpu.vector_store %arg14[%c0_41, %c0_42, %c0_43], %84 {strides = array<i32>} : memref<10x10x128xf32, #tpu.memory_space<vmem>>, vector<10x10x128xf32>,
    %c1 = arith.constant 1 : index
    %c1_44 = arith.constant 1 : index
    %c0_45 = arith.constant 0 : index
    %86 = vector.load %arg14[%c1, %c1_44, %c0_45] : memref<10x10x128xf32, #tpu.memory_space<vmem>>, vector<8x8x128xf32>
    tpu.vector_store %arg14[%c1, %c1_44, %c0_45], %83 {strides = array<i32>} : memref<10x10x128xf32, #tpu.memory_space<vmem>>, vector<8x8x128xf32>,
    %c0_46 = arith.constant 0 : index
    %c0_47 = arith.constant 0 : index
    %c0_48 = arith.constant 0 : index
    %87 = vector.load %arg14[%c0_46, %c0_47, %c0_48] : memref<10x10x128xf32, #tpu.memory_space<vmem>>, vector<10x10x128xf32>
    %88 = vector.extract_strided_slice %87 {offsets = [0, 0, 0], sizes = [8, 8, 128], strides = [1, 1, 1]} : vector<10x10x128xf32> to vector<8x8x128xf32>
    %89 = vector.shape_cast %88 : vector<8x8x128xf32> to vector<64x128xf32>
    %90 = vector.extract_strided_slice %87 {offsets = [0, 1, 0], sizes = [8, 8, 128], strides = [1, 1, 1]} : vector<10x10x128xf32> to vector<8x8x128xf32>
    %91 = vector.shape_cast %90 : vector<8x8x128xf32> to vector<64x128xf32>
    %92 = vector.extract_strided_slice %87 {offsets = [0, 2, 0], sizes = [8, 8, 128], strides = [1, 1, 1]} : vector<10x10x128xf32> to vector<8x8x128xf32>
    %93 = vector.shape_cast %92 : vector<8x8x128xf32> to vector<64x128xf32>
    %94 = vector.extract_strided_slice %87 {offsets = [1, 0, 0], sizes = [8, 8, 128], strides = [1, 1, 1]} : vector<10x10x128xf32> to vector<8x8x128xf32>
    %95 = vector.shape_cast %94 : vector<8x8x128xf32> to vector<64x128xf32>
    %96 = vector.extract_strided_slice %87 {offsets = [1, 1, 0], sizes = [8, 8, 128], strides = [1, 1, 1]} : vector<10x10x128xf32> to vector<8x8x128xf32>
    %97 = vector.shape_cast %96 : vector<8x8x128xf32> to vector<64x128xf32>
    %98 = vector.extract_strided_slice %87 {offsets = [1, 2, 0], sizes = [8, 8, 128], strides = [1, 1, 1]} : vector<10x10x128xf32> to vector<8x8x128xf32>
    %99 = vector.shape_cast %98 : vector<8x8x128xf32> to vector<64x128xf32>
    %100 = vector.extract_strided_slice %87 {offsets = [2, 0, 0], sizes = [8, 8, 128], strides = [1, 1, 1]} : vector<10x10x128xf32> to vector<8x8x128xf32>
    %101 = vector.shape_cast %100 : vector<8x8x128xf32> to vector<64x128xf32>
    %102 = vector.extract_strided_slice %87 {offsets = [2, 1, 0], sizes = [8, 8, 128], strides = [1, 1, 1]} : vector<10x10x128xf32> to vector<8x8x128xf32>
    %103 = vector.shape_cast %102 : vector<8x8x128xf32> to vector<64x128xf32>
    %104 = vector.extract_strided_slice %87 {offsets = [2, 2, 0], sizes = [8, 8, 128], strides = [1, 1, 1]} : vector<10x10x128xf32> to vector<8x8x128xf32>
    %105 = vector.shape_cast %104 : vector<8x8x128xf32> to vector<64x128xf32>
    %106 = tpu.concatenate %89, %91, %93, %95, %97, %99, %101, %103, %105 in 1 : vector<64x128xf32>, vector<64x128xf32>, vector<64x128xf32>, vector<64x128xf32>, vector<64x128xf32>, vector<64x128xf32>, vector<64x128xf32>, vector<64x128xf32>, vector<64x128xf32> -> vector<64x1152xf32>
    %107 = arith.truncf %106 : vector<64x1152xf32> to vector<64x1152xbf16>
    %c0_49 = arith.constant 0 : index
    %c0_50 = arith.constant 0 : index
    %108 = vector.load %arg10[%c0_49, %c0_50] : memref<1152x32xbf16, #tpu.memory_space<vmem>>, vector<1152x32xbf16>
    %cst_51 = arith.constant dense<0.000000e+00> : vector<64x32xf32>
    %109 = tpu.matmul %107, %108, %cst_51 {dimension_numbers = #tpu.dot_dimension_numbers<[1], [0], [0], [1], [0, 0, 1, 1], [], []>} : vector<64x1152xbf16>, vector<1152x32xbf16>, vector<64x32xf32> -> vector<64x32xf32>
    %110 = vector.shape_cast %109 : vector<64x32xf32> to vector<8x8x32xf32>
    %c0_52 = arith.constant 0 : index
    %c0_53 = arith.constant 0 : index
    %111 = vector.load %arg11[%c0_52, %c0_53] : memref<1x32xf32, #tpu.memory_space<vmem>>, vector<1x32xf32>
    %112 = vector.shape_cast %111 : vector<1x32xf32> to vector<1x1x32xf32>
    %113 = vector.broadcast %112 : vector<1x1x32xf32> to vector<8x8x32xf32>
    %114 = arith.addf %110, %113 : vector<8x8x32xf32>
    %c0_54 = arith.constant 0 : index
    %c0_55 = arith.constant 0 : index
    %c0_56 = arith.constant 0 : index
    %c0_57 = arith.constant 0 : index
    %115 = vector.load %arg12[%c0_54, %c0_55, %c0_56, %c0_57] : memref<1x8x8x32xf32, #tpu.memory_space<vmem>>, vector<1x8x8x32xf32>
    %116 = vector.shape_cast %115 : vector<1x8x8x32xf32> to vector<8x8x32xf32>
    %117 = arith.addf %114, %116 : vector<8x8x32xf32>
    %118 = vector.shape_cast %117 : vector<8x8x32xf32> to vector<1x8x8x32xf32>
    %c0_58 = arith.constant 0 : index
    %c0_59 = arith.constant 0 : index
    %c0_60 = arith.constant 0 : index
    %c0_61 = arith.constant 0 : index
    %119 = vector.load %arg13[%c0_58, %c0_59, %c0_60, %c0_61] : memref<1x8x8x32xf32, #tpu.memory_space<vmem>>, vector<1x8x8x32xf32>
    tpu.vector_store %arg13[%c0_58, %c0_59, %c0_60, %c0_61], %118 {strides = array<i32>} : memref<1x8x8x32xf32, #tpu.memory_space<vmem>>, vector<1x8x8x32xf32>,
    return
  }
  func.func @transform_0(%arg0: i32) -> (i32, i32, i32) {
    %c0_i32 = arith.constant 0 : i32
    %c0_i32_0 = arith.constant 0 : i32
    %c0_i32_1 = arith.constant 0 : i32
    return %arg0, %c0_i32, %c0_i32_0 : i32, i32, i32
  }
  func.func @transform_1(%arg0: i32) -> (i32, i32) {
    %c0_i32 = arith.constant 0 : i32
    %c0_i32_0 = arith.constant 0 : i32
    %c0_i32_1 = arith.constant 0 : i32
    return %c0_i32, %c0_i32_0 : i32, i32
  }
  func.func @transform_2(%arg0: i32) -> (i32, i32) {
    %c0_i32 = arith.constant 0 : i32
    %c0_i32_0 = arith.constant 0 : i32
    %c0_i32_1 = arith.constant 0 : i32
    return %c0_i32, %c0_i32_0 : i32, i32
  }
  func.func @transform_3(%arg0: i32) -> (i32, i32) {
    %c0_i32 = arith.constant 0 : i32
    %c0_i32_0 = arith.constant 0 : i32
    %c0_i32_1 = arith.constant 0 : i32
    return %c0_i32, %c0_i32_0 : i32, i32
  }
  func.func @transform_4(%arg0: i32) -> (i32, i32) {
    %c0_i32 = arith.constant 0 : i32
    %c0_i32_0 = arith.constant 0 : i32
    %c0_i32_1 = arith.constant 0 : i32
    return %c0_i32, %c0_i32_0 : i32, i32
  }
  func.func @transform_5(%arg0: i32) -> (i32, i32, i32, i32) {
    %c0_i32 = arith.constant 0 : i32
    %c0_i32_0 = arith.constant 0 : i32
    %c0_i32_1 = arith.constant 0 : i32
    %c0_i32_2 = arith.constant 0 : i32
    return %arg0, %c0_i32, %c0_i32_0, %c0_i32_1 : i32, i32, i32, i32
  }
  func.func @transform_6(%arg0: i32) -> (i32, i32) {
    %c0_i32 = arith.constant 0 : i32
    %c0_i32_0 = arith.constant 0 : i32
    %c0_i32_1 = arith.constant 0 : i32
    return %c0_i32, %c0_i32_0 : i32, i32
  }
  func.func @transform_7(%arg0: i32) -> (i32, i32) {
    %c0_i32 = arith.constant 0 : i32
    %c0_i32_0 = arith.constant 0 : i32
    %c0_i32_1 = arith.constant 0 : i32
    return %c0_i32, %c0_i32_0 : i32, i32
  }
  func.func @transform_8(%arg0: i32) -> (i32, i32) {
    %c0_i32 = arith.constant 0 : i32
    %c0_i32_0 = arith.constant 0 : i32
    %c0_i32_1 = arith.constant 0 : i32
    return %c0_i32, %c0_i32_0 : i32, i32
  }
  func.func @transform_9(%arg0: i32) -> (i32, i32) {
    %c0_i32 = arith.constant 0 : i32
    %c0_i32_0 = arith.constant 0 : i32
    %c0_i32_1 = arith.constant 0 : i32
    return %c0_i32, %c0_i32_0 : i32, i32
  }
  func.func @transform_10(%arg0: i32) -> (i32, i32) {
    %c0_i32 = arith.constant 0 : i32
    %c0_i32_0 = arith.constant 0 : i32
    %c0_i32_1 = arith.constant 0 : i32
    return %c0_i32, %c0_i32_0 : i32, i32
  }
  func.func @transform_11(%arg0: i32) -> (i32, i32, i32, i32) {
    %c0_i32 = arith.constant 0 : i32
    %c0_i32_0 = arith.constant 0 : i32
    %c0_i32_1 = arith.constant 0 : i32
    %c0_i32_2 = arith.constant 0 : i32
    return %arg0, %c0_i32, %c0_i32_0, %c0_i32_1 : i32, i32, i32, i32
  }
  func.func @transform_12(%arg0: i32) -> (i32, i32, i32, i32) {
    %c0_i32 = arith.constant 0 : i32
    %c0_i32_0 = arith.constant 0 : i32
    %c0_i32_1 = arith.constant 0 : i32
    %c0_i32_2 = arith.constant 0 : i32
    return %arg0, %c0_i32, %c0_i32_0, %c0_i32_1 : i32, i32, i32, i32
  }
}

</mosaic_0001>

<llo_original>
// kernel: decoding_block.2
$region0: #{decoding_block.2}
  #allocation0 [shape = 'u32[]', space=smem, size = 0x4, offset = 0x4, fixed_abs, tag = 'smem constant byte address 0x4 - core index']
  #allocation1 [shape = 'u32[144,128]{1,0:T(1,128)}', space=vmem, size = 0x12000, scoped, tag = 'internal scratch']
  #allocation2 [shape = 'f32[10,10,32]{2,1,0:T(8,128)}', space=vmem, size = 0x14000, scoped, tag = 'scratch operand']
  %s0 = inlined_call_operand.vmem [shape: f32[2,8,8,32], index: 0, kind: input, shape index: {}]
  %s1 = inlined_call_operand.vmem [shape: f32[1,32], index: 1, kind: input, shape index: {}]
  %s2 = inlined_call_operand.vmem [shape: f32[1,32], index: 2, kind: input, shape index: {}]
  %s3 = inlined_call_operand.vmem [shape: f32[32,32], index: 3, kind: input, shape index: {}]
  %s4 = inlined_call_operand.vmem [shape: bf16[288,128], index: 4, kind: input, shape index: {}]
  %s5 = inlined_call_operand.vmem [shape: f32[1,128], index: 5, kind: input, shape index: {}]
  %s6 = inlined_call_operand.vmem [shape: f32[2,8,8,128], index: 6, kind: output, shape index: {}]
  %s7 = sld [smem:[#allocation0]]
  $region57: #{decoding_block.2} parent=0
    _
  %s9 = ssub.s32 1, %s7
  %s10 = scalar_select 0, %s9, %s7
  loop: start=0, step=1, limit=4
  $region2: #{decoding_block.2} parent=0 // loop_pre_header
    _
  $region3: #{decoding_block.2} parent=0 // loop_header
    %s12 = sphi 0, %s16
    %p13 = scmp.ge.s32.totalorder %s12, 4
    %s22 = sphi 0, %s24
    %s25 = sphi 0, %s22
    %s26 = sphi 0, %s25
    %s42 = sphi 0, %s26
    %s46 = sphi 0, %s46
    %s48 = sphi 0, %s46
    %s49 = sphi 0, %s48
    %s63 = sphi 0, %s49
    %s67 = sphi 0, %s67
    %s69 = sphi 0, %s67
    %s70 = sphi 0, %s69
    %s84 = sphi 0, %s70
    %s88 = sphi 0, %s88
    %s90 = sphi 0, %s88
    %s91 = sphi 0, %s90
    %s105 = sphi 0, %s91
    %s109 = sphi 0, %s109
    %s111 = sphi 0, %s109
    %s112 = sphi 0, %s111
    %s126 = sphi 0, %s112
    %s130 = sphi 0, %s130
    %s132 = sphi 0, %s130
    %s133 = sphi 0, %s132
    %s147 = sphi 0, %s133
    %s153 = sphi 0, %s155
    %s156 = sphi 0, %s153
    %s157 = sphi 0, %s156
    %s173 = sphi 0, %s157
  $region4: #{decoding_block.2} parent=0 // loop_header_branch
    %15 = sbr.rel (%p13) target = $region8
  $region5: #{decoding_block.2} parent=0 // loop_body
    %s17 = ssub.s32 %s12, 1
    %s18 = ssub.s32 %s12, 2
    %s19 = sadd.s32 %s12, 1
    %s20 = ssub.s32 %s12, %s19
    %p21 = scmp.eq.s32.totalorder %s20, 0
    %s23 = sadd.s32 %s22, 1
    %s24 = scalar_select %p21, %s22, %s23
    %p27 = pneg %p21
    %p28 = scmp.eq.s32.totalorder %s12, 1
    %p29 = por %p27, %p28
    %p30 = scmp.ne.s32.totalorder %s22, %s25
    %p31 = scmp.eq.s32.totalorder %s12, 0
    %p32 = por %p30, %p31
    %p33 = scmp.ne.s32.totalorder %s22, %s25
    %p34 = scmp.eq.s32.totalorder %s17, 1
    %p35 = por %p33, %p34
    %p36 = scmp.ne.s32.totalorder %s25, %s26
    %p37 = scmp.eq.s32.totalorder %s17, 0
    %p38 = por %p36, %p37
    %p39 = scmp.ne.s32.totalorder %s25, %s26
    %p40 = scmp.eq.s32.totalorder %s18, 1
    %p41 = por %p39, %p40
    %p43 = scmp.ne.s32.totalorder %s26, %s42
    %p44 = scmp.eq.s32.totalorder %s18, 0
    %p45 = por %p43, %p44
    %s47 = sadd.s32 %s46, 1
    %p50 = scmp.eq.s32.totalorder %s12, 1
    %p51 = scmp.ne.s32.totalorder %s46, %s48
    %p52 = scmp.eq.s32.totalorder %s12, 0
    %p53 = por %p51, %p52
    %p54 = scmp.ne.s32.totalorder %s46, %s48
    %p55 = scmp.eq.s32.totalorder %s17, 1
    %p56 = por %p54, %p55
    %p57 = scmp.ne.s32.totalorder %s48, %s49
    %p58 = scmp.eq.s32.totalorder %s17, 0
    %p59 = por %p57, %p58
    %p60 = scmp.ne.s32.totalorder %s48, %s49
    %p61 = scmp.eq.s32.totalorder %s18, 1
    %p62 = por %p60, %p61
    %p64 = scmp.ne.s32.totalorder %s49, %s63
    %p65 = scmp.eq.s32.totalorder %s18, 0
    %p66 = por %p64, %p65
    %s68 = sadd.s32 %s67, 1
    %p71 = scmp.eq.s32.totalorder %s12, 1
    %p72 = scmp.ne.s32.totalorder %s67, %s69
    %p73 = scmp.eq.s32.totalorder %s12, 0
    %p74 = por %p72, %p73
    %p75 = scmp.ne.s32.totalorder %s67, %s69
    %p76 = scmp.eq.s32.totalorder %s17, 1
    %p77 = por %p75, %p76
    %p78 = scmp.ne.s32.totalorder %s69, %s70
    %p79 = scmp.eq.s32.totalorder %s17, 0
    %p80 = por %p78, %p79
    %p81 = scmp.ne.s32.totalorder %s69, %s70
    %p82 = scmp.eq.s32.totalorder %s18, 1
    %p83 = por %p81, %p82
    %p85 = scmp.ne.s32.totalorder %s70, %s84
    %p86 = scmp.eq.s32.totalorder %s18, 0
    %p87 = por %p85, %p86
    %s89 = sadd.s32 %s88, 1
    %p92 = scmp.eq.s32.totalorder %s12, 1
    %p93 = scmp.ne.s32.totalorder %s88, %s90
    %p94 = scmp.eq.s32.totalorder %s12, 0
    %p95 = por %p93, %p94
    %p96 = scmp.ne.s32.totalorder %s88, %s90
    %p97 = scmp.eq.s32.totalorder %s17, 1
    %p98 = por %p96, %p97
    %p99 = scmp.ne.s32.totalorder %s90, %s91
    %p100 = scmp.eq.s32.totalorder %s17, 0
    %p101 = por %p99, %p100
    %p102 = scmp.ne.s32.totalorder %s90, %s91
    %p103 = scmp.eq.s32.totalorder %s18, 1
    %p104 = por %p102, %p103
    %p106 = scmp.ne.s32.totalorder %s91, %s105
    %p107 = scmp.eq.s32.totalorder %s18, 0
    %p108 = por %p106, %p107
    %s110 = sadd.s32 %s109, 1
    %p113 = scmp.eq.s32.totalorder %s12, 1
    %p114 = scmp.ne.s32.totalorder %s109, %s111
    %p115 = scmp.eq.s32.totalorder %s12, 0
    %p116 = por %p114, %p115
    %p117 = scmp.ne.s32.totalorder %s109, %s111
    %p118 = scmp.eq.s32.totalorder %s17, 1
    %p119 = por %p117, %p118
    %p120 = scmp.ne.s32.totalorder %s111, %s112
    %p121 = scmp.eq.s32.totalorder %s17, 0
    %p122 = por %p120, %p121
    %p123 = scmp.ne.s32.totalorder %s111, %s112
    %p124 = scmp.eq.s32.totalorder %s18, 1
    %p125 = por %p123, %p124
    %p127 = scmp.ne.s32.totalorder %s112, %s126
    %p128 = scmp.eq.s32.totalorder %s18, 0
    %p129 = por %p127, %p128
    %s131 = sadd.s32 %s130, 1
    %p134 = scmp.eq.s32.totalorder %s12, 1
    %p135 = scmp.ne.s32.totalorder %s130, %s132
    %p136 = scmp.eq.s32.totalorder %s12, 0
    %p137 = por %p135, %p136
    %p138 = scmp.ne.s32.totalorder %s130, %s132
    %p139 = scmp.eq.s32.totalorder %s17, 1
    %p140 = por %p138, %p139
    %p141 = scmp.ne.s32.totalorder %s132, %s133
    %p142 = scmp.eq.s32.totalorder %s17, 0
    %p143 = por %p141, %p142
    %p144 = scmp.ne.s32.totalorder %s132, %s133
    %p145 = scmp.eq.s32.totalorder %s18, 1
    %p146 = por %p144, %p145
    %p148 = scmp.ne.s32.totalorder %s133, %s147
    %p149 = scmp.eq.s32.totalorder %s18, 0
    %p150 = por %p148, %p149
    %s151 = ssub.s32 %s12, %s19
    %p152 = scmp.eq.s32.totalorder %s151, 0
    %s154 = sadd.s32 %s153, 1
    %s155 = scalar_select %p152, %s153, %s154
    %p158 = pneg %p152
    %p159 = scmp.eq.s32.totalorder %s12, 1
    %p160 = por %p158, %p159
    %p161 = scmp.ne.s32.totalorder %s153, %s156
    %p162 = scmp.eq.s32.totalorder %s12, 0
    %p163 = por %p161, %p162
    %p164 = scmp.ne.s32.totalorder %s153, %s156
    %p165 = scmp.eq.s32.totalorder %s17, 1
    %p166 = por %p164, %p165
    %p167 = scmp.ne.s32.totalorder %s156, %s157
    %p168 = scmp.eq.s32.totalorder %s17, 0
    %p169 = por %p167, %p168
    %p170 = scmp.ne.s32.totalorder %s156, %s157
    %p171 = scmp.eq.s32.totalorder %s18, 1
    %p172 = por %p170, %p171
    %p174 = scmp.ne.s32.totalorder %s157, %s173
    %p175 = scmp.eq.s32.totalorder %s18, 0
    %p176 = por %p174, %p175
    %p177 = scmp.le.s32.totalorder 1, %s12
    %p178 = scmp.lt.s32.totalorder %s12, 3
    %p179 = pnand %p177, %p178
    %p180 = pneg %p179
    // Predicated region
    $region9: #{decoding_block.2} parent=5 // pred_check
      _
    $region10: #{decoding_block.2} parent=5 // pred_check_branch
      %182 = sbr.rel (%p179) target = $region12
    $region11: #{decoding_block.2} parent=5 // pred_region
      %s183 = ssub.s32 %s12, 1
      // Predicated region
      $region13: #{decoding_block.2} parent=11 // pred_check
        %p184 = pneg %p59
      $region14: #{decoding_block.2} parent=11 // pred_check_branch
        %186 = sbr.rel (%p184) target = $region16
      $region15: #{decoding_block.2} parent=11 // pred_region
        _
      $region16: #{decoding_block.2} parent=11 // pred_fallthru
        _
      // Predicated region
      $region17: #{decoding_block.2} parent=11 // pred_check
        %p187 = pneg %p80
      $region18: #{decoding_block.2} parent=11 // pred_check_branch
        %189 = sbr.rel (%p187) target = $region20
      $region19: #{decoding_block.2} parent=11 // pred_region
        _
      $region20: #{decoding_block.2} parent=11 // pred_fallthru
        _
      // Predicated region
      $region21: #{decoding_block.2} parent=11 // pred_check
        %p190 = pneg %p101
      $region22: #{decoding_block.2} parent=11 // pred_check_branch
        %192 = sbr.rel (%p190) target = $region24
      $region23: #{decoding_block.2} parent=11 // pred_region
        _
      $region24: #{decoding_block.2} parent=11 // pred_fallthru
        _
      // Predicated region
      $region25: #{decoding_block.2} parent=11 // pred_check
        %p193 = pneg %p122
      $region26: #{decoding_block.2} parent=11 // pred_check_branch
        %195 = sbr.rel (%p193) target = $region28
      $region27: #{decoding_block.2} parent=11 // pred_region
        _
      $region28: #{decoding_block.2} parent=11 // pred_fallthru
        _
      // Predicated region
      $region29: #{decoding_block.2} parent=11 // pred_check
        %p196 = pneg %p143
      $region30: #{decoding_block.2} parent=11 // pred_check_branch
        %198 = sbr.rel (%p196) target = $region32
      $region31: #{decoding_block.2} parent=11 // pred_region
        _
      $region32: #{decoding_block.2} parent=11 // pred_fallthru
        _
    $region12: #{decoding_block.2} parent=5 // pred_fallthru
      _
    %p199 = scmp.lt.s32.totalorder %s12, 2
    // Predicated region
    $region33: #{decoding_block.2} parent=5 // pred_check
      %p200 = pneg %p199
    $region34: #{decoding_block.2} parent=5 // pred_check_branch
      %202 = sbr.rel (%p200) target = $region36
    $region35: #{decoding_block.2} parent=5 // pred_region
      // Predicated region
      $region37: #{decoding_block.2} parent=35 // pred_check
        %p203 = pneg %p32
      $region38: #{decoding_block.2} parent=35 // pred_check_branch
        %205 = sbr.rel (%p203) target = $region40
      $region39: #{decoding_block.2} parent=35 // pred_region
        %p206 = scmp.lt.s32.totalorder %s12, 1
        %s207 = scalar_select %p206, %s12, 1
        %s208 = smul.addr %s207, 8
        %s209 = smul.addr %s208, 8
        %s210 = scalar_lea.vmem %s0, %s209
      $region40: #{decoding_block.2} parent=35 // pred_fallthru
        _
    $region36: #{decoding_block.2} parent=5 // pred_fallthru
      _
    %p211 = scmp.le.s32.totalorder 1, %s12
    %p212 = scmp.lt.s32.totalorder %s12, 3
    %p213 = pnand %p211, %p212
    %p214 = pneg %p213
    // Predicated region
    $region41: #{decoding_block.2} parent=5 // pred_check
      _
    $region42: #{decoding_block.2} parent=5 // pred_check_branch
      %216 = sbr.rel (%p213) target = $region44
    $region43: #{decoding_block.2} parent=5 // pred_region
      %s217 = ssub.s32 %s12, 1
      %p218 = scmp.lt.s32.totalorder %s17, 1
      %s219 = scalar_select %p218, %s17, 1
      %s220 = smul.addr %s219, 8
      %s221 = smul.addr %s220, 8
      %s222 = scalar_lea.vmem %s0, %s221
      %p223 = pneg %p38
      %p224 = pneg %p35
      %p225 = pneg %p59
      %p226 = pneg %p56
      %p227 = pneg %p80
      %p228 = pneg %p77
      %p229 = pneg %p101
      %p230 = pneg %p98
      %p231 = pneg %p122
      %p232 = pneg %p119
      %p233 = pneg %p143
      %p234 = pneg %p140
      %p235 = pneg %p169
      %p236 = pneg %p166
      %p237 = scmp.lt.s32.totalorder %s17, 1
      %s238 = scalar_select %p237, %s17, 1
      %s239 = smul.addr %s238, 8
      %s240 = smul.addr %s239, 8
      %s241 = scalar_lea.vmem %s6, %s240
      %p242 = scmp.lt.s32.totalorder %s17, 1
      %s243 = scalar_select %p242, %s17, 1
      %s244 = smul.addr %s243, 8
      %s245 = smul.addr %s244, 8
      %s246 = scalar_lea.vmem %s0, %s245
      %p247 = scmp.lt.s32.totalorder %s17, 1
      %s248 = scalar_select %p247, %s17, 1
      %s249 = smul.addr %s248, 8
      %s250 = smul.addr %s249, 8
      %s251 = scalar_lea.vmem %s6, %s250
      %v253 = vld [vmem:[%s246] sm:$0xff]
      %v254 = vld [vmem:[%s246 + $0x8] sm:$0xff]
      %v255 = vld [vmem:[%s246 + $0x10] sm:$0xff]
      %v256 = vld [vmem:[%s246 + $0x18] sm:$0xff]
      %v257 = vld [vmem:[%s246 + $0x20] sm:$0xff]
      %v258 = vld [vmem:[%s246 + $0x28] sm:$0xff]
      %v259 = vld [vmem:[%s246 + $0x30] sm:$0xff]
      %v260 = vld [vmem:[%s246 + $0x38] sm:$0xff]
      %vm261 = vcmask 261120
      %v262 = vsel %vm261, %v253, 0.0
      %v263 = vsel %vm261, %v254, 0.0
      %v264 = vadd.f32 %v262, %v263
      %v265 = vsel %vm261, %v255, 0.0
      %v266 = vadd.f32 %v264, %v265
      %v267 = vsel %vm261, %v256, 0.0
      %v268 = vadd.f32 %v266, %v267
      %v269 = vsel %vm261, %v257, 0.0
      %v270 = vadd.f32 %v268, %v269
      %v271 = vsel %vm261, %v258, 0.0
      %v272 = vadd.f32 %v270, %v271
      %v273 = vsel %vm261, %v259, 0.0
      %v274 = vadd.f32 %v272, %v273
      %v275 = vsel %vm261, %v260, 0.0
      %v276 = vadd.f32 %v274, %v275
      %v277 = vrot.slane %v276, 4
      %v278 = vadd.f32 %v276, %v277
      %v279 = vrot.slane %v278, 2
      %v280 = vadd.f32 %v278, %v279
      %v281 = vrot.slane %v280, 1
      %v282 = vadd.f32 %v280, %v281
      %v283 = vmul.f32 %v253, %v253
      %v284 = vmul.f32 %v254, %v254
      %v285 = vmul.f32 %v255, %v255
      %v286 = vmul.f32 %v256, %v256
      %v287 = vmul.f32 %v257, %v257
      %v288 = vmul.f32 %v258, %v258
      %v289 = vmul.f32 %v259, %v259
      %v290 = vmul.f32 %v260, %v260
      %v291 = vsel %vm261, %v283, 0.0
      %v292 = vsel %vm261, %v284, 0.0
      %v293 = vadd.f32 %v291, %v292
      %v294 = vsel %vm261, %v285, 0.0
      %v295 = vadd.f32 %v293, %v294
      %v296 = vsel %vm261, %v286, 0.0
      %v297 = vadd.f32 %v295, %v296
      %v298 = vsel %vm261, %v287, 0.0
      %v299 = vadd.f32 %v297, %v298
      %v300 = vsel %vm261, %v288, 0.0
      %v301 = vadd.f32 %v299, %v300
      %v302 = vsel %vm261, %v289, 0.0
      %v303 = vadd.f32 %v301, %v302
      %v304 = vsel %vm261, %v290, 0.0
      %v305 = vadd.f32 %v303, %v304
      %v306 = vrot.slane %v305, 4
      %v307 = vadd.f32 %v305, %v306
      %v308 = vrot.slane %v307, 2
      %v309 = vadd.f32 %v307, %v308
      %v310 = vrot.slane %v309, 1
      %v311 = vadd.f32 %v309, %v310
      %vm312 = vcmask 1040384
      %v313 = vsel %vm312, %v282, %v311
      %v314 = vld [vmem:[%s3] sm:$0xff]
      %v315 = vld [vmem:[%s3 + $0x8] sm:$0xff]
      %v316 = vld [vmem:[%s3 + $0x10] sm:$0xff]
      %v317 = vld [vmem:[%s3 + $0x18] sm:$0xff]
      %v319 = vsel %vm261, %v313, 0
      %321 = vmatprep.subr.mxu0 0.0
      %322 = vmatpush1.msra.mxu0 0.0
      %323 = vmatprep.subr.mxu0 0.0
      %324 = vmatpush1.msra.mxu0 0.0
      %325 = vmatprep.subr.mxu0 0.0
      %326 = vmatpush1.msra.mxu0 0.0
      %327 = vmatprep.subr.mxu0 0.0
      %328 = vmatpush1.msra.mxu0 0.0
      %329 = vmatprep.subr.mxu0 0.0
      %330 = vmatpush1.msra.mxu0 0.0
      %331 = vmatprep.subr.mxu0 0.0
      %332 = vmatpush1.msra.mxu0 0.0
      %333 = vmatprep.subr.mxu0 0.0
      %334 = vmatpush1.msra.mxu0 0.0
      %335 = vmatprep.subr.mxu0 0.0
      %336 = vmatpush1.msra.mxu0 0.0
      %337 = vmatprep.subr.mxu0 0.0
      %338 = vmatpush1.msra.mxu0 0.0
      %339 = vmatprep.subr.mxu0 0.0
      %340 = vmatpush1.msra.mxu0 0.0
      %341 = vmatprep.subr.mxu0 0.0
      %342 = vmatpush1.msra.mxu0 0.0
      %343 = vmatprep.subr.mxu0 0.0
      %344 = vmatpush1.msra.mxu0 0.0
      %345 = vmatprep.subr.mxu0 0.0
      %346 = vmatpush1.msra.mxu0 %v317
      %347 = vmatprep.subr.mxu0 0.0
      %348 = vmatpush1.msra.mxu0 %v316
      %349 = vmatprep.subr.mxu0 0.0
      %350 = vmatpush1.msra.mxu0 %v315
      %351 = vmatprep.subr.mxu0 0.0
      %352 = vmatpush1.msra.mxu0 %v314
      %353 = vmatprep.subr.mxu0 0.0
      %354 = vmatpush2.msra.mxu0 0.0
      %355 = vmatprep.subr.mxu0 0.0
      %356 = vmatpush2.msra.mxu0 0.0
      %357 = vmatprep.subr.mxu0 0.0
      %358 = vmatpush2.msra.mxu0 0.0
      %359 = vmatprep.subr.mxu0 0.0
      %360 = vmatpush2.msra.mxu0 0.0
      %361 = vmatprep.subr.mxu0 0.0
      %362 = vmatpush2.msra.mxu0 0.0
      %363 = vmatprep.subr.mxu0 0.0
      %364 = vmatpush2.msra.mxu0 0.0
      %365 = vmatprep.subr.mxu0 0.0
      %366 = vmatpush2.msra.mxu0 0.0
      %367 = vmatprep.subr.mxu0 0.0
      %368 = vmatpush2.msra.mxu0 0.0
      %369 = vmatprep.subr.mxu0 0.0
      %370 = vmatpush2.msra.mxu0 0.0
      %371 = vmatprep.subr.mxu0 0.0
      %372 = vmatpush2.msra.mxu0 0.0
      %373 = vmatprep.subr.mxu0 0.0
      %374 = vmatpush2.msra.mxu0 0.0
      %375 = vmatprep.subr.mxu0 0.0
      %376 = vmatpush2.msra.mxu0 0.0
      %377 = vmatprep.subr.mxu0 0.0
      %378 = vmatpush2.msra.mxu0 0.0
      %379 = vmatprep.subr.mxu0 0.0
      %380 = vmatpush2.msra.mxu0 0.0
      %381 = vmatprep.subr.mxu0 0.0
      %382 = vmatpush2.msra.mxu0 0.0
      %383 = vmatprep.subr.mxu0 0.0
      %384 = vmatpush2.msra.mxu0 0.0
      %385 = vmatprep.mubr.f32.mxu0 0.0
      %386 = vmatmul.mubr.f32.gmra.mxu0 %v319
      %v387 = vpop.f32.mrf.mxu0
      %v388 = vadd.f32 0.0, %v387
      %v389 = vpop.f32.mrf.mxu0
      %390 = vdwg.mxu0
      %v391 = vrcp.pop 64.0
      %v392 = vmul.f32 %v388, %v391
      %v393 = vmul.f32 %v392, %v392
      %v395 = vrot.slane %v393, 7
      %v397 = vsub.f32 %v392, %v395
      %v398 = vadd.f32 %v397, 1e-05
      %v399 = vrsqrt.pop %v398
      %v400 = vld [vmem:[%s1] sm:$0x1]
      %v402 = vlaneseq
      %v403 = vshrl.u32 %v402, 7
      %v404 = vsub.s32 0, %v403
      %v405 = vrot.slane %v400, %v404
      %v407 = vmul.f32 %v399, %v405
      %v408 = vld [vmem:[%s2] sm:$0x1]
      %v410 = vrot.slane %v407, 1
      %v412 = vmul.f32 %v392, %v410
      %v413 = vsub.f32 %v408, %v412
      %v414 = vlaneseq
      %v415 = vshrl.u32 %v414, 7
      %v416 = vsub.s32 1, %v415
      %v417 = vrot.slane %v407, %v416
      %v418 = vmul.f32 %v253, %v417
      %v419 = vmul.f32 %v254, %v417
      %v420 = vmul.f32 %v255, %v417
      %v421 = vmul.f32 %v256, %v417
      %v422 = vmul.f32 %v257, %v417
      %v423 = vmul.f32 %v258, %v417
      %v424 = vmul.f32 %v259, %v417
      %v425 = vmul.f32 %v260, %v417
      %v427 = vlaneseq
      %v428 = vshrl.u32 %v427, 7
      %v429 = vsub.s32 0, %v428
      %v430 = vrot.slane %v413, %v429
      %v432 = vadd.f32 %v418, %v430
      %v433 = vadd.f32 %v419, %v430
      %v434 = vadd.f32 %v420, %v430
      %v435 = vadd.f32 %v421, %v430
      %v436 = vadd.f32 %v422, %v430
      %v437 = vadd.f32 %v423, %v430
      %v438 = vadd.f32 %v424, %v430
      %v439 = vadd.f32 %v425, %v430
      %v440 = vmin.f32 %v432, 20.0
      %v441 = vmin.f32 %v433, 20.0
      %v442 = vmin.f32 %v434, 20.0
      %v443 = vmin.f32 %v435, 20.0
      %v444 = vmin.f32 %v436, 20.0
      %v445 = vmin.f32 %v437, 20.0
      %v446 = vmin.f32 %v438, 20.0
      %v447 = vmin.f32 %v439, 20.0
      %v448 = vmul.f32 %v440, 1.442695
      %v449 = vpow.pop %v448
      %v450 = vmul.f32 %v441, 1.442695
      %v451 = vpow.pop %v450
      %v452 = vmul.f32 %v442, 1.442695
      %v453 = vpow.pop %v452
      %v454 = vmul.f32 %v443, 1.442695
      %v455 = vpow.pop %v454
      %v456 = vmul.f32 %v444, 1.442695
      %v457 = vpow.pop %v456
      %v458 = vmul.f32 %v445, 1.442695
      %v459 = vpow.pop %v458
      %v460 = vmul.f32 %v446, 1.442695
      %v461 = vpow.pop %v460
      %v462 = vmul.f32 %v447, 1.442695
      %v463 = vpow.pop %v462
      %v464 = vadd.f32 %v449, 1.0
      %v465 = vadd.f32 %v451, 1.0
      %v466 = vadd.f32 %v453, 1.0
      %v467 = vadd.f32 %v455, 1.0
      %v468 = vadd.f32 %v457, 1.0
      %v469 = vadd.f32 %v459, 1.0
      %v470 = vadd.f32 %v461, 1.0
      %v471 = vadd.f32 %v463, 1.0
      %v472 = vmul.f32 %v464, %v464
      %v473 = vmul.f32 %v465, %v465
      %v474 = vmul.f32 %v466, %v466
      %v475 = vmul.f32 %v467, %v467
      %v476 = vmul.f32 %v468, %v468
      %v477 = vmul.f32 %v469, %v469
      %v478 = vmul.f32 %v470, %v470
      %v479 = vmul.f32 %v471, %v471
      %v480 = vadd.f32 %v472, 1.0
      %v481 = vadd.f32 %v473, 1.0
      %v482 = vadd.f32 %v474, 1.0
      %v483 = vadd.f32 %v475, 1.0
      %v484 = vadd.f32 %v476, 1.0
      %v485 = vadd.f32 %v477, 1.0
      %v486 = vadd.f32 %v478, 1.0
      %v487 = vadd.f32 %v479, 1.0
      %v488 = vrcp.pop %v480
      %v489 = vrcp.pop %v481
      %v490 = vrcp.pop %v482
      %v491 = vrcp.pop %v483
      %v492 = vrcp.pop %v484
      %v493 = vrcp.pop %v485
      %v494 = vrcp.pop %v486
      %v495 = vrcp.pop %v487
      %v496 = vmul.f32 %v488, 2.0
      %v497 = vmul.f32 %v489, 2.0
      %v498 = vmul.f32 %v490, 2.0
      %v499 = vmul.f32 %v491, 2.0
      %v500 = vmul.f32 %v492, 2.0
      %v501 = vmul.f32 %v493, 2.0
      %v502 = vmul.f32 %v494, 2.0
      %v503 = vmul.f32 %v495, 2.0
      %v504 = vsub.f32 1.0, %v496
      %v505 = vsub.f32 1.0, %v497
      %v506 = vsub.f32 1.0, %v498
      %v507 = vsub.f32 1.0, %v499
      %v508 = vsub.f32 1.0, %v500
      %v509 = vsub.f32 1.0, %v501
      %v510 = vsub.f32 1.0, %v502
      %v511 = vsub.f32 1.0, %v503
      %v512 = vmul.f32 %v432, %v504
      %v513 = vmul.f32 %v433, %v505
      %v514 = vmul.f32 %v434, %v506
      %v515 = vmul.f32 %v435, %v507
      %v516 = vmul.f32 %v436, %v508
      %v517 = vmul.f32 %v437, %v509
      %v518 = vmul.f32 %v438, %v510
      %v519 = vmul.f32 %v439, %v511
      %520 = vst.msk [vmem:[#allocation2] sm:$0xff] %vm261, 0.0
      %vm521 = vcmask 254976
      %522 = vst.msk [vmem:[#allocation2 + $0x8] sm:$0x3] %vm521, 0.0
      %523 = vst.msk [vmem:[#allocation2 + $0x10] sm:$0xff] %vm261, 0.0
      %524 = vst.msk [vmem:[#allocation2 + $0x18] sm:$0x3] %vm521, 0.0
      %525 = vst.msk [vmem:[#allocation2 + $0x20] sm:$0xff] %vm261, 0.0
      %526 = vst.msk [vmem:[#allocation2 + $0x28] sm:$0x3] %vm521, 0.0
      %527 = vst.msk [vmem:[#allocation2 + $0x30] sm:$0xff] %vm261, 0.0
      %528 = vst.msk [vmem:[#allocation2 + $0x38] sm:$0x3] %vm521, 0.0
      %529 = vst.msk [vmem:[#allocation2 + $0x40] sm:$0xff] %vm261, 0.0
      %530 = vst.msk [vmem:[#allocation2 + $0x48] sm:$0x3] %vm521, 0.0
      %531 = vst.msk [vmem:[#allocation2 + $0x50] sm:$0xff] %vm261, 0.0
      %532 = vst.msk [vmem:[#allocation2 + $0x58] sm:$0x3] %vm521, 0.0
      %533 = vst.msk [vmem:[#allocation2 + $0x60] sm:$0xff] %vm261, 0.0
      %534 = vst.msk [vmem:[#allocation2 + $0x68] sm:$0x3] %vm521, 0.0
      %535 = vst.msk [vmem:[#allocation2 + $0x70] sm:$0xff] %vm261, 0.0
      %536 = vst.msk [vmem:[#allocation2 + $0x78] sm:$0x3] %vm521, 0.0
      %537 = vst.msk [vmem:[#allocation2 + $0x80] sm:$0xff] %vm261, 0.0
      %538 = vst.msk [vmem:[#allocation2 + $0x88] sm:$0x3] %vm521, 0.0
      %539 = vst.msk [vmem:[#allocation2 + $0x90] sm:$0xff] %vm261, 0.0
      %540 = vst.msk [vmem:[#allocation2 + $0x98] sm:$0x3] %vm521, 0.0
      %s541 = scalar_lea.vmem [#allocation2], 16
      %542 = vst.msk [vmem:[%s541 + $0x1] sm:$0xff] %vm261, %v512
      %543 = vst.msk [vmem:[%s541 + $0x11] sm:$0xff] %vm261, %v513
      %544 = vst.msk [vmem:[%s541 + $0x21] sm:$0xff] %vm261, %v514
      %545 = vst.msk [vmem:[%s541 + $0x31] sm:$0xff] %vm261, %v515
      %546 = vst.msk [vmem:[%s541 + $0x41] sm:$0xff] %vm261, %v516
      %547 = vst.msk [vmem:[%s541 + $0x51] sm:$0xff] %vm261, %v517
      %548 = vst.msk [vmem:[%s541 + $0x61] sm:$0xff] %vm261, %v518
      %549 = vst.msk [vmem:[%s541 + $0x71] sm:$0xff] %vm261, %v519
      %v550 = vld [vmem:[#allocation2] sm:$0xff]
      %v551 = vld [vmem:[#allocation2 + $0x8] sm:$0x3]
      %v552 = vld [vmem:[#allocation2 + $0x10] sm:$0xff]
      %v553 = vld [vmem:[#allocation2 + $0x18] sm:$0x3]
      %v554 = vld [vmem:[#allocation2 + $0x20] sm:$0xff]
      %v555 = vld [vmem:[#allocation2 + $0x28] sm:$0x3]
      %v556 = vld [vmem:[#allocation2 + $0x30] sm:$0xff]
      %v557 = vld [vmem:[#allocation2 + $0x38] sm:$0x3]
      %v558 = vld [vmem:[#allocation2 + $0x40] sm:$0xff]
      %v559 = vld [vmem:[#allocation2 + $0x48] sm:$0x3]
      %v560 = vld [vmem:[#allocation2 + $0x50] sm:$0xff]
      %v561 = vld [vmem:[#allocation2 + $0x58] sm:$0x3]
      %v562 = vld [vmem:[#allocation2 + $0x60] sm:$0xff]
      %v563 = vld [vmem:[#allocation2 + $0x68] sm:$0x3]
      %v564 = vld [vmem:[#allocation2 + $0x70] sm:$0xff]
      %v565 = vld [vmem:[#allocation2 + $0x78] sm:$0x3]
      %v566 = vld [vmem:[#allocation2 + $0x80] sm:$0xff]
      %v567 = vld [vmem:[#allocation2 + $0x88] sm:$0x3]
      %v568 = vld [vmem:[#allocation2 + $0x90] sm:$0xff]
      %v569 = vld [vmem:[#allocation2 + $0x98] sm:$0x3]
      %vm586 = vcmask 1046528
      %v587 = vrot.slane %v550, 1
      %v588 = vrot.slane %v551, 1
      %v589 = vsel %vm586, %v587, %v588
      %v590 = vrot.slane %v552, 1
      %v591 = vrot.slane %v553, 1
      %v592 = vsel %vm586, %v590, %v591
      %v593 = vrot.slane %v554, 1
      %v594 = vrot.slane %v555, 1
      %v595 = vsel %vm586, %v593, %v594
      %v596 = vrot.slane %v556, 1
      %v597 = vrot.slane %v557, 1
      %v598 = vsel %vm586, %v596, %v597
      %v599 = vrot.slane %v558, 1
      %v600 = vrot.slane %v559, 1
      %v601 = vsel %vm586, %v599, %v600
      %v602 = vrot.slane %v560, 1
      %v603 = vrot.slane %v561, 1
      %v604 = vsel %vm586, %v602, %v603
      %v605 = vrot.slane %v562, 1
      %v606 = vrot.slane %v563, 1
      %v607 = vsel %vm586, %v605, %v606
      %v608 = vrot.slane %v564, 1
      %v609 = vrot.slane %v565, 1
      %v610 = vsel %vm586, %v608, %v609
      %vm611 = vcmask 1045504
      %v612 = vrot.slane %v550, 2
      %v613 = vrot.slane %v551, 2
      %v614 = vsel %vm611, %v612, %v613
      %v615 = vrot.slane %v552, 2
      %v616 = vrot.slane %v553, 2
      %v617 = vsel %vm611, %v615, %v616
      %v618 = vrot.slane %v554, 2
      %v619 = vrot.slane %v555, 2
      %v620 = vsel %vm611, %v618, %v619
      %v621 = vrot.slane %v556, 2
      %v622 = vrot.slane %v557, 2
      %v623 = vsel %vm611, %v621, %v622
      %v624 = vrot.slane %v558, 2
      %v625 = vrot.slane %v559, 2
      %v626 = vsel %vm611, %v624, %v625
      %v627 = vrot.slane %v560, 2
      %v628 = vrot.slane %v561, 2
      %v629 = vsel %vm611, %v627, %v628
      %v630 = vrot.slane %v562, 2
      %v631 = vrot.slane %v563, 2
      %v632 = vsel %vm611, %v630, %v631
      %v633 = vrot.slane %v564, 2
      %v634 = vrot.slane %v565, 2
      %v635 = vsel %vm611, %v633, %v634
      %v638 = vrot.slane %v566, 1
      %v639 = vrot.slane %v567, 1
      %v640 = vsel %vm586, %v638, %v639
      %v649 = vrot.slane %v566, 2
      %v650 = vrot.slane %v567, 2
      %v651 = vsel %vm611, %v649, %v650
      %v654 = vrot.slane %v568, 1
      %v655 = vrot.slane %v569, 1
      %v656 = vsel %vm586, %v654, %v655
      %v657 = vrot.slane %v568, 2
      %v658 = vrot.slane %v569, 2
      %v659 = vsel %vm611, %v657, %v658
      %668 = vrot.lane.b32.xlu0 %v589, 32
      %v669 = vpop.permute.xlu0 %668
      %670 = vrot.lane.b32.xlu0 %v592, 32
      %v671 = vpop.permute.xlu0 %670
      %672 = vrot.lane.b32.xlu0 %v595, 32
      %v673 = vpop.permute.xlu0 %672
      %674 = vrot.lane.b32.xlu0 %v598, 32
      %v675 = vpop.permute.xlu0 %674
      %676 = vrot.lane.b32.xlu0 %v601, 32
      %v677 = vpop.permute.xlu0 %676
      %678 = vrot.lane.b32.xlu0 %v604, 32
      %v679 = vpop.permute.xlu0 %678
      %680 = vrot.lane.b32.xlu0 %v607, 32
      %v681 = vpop.permute.xlu0 %680
      %682 = vrot.lane.b32.xlu0 %v610, 32
      %v683 = vpop.permute.xlu0 %682
      %692 = vrot.lane.b32.xlu0 %v614, 64
      %v693 = vpop.permute.xlu0 %692
      %694 = vrot.lane.b32.xlu0 %v617, 64
      %v695 = vpop.permute.xlu0 %694
      %696 = vrot.lane.b32.xlu0 %v620, 64
      %v697 = vpop.permute.xlu0 %696
      %698 = vrot.lane.b32.xlu0 %v623, 64
      %v699 = vpop.permute.xlu0 %698
      %700 = vrot.lane.b32.xlu0 %v626, 64
      %v701 = vpop.permute.xlu0 %700
      %702 = vrot.lane.b32.xlu0 %v629, 64
      %v703 = vpop.permute.xlu0 %702
      %704 = vrot.lane.b32.xlu0 %v632, 64
      %v705 = vpop.permute.xlu0 %704
      %706 = vrot.lane.b32.xlu0 %v635, 64
      %v707 = vpop.permute.xlu0 %706
      %716 = vrot.lane.b32.xlu0 %v552, 96
      %v717 = vpop.permute.xlu0 %716
      %718 = vrot.lane.b32.xlu0 %v554, 96
      %v719 = vpop.permute.xlu0 %718
      %720 = vrot.lane.b32.xlu0 %v556, 96
      %v721 = vpop.permute.xlu0 %720
      %722 = vrot.lane.b32.xlu0 %v558, 96
      %v723 = vpop.permute.xlu0 %722
      %724 = vrot.lane.b32.xlu0 %v560, 96
      %v725 = vpop.permute.xlu0 %724
      %726 = vrot.lane.b32.xlu0 %v562, 96
      %v727 = vpop.permute.xlu0 %726
      %728 = vrot.lane.b32.xlu0 %v564, 96
      %v729 = vpop.permute.xlu0 %728
      %730 = vrot.lane.b32.xlu0 %v566, 96
      %v731 = vpop.permute.xlu0 %730
      %740 = vrot.lane.b32.xlu0 %v617, 32
      %v741 = vpop.permute.xlu0 %740
      %742 = vrot.lane.b32.xlu0 %v620, 32
      %v743 = vpop.permute.xlu0 %742
      %744 = vrot.lane.b32.xlu0 %v623, 32
      %v745 = vpop.permute.xlu0 %744
      %746 = vrot.lane.b32.xlu0 %v626, 32
      %v747 = vpop.permute.xlu0 %746
      %748 = vrot.lane.b32.xlu0 %v629, 32
      %v749 = vpop.permute.xlu0 %748
      %750 = vrot.lane.b32.xlu0 %v632, 32
      %v751 = vpop.permute.xlu0 %750
      %752 = vrot.lane.b32.xlu0 %v635, 32
      %v753 = vpop.permute.xlu0 %752
      %754 = vrot.lane.b32.xlu0 %v651, 32
      %v755 = vpop.permute.xlu0 %754
      %764 = vrot.lane.b32.xlu0 %v554, 64
      %v765 = vpop.permute.xlu0 %764
      %766 = vrot.lane.b32.xlu0 %v556, 64
      %v767 = vpop.permute.xlu0 %766
      %768 = vrot.lane.b32.xlu0 %v558, 64
      %v769 = vpop.permute.xlu0 %768
      %770 = vrot.lane.b32.xlu0 %v560, 64
      %v771 = vpop.permute.xlu0 %770
      %772 = vrot.lane.b32.xlu0 %v562, 64
      %v773 = vpop.permute.xlu0 %772
      %774 = vrot.lane.b32.xlu0 %v564, 64
      %v775 = vpop.permute.xlu0 %774
      %776 = vrot.lane.b32.xlu0 %v566, 64
      %v777 = vpop.permute.xlu0 %776
      %778 = vrot.lane.b32.xlu0 %v568, 64
      %v779 = vpop.permute.xlu0 %778
      %788 = vrot.lane.b32.xlu0 %v595, 96
      %v789 = vpop.permute.xlu0 %788
      %790 = vrot.lane.b32.xlu0 %v598, 96
      %v791 = vpop.permute.xlu0 %790
      %792 = vrot.lane.b32.xlu0 %v601, 96
      %v793 = vpop.permute.xlu0 %792
      %794 = vrot.lane.b32.xlu0 %v604, 96
      %v795 = vpop.permute.xlu0 %794
      %796 = vrot.lane.b32.xlu0 %v607, 96
      %v797 = vpop.permute.xlu0 %796
      %798 = vrot.lane.b32.xlu0 %v610, 96
      %v799 = vpop.permute.xlu0 %798
      %800 = vrot.lane.b32.xlu0 %v640, 96
      %v801 = vpop.permute.xlu0 %800
      %802 = vrot.lane.b32.xlu0 %v656, 96
      %v803 = vpop.permute.xlu0 %802
      %v812 = vsel %vm261, %v550, %v669
      %v813 = vsel %vm261, %v552, %v671
      %v814 = vsel %vm261, %v554, %v673
      %v815 = vsel %vm261, %v556, %v675
      %v816 = vsel %vm261, %v558, %v677
      %v817 = vsel %vm261, %v560, %v679
      %v818 = vsel %vm261, %v562, %v681
      %v819 = vsel %vm261, %v564, %v683
      %vm820 = vcmask 523264
      %v821 = vsel %vm820, %v812, %v693
      %v822 = vsel %vm820, %v813, %v695
      %v823 = vsel %vm820, %v814, %v697
      %v824 = vsel %vm820, %v815, %v699
      %v825 = vsel %vm820, %v816, %v701
      %v826 = vsel %vm820, %v817, %v703
      %v827 = vsel %vm820, %v818, %v705
      %v828 = vsel %vm820, %v819, %v707
      %vm829 = vcmask 785408
      %v830 = vsel %vm829, %v821, %v717
      %v831 = vsel %vm829, %v822, %v719
      %v832 = vsel %vm829, %v823, %v721
      %v833 = vsel %vm829, %v824, %v723
      %v834 = vsel %vm829, %v825, %v725
      %v835 = vsel %vm829, %v826, %v727
      %v836 = vsel %vm829, %v827, %v729
      %v837 = vsel %vm829, %v828, %v731
      %v838 = vsel %vm261, %v592, %v741
      %v839 = vsel %vm261, %v595, %v743
      %v840 = vsel %vm261, %v598, %v745
      %v841 = vsel %vm261, %v601, %v747
      %v842 = vsel %vm261, %v604, %v749
      %v843 = vsel %vm261, %v607, %v751
      %v844 = vsel %vm261, %v610, %v753
      %v845 = vsel %vm261, %v640, %v755
      %v846 = vsel %vm820, %v838, %v765
      %v847 = vsel %vm820, %v839, %v767
      %v848 = vsel %vm820, %v840, %v769
      %v849 = vsel %vm820, %v841, %v771
      %v850 = vsel %vm820, %v842, %v773
      %v851 = vsel %vm820, %v843, %v775
      %v852 = vsel %vm820, %v844, %v777
      %v853 = vsel %vm820, %v845, %v779
      %v854 = vsel %vm829, %v846, %v789
      %v855 = vsel %vm829, %v847, %v791
      %v856 = vsel %vm829, %v848, %v793
      %v857 = vsel %vm829, %v849, %v795
      %v858 = vsel %vm829, %v850, %v797
      %v859 = vsel %vm829, %v851, %v799
      %v860 = vsel %vm829, %v852, %v801
      %v861 = vsel %vm829, %v853, %v803
      %v862 = vpack.c.bf16 %v831, %v830
      %v863 = vpack.c.bf16 %v855, %v854
      %v864 = vpack.c.bf16 %v623, %v620
      %v865 = vpack.c.bf16 %v833, %v832
      %v866 = vpack.c.bf16 %v857, %v856
      %v867 = vpack.c.bf16 %v629, %v626
      %v868 = vpack.c.bf16 %v835, %v834
      %v869 = vpack.c.bf16 %v859, %v858
      %v870 = vpack.c.bf16 %v635, %v632
      %v871 = vpack.c.bf16 %v837, %v836
      %v872 = vpack.c.bf16 %v861, %v860
      %v873 = vpack.c.bf16 %v659, %v651
      %v874 = vld [vmem:[%s4] sm:$0xf]
      %v875 = vld [vmem:[%s4 + $0x4] sm:$0xf]
      %v876 = vld [vmem:[%s4 + $0x8] sm:$0xf]
      %v877 = vld [vmem:[%s4 + $0xc] sm:$0xf]
      %v878 = vld [vmem:[%s4 + $0x10] sm:$0xf]
      %v879 = vld [vmem:[%s4 + $0x14] sm:$0xf]
      %v880 = vld [vmem:[%s4 + $0x18] sm:$0xf]
      %v881 = vld [vmem:[%s4 + $0x1c] sm:$0xf]
      %v882 = vld [vmem:[%s4 + $0x20] sm:$0xf]
      %v883 = vld [vmem:[%s4 + $0x24] sm:$0xf]
      %v884 = vld [vmem:[%s4 + $0x28] sm:$0xf]
      %v885 = vld [vmem:[%s4 + $0x2c] sm:$0xf]
      %v886 = vld [vmem:[%s4 + $0x30] sm:$0xf]
      %v887 = vld [vmem:[%s4 + $0x34] sm:$0xf]
      %v888 = vld [vmem:[%s4 + $0x38] sm:$0xf]
      %v889 = vld [vmem:[%s4 + $0x3c] sm:$0xf]
      %v890 = vld [vmem:[%s4 + $0x40] sm:$0xf]
      %v891 = vld [vmem:[%s4 + $0x44] sm:$0xf]
      %v892 = vld [vmem:[%s4 + $0x48] sm:$0xf]
      %v893 = vld [vmem:[%s4 + $0x4c] sm:$0xf]
      %v894 = vld [vmem:[%s4 + $0x50] sm:$0xf]
      %v895 = vld [vmem:[%s4 + $0x54] sm:$0xf]
      %v896 = vld [vmem:[%s4 + $0x58] sm:$0xf]
      %v897 = vld [vmem:[%s4 + $0x5c] sm:$0xf]
      %v898 = vld [vmem:[%s4 + $0x60] sm:$0xf]
      %v899 = vld [vmem:[%s4 + $0x64] sm:$0xf]
      %v900 = vld [vmem:[%s4 + $0x68] sm:$0xf]
      %v901 = vld [vmem:[%s4 + $0x6c] sm:$0xf]
      %v902 = vld [vmem:[%s4 + $0x70] sm:$0xf]
      %v903 = vld [vmem:[%s4 + $0x74] sm:$0xf]
      %v904 = vld [vmem:[%s4 + $0x78] sm:$0xf]
      %v905 = vld [vmem:[%s4 + $0x7c] sm:$0xf]
      %v906 = vld [vmem:[%s4 + $0x80] sm:$0xf]
      %v907 = vld [vmem:[%s4 + $0x84] sm:$0xf]
      %v908 = vld [vmem:[%s4 + $0x88] sm:$0xf]
      %v909 = vld [vmem:[%s4 + $0x8c] sm:$0xf]
      %v946 = vunpack.c.l.b16 %v874
      %v947 = vunpack.c.l.b16 %v875
      %v948 = vunpack.c.l.b16 %v876
      %v949 = vunpack.c.l.b16 %v877
      %v950 = vunpack.c.l.b16 %v878
      %v951 = vunpack.c.l.b16 %v879
      %v952 = vunpack.c.l.b16 %v880
      %v953 = vunpack.c.l.b16 %v881
      %v954 = vunpack.c.l.b16 %v882
      %v955 = vunpack.c.l.b16 %v883
      %v956 = vunpack.c.l.b16 %v884
      %v957 = vunpack.c.l.b16 %v885
      %v958 = vunpack.c.l.b16 %v886
      %v959 = vunpack.c.l.b16 %v887
      %v960 = vunpack.c.l.b16 %v888
      %v961 = vunpack.c.l.b16 %v889
      %v962 = vunpack.c.l.b16 %v890
      %v963 = vunpack.c.l.b16 %v891
      %v964 = vunpack.c.l.b16 %v892
      %v965 = vunpack.c.l.b16 %v893
      %v966 = vunpack.c.l.b16 %v894
      %v967 = vunpack.c.l.b16 %v895
      %v968 = vunpack.c.l.b16 %v896
      %v969 = vunpack.c.l.b16 %v897
      %v970 = vunpack.c.l.b16 %v898
      %v971 = vunpack.c.l.b16 %v899
      %v972 = vunpack.c.l.b16 %v900
      %v973 = vunpack.c.l.b16 %v901
      %v974 = vunpack.c.l.b16 %v902
      %v975 = vunpack.c.l.b16 %v903
      %v976 = vunpack.c.l.b16 %v904
      %v977 = vunpack.c.l.b16 %v905
      %v978 = vunpack.c.l.b16 %v906
      %v979 = vunpack.c.l.b16 %v907
      %v980 = vunpack.c.l.b16 %v908
      %v981 = vunpack.c.l.b16 %v909
      %v982 = vpack.c.b16 %v947, %v946
      %v983 = vpack.c.b16 %v949, %v948
      %v984 = vpack.c.b16 %v951, %v950
      %v985 = vpack.c.b16 %v953, %v952
      %v986 = vpack.c.b16 %v955, %v954
      %v987 = vpack.c.b16 %v957, %v956
      %v988 = vpack.c.b16 %v959, %v958
      %v989 = vpack.c.b16 %v961, %v960
      %v990 = vpack.c.b16 %v963, %v962
      %v991 = vpack.c.b16 %v965, %v964
      %v992 = vpack.c.b16 %v967, %v966
      %v993 = vpack.c.b16 %v969, %v968
      %v994 = vpack.c.b16 %v971, %v970
      %v995 = vpack.c.b16 %v973, %v972
      %v996 = vpack.c.b16 %v975, %v974
      %v997 = vpack.c.b16 %v977, %v976
      %v998 = vpack.c.b16 %v979, %v978
      %v999 = vpack.c.b16 %v981, %v980
      %v1019 = vsel %vm261, %v864, 0
      %v1022 = vsel %vm261, %v867, 0
      %v1025 = vsel %vm261, %v870, 0
      %v1028 = vsel %vm261, %v873, 0
      %1030 = vmatprep.subr.bf16.mxu0 0
      %1031 = vmatpush1.bf16.msra.mxu0 %v989
      %1032 = vmatprep.subr.bf16.mxu0 0
      %1033 = vmatpush1.bf16.msra.mxu0 %v988
      %1034 = vmatprep.subr.bf16.mxu0 0
      %1035 = vmatpush1.bf16.msra.mxu0 %v987
      %1036 = vmatprep.subr.bf16.mxu0 0
      %1037 = vmatpush1.bf16.msra.mxu0 %v986
      %1038 = vmatprep.subr.bf16.mxu0 0
      %1039 = vmatpush1.bf16.msra.mxu0 %v985
      %1040 = vmatprep.subr.bf16.mxu0 0
      %1041 = vmatpush1.bf16.msra.mxu0 %v984
      %1042 = vmatprep.subr.bf16.mxu0 0
      %1043 = vmatpush1.bf16.msra.mxu0 %v983
      %1044 = vmatprep.subr.bf16.mxu0 0
      %1045 = vmatpush1.bf16.msra.mxu0 %v982
      %1046 = vmatprep.subr.bf16.mxu0 0
      %1047 = vmatpush2.bf16.msra.mxu0 %v997
      %1048 = vmatprep.subr.bf16.mxu0 0
      %1049 = vmatpush2.bf16.msra.mxu0 %v996
      %1050 = vmatprep.subr.bf16.mxu0 0
      %1051 = vmatpush2.bf16.msra.mxu0 %v995
      %1052 = vmatprep.subr.bf16.mxu0 0
      %1053 = vmatpush2.bf16.msra.mxu0 %v994
      %1054 = vmatprep.subr.bf16.mxu0 0
      %1055 = vmatpush2.bf16.msra.mxu0 %v993
      %1056 = vmatprep.subr.bf16.mxu0 0
      %1057 = vmatpush2.bf16.msra.mxu0 %v992
      %1058 = vmatprep.subr.bf16.mxu0 0
      %1059 = vmatpush2.bf16.msra.mxu0 %v991
      %1060 = vmatprep.subr.bf16.mxu0 0
      %1061 = vmatpush2.bf16.msra.mxu0 %v990
      %1062 = vmatprep.mubr.bf16.mxu0 %v863
      %1063 = vmatmul.mubr.bf16.gmra.mxu0 %v862
      %v1064 = vpop.f32.mrf.mxu0
      %v1065 = vadd.f32 0.0, %v1064
      %v1066 = vpop.f32.mrf.mxu0
      %v1067 = vpop.f32.mrf.mxu0
      %v1068 = vadd.f32 0.0, %v1067
      %v1069 = vpop.f32.mrf.mxu0
      %1070 = vmatprep.mubr.bf16.mxu0 %v866
      %1071 = vmatmul.mubr.bf16.gmra.mxu0 %v865
      %v1072 = vpop.f32.mrf.mxu0
      %v1073 = vadd.f32 0.0, %v1072
      %v1074 = vpop.f32.mrf.mxu0
      %v1075 = vpop.f32.mrf.mxu0
      %v1076 = vadd.f32 0.0, %v1075
      %v1077 = vpop.f32.mrf.mxu0
      %1078 = vmatprep.mubr.bf16.mxu0 %v869
      %1079 = vmatmul.mubr.bf16.gmra.mxu0 %v868
      %v1080 = vpop.f32.mrf.mxu0
      %v1081 = vadd.f32 0.0, %v1080
      %v1082 = vpop.f32.mrf.mxu0
      %v1083 = vpop.f32.mrf.mxu0
      %v1084 = vadd.f32 0.0, %v1083
      %v1085 = vpop.f32.mrf.mxu0
      %1086 = vmatprep.mubr.bf16.mxu0 %v872
      %1087 = vmatmul.mubr.bf16.gmra.mxu0 %v871
      %v1088 = vpop.f32.mrf.mxu0
      %v1089 = vadd.f32 0.0, %v1088
      %v1090 = vpop.f32.mrf.mxu0
      %v1091 = vpop.f32.mrf.mxu0
      %v1092 = vadd.f32 0.0, %v1091
      %v1093 = vpop.f32.mrf.mxu0
      %1094 = vdwg.mxu0
      %1095 = vmatprep.subr.bf16.mxu0 0
      %1096 = vmatpush1.bf16.msra.mxu0 0
      %1097 = vmatprep.subr.bf16.mxu0 0
      %1098 = vmatpush1.bf16.msra.mxu0 0
      %1099 = vmatprep.subr.bf16.mxu0 0
      %1100 = vmatpush1.bf16.msra.mxu0 0
      %1101 = vmatprep.subr.bf16.mxu0 0
      %1102 = vmatpush1.bf16.msra.mxu0 0
      %1103 = vmatprep.subr.bf16.mxu0 0
      %1104 = vmatpush1.bf16.msra.mxu0 0
      %1105 = vmatprep.subr.bf16.mxu0 0
      %1106 = vmatpush1.bf16.msra.mxu0 0
      %1107 = vmatprep.subr.bf16.mxu0 0
      %1108 = vmatpush1.bf16.msra.mxu0 %v999
      %1109 = vmatprep.subr.bf16.mxu0 0
      %1110 = vmatpush1.bf16.msra.mxu0 %v998
      %1111 = vmatprep.subr.bf16.mxu0 0
      %1112 = vmatpush2.bf16.msra.mxu0 0
      %1113 = vmatprep.subr.bf16.mxu0 0
      %1114 = vmatpush2.bf16.msra.mxu0 0
      %1115 = vmatprep.subr.bf16.mxu0 0
      %1116 = vmatpush2.bf16.msra.mxu0 0
      %1117 = vmatprep.subr.bf16.mxu0 0
      %1118 = vmatpush2.bf16.msra.mxu0 0
      %1119 = vmatprep.subr.bf16.mxu0 0
      %1120 = vmatpush2.bf16.msra.mxu0 0
      %1121 = vmatprep.subr.bf16.mxu0 0
      %1122 = vmatpush2.bf16.msra.mxu0 0
      %1123 = vmatprep.subr.bf16.mxu0 0
      %1124 = vmatpush2.bf16.msra.mxu0 0
      %1125 = vmatprep.subr.bf16.mxu0 0
      %1126 = vmatpush2.bf16.msra.mxu0 0
      %1127 = vmatprep.mubr.bf16.mxu0 0
      %1128 = vmatmul.mubr.bf16.gmra.mxu0 %v1019
      %v1129 = vpop.f32.mrf.mxu0
      %v1130 = vadd.f32 %v1065, %v1129
      %v1131 = vpop.f32.mrf.mxu0
      %v1132 = vpop.f32.mrf.mxu0
      %v1133 = vadd.f32 %v1068, %v1132
      %v1134 = vpop.f32.mrf.mxu0
      %1135 = vmatprep.mubr.bf16.mxu0 0
      %1136 = vmatmul.mubr.bf16.gmra.mxu0 %v1022
      %v1137 = vpop.f32.mrf.mxu0
      %v1138 = vadd.f32 %v1073, %v1137
      %v1139 = vpop.f32.mrf.mxu0
      %v1140 = vpop.f32.mrf.mxu0
      %v1141 = vadd.f32 %v1076, %v1140
      %v1142 = vpop.f32.mrf.mxu0
      %1143 = vmatprep.mubr.bf16.mxu0 0
      %1144 = vmatmul.mubr.bf16.gmra.mxu0 %v1025
      %v1145 = vpop.f32.mrf.mxu0
      %v1146 = vadd.f32 %v1081, %v1145
      %v1147 = vpop.f32.mrf.mxu0
      %v1148 = vpop.f32.mrf.mxu0
      %v1149 = vadd.f32 %v1084, %v1148
      %v1150 = vpop.f32.mrf.mxu0
      %1151 = vmatprep.mubr.bf16.mxu0 0
      %1152 = vmatmul.mubr.bf16.gmra.mxu0 %v1028
      %v1153 = vpop.f32.mrf.mxu0
      %v1154 = vadd.f32 %v1089, %v1153
      %v1155 = vpop.f32.mrf.mxu0
      %v1156 = vpop.f32.mrf.mxu0
      %v1157 = vadd.f32 %v1092, %v1156
      %v1158 = vpop.f32.mrf.mxu0
      %1159 = vdwg.mxu0
      %v1160 = vld [vmem:[%s5] sm:$0x1]
      %v1162 = vlaneseq
      %v1163 = vshrl.u32 %v1162, 7
      %v1164 = vsub.s32 0, %v1163
      %v1165 = vrot.slane %v1160, %v1164
      %v1167 = vadd.f32 %v1130, %v1165
      %v1168 = vadd.f32 %v1133, %v1165
      %v1169 = vadd.f32 %v1138, %v1165
      %v1170 = vadd.f32 %v1141, %v1165
      %v1171 = vadd.f32 %v1146, %v1165
      %v1172 = vadd.f32 %v1149, %v1165
      %v1173 = vadd.f32 %v1154, %v1165
      %v1174 = vadd.f32 %v1157, %v1165
      %1175 = vst [vmem:[%s251] sm:$0xff] %v1167
      %1176 = vst [vmem:[%s251 + $0x8] sm:$0xff] %v1168
      %1177 = vst [vmem:[%s251 + $0x10] sm:$0xff] %v1169
      %1178 = vst [vmem:[%s251 + $0x18] sm:$0xff] %v1170
      %1179 = vst [vmem:[%s251 + $0x20] sm:$0xff] %v1171
      %1180 = vst [vmem:[%s251 + $0x28] sm:$0xff] %v1172
      %1181 = vst [vmem:[%s251 + $0x30] sm:$0xff] %v1173
      %1182 = vst [vmem:[%s251 + $0x38] sm:$0xff] %v1174
      %p1183 = scmp.lt.s32.totalorder %s17, 1
      %s1184 = scalar_select %p1183, %s17, 1
      %s1185 = smul.addr %s1184, 8
      %s1186 = smul.addr %s1185, 8
      %s1187 = scalar_lea.vmem %s6, %s1186
      // Predicated region
      $region45: #{decoding_block.2} parent=43 // pred_check
        %p1188 = pneg %p166
      $region46: #{decoding_block.2} parent=43 // pred_check_branch
        %1190 = sbr.rel (%p1188) target = $region48
      $region47: #{decoding_block.2} parent=43 // pred_region
        _
      $region48: #{decoding_block.2} parent=43 // pred_fallthru
        _
    $region44: #{decoding_block.2} parent=5 // pred_fallthru
      _
    %p1191 = scmp.le.s32.totalorder 2, %s12
    // Predicated region
    $region49: #{decoding_block.2} parent=5 // pred_check
      %p1192 = pneg %p1191
    $region50: #{decoding_block.2} parent=5 // pred_check_branch
      %1194 = sbr.rel (%p1192) target = $region52
    $region51: #{decoding_block.2} parent=5 // pred_region
      %s1195 = ssub.s32 %s12, 2
      // Predicated region
      $region53: #{decoding_block.2} parent=51 // pred_check
        %p1196 = pneg %p172
      $region54: #{decoding_block.2} parent=51 // pred_check_branch
        %1198 = sbr.rel (%p1196) target = $region56
      $region55: #{decoding_block.2} parent=51 // pred_region
        %p1199 = scmp.lt.s32.totalorder %s18, 1
        %s1200 = scalar_select %p1199, %s18, 1
        %s1201 = smul.addr %s1200, 8
        %s1202 = smul.addr %s1201, 8
        %s1203 = scalar_lea.vmem %s6, %s1202
      $region56: #{decoding_block.2} parent=51 // pred_fallthru
        _
    $region52: #{decoding_block.2} parent=5 // pred_fallthru
      _
  $region6: #{decoding_block.2} parent=0 // loop_footer
    %s16 = sadd.s32 1, %s12
  $region7: #{decoding_block.2} parent=0 // loop_footer_branch
    %11 = sbr.rel target = $region3
  $region8: #{decoding_block.2} parent=0 // loop_exit
    _

// kernel: decoding_block.3
$region0: #{decoding_block.3}
  #allocation0 [shape = 'u32[]', space=smem, size = 0x4, offset = 0x4, fixed_abs, tag = 'smem constant byte address 0x4 - core index']
  #allocation1 [shape = 'u32[144,128]{1,0:T(1,128)}', space=vmem, size = 0x12000, scoped, tag = 'internal scratch']
  #allocation2 [shape = 'f32[10,10,128]{2,1,0:T(8,128)}', space=vmem, size = 0x14000, scoped, tag = 'scratch operand']
  %s0 = inlined_call_operand.vmem [shape: f32[2,1,8], index: 0, kind: input, shape index: {}]
  %s1 = inlined_call_operand.vmem [shape: f32[8,128], index: 1, kind: input, shape index: {}]
  %s2 = inlined_call_operand.vmem [shape: f32[1,128], index: 2, kind: input, shape index: {}]
  %s3 = inlined_call_operand.vmem [shape: f32[128,128], index: 3, kind: input, shape index: {}]
  %s4 = inlined_call_operand.vmem [shape: f32[1,128], index: 4, kind: input, shape index: {}]
  %s5 = inlined_call_operand.vmem [shape: f32[2,8,8,128], index: 5, kind: input, shape index: {}]
  %s6 = inlined_call_operand.vmem [shape: f32[1,128], index: 6, kind: input, shape index: {}]
  %s7 = inlined_call_operand.vmem [shape: f32[1,128], index: 7, kind: input, shape index: {}]
  %s8 = inlined_call_operand.vmem [shape: f32[128,128], index: 8, kind: input, shape index: {}]
  %s9 = inlined_call_operand.vmem [shape: bf16[1152,32], index: 9, kind: input, shape index: {}]
  %s10 = inlined_call_operand.vmem [shape: f32[1,32], index: 10, kind: input, shape index: {}]
  %s11 = inlined_call_operand.vmem [shape: f32[2,8,8,32], index: 11, kind: input, shape index: {}]
  %s12 = inlined_call_operand.hbm [shape: f32[2,8,8,32], index: 12, kind: output, shape index: {}]
  %s13 = sld [smem:[#allocation0]]
  $region81: #{decoding_block.3} parent=0
    _
  %s15 = ssub.s32 1, %s13
  %s16 = scalar_select 0, %s15, %s13
  $region1: #{decoding_block.3} parent=0
    #allocation3 [shape = 'u8[65536]{0}', space=vmem, size = 0x10000, scoped, tag = 'output window, operand 0']
    #allocation4 [shape = 's32[2]{0}', space=sflag, size = 0x8, scoped, tag = 'scoped memory for decoding_block.3']
    %17 = vsyncpa [#allocation4], 0
    %s18 = scalar_lea.sflag [#allocation4], 1
    %19 = vsyncpa %s18, 0
    loop: start=0, step=1, limit=4
    $region2: #{decoding_block.3} parent=1 // loop_pre_header
      _
    $region3: #{decoding_block.3} parent=1 // loop_header
      %s21 = sphi 0, %s25
      %p22 = scmp.ge.s32.totalorder %s21, 4
      %s31 = sphi 0, %s33
      %s34 = sphi 0, %s31
      %s35 = sphi 0, %s34
      %s51 = sphi 0, %s35
      %s55 = sphi 0, %s55
      %s57 = sphi 0, %s55
      %s58 = sphi 0, %s57
      %s72 = sphi 0, %s58
      %s76 = sphi 0, %s76
      %s78 = sphi 0, %s76
      %s79 = sphi 0, %s78
      %s93 = sphi 0, %s79
      %s97 = sphi 0, %s97
      %s99 = sphi 0, %s97
      %s100 = sphi 0, %s99
      %s114 = sphi 0, %s100
      %s118 = sphi 0, %s118
      %s120 = sphi 0, %s118
      %s121 = sphi 0, %s120
      %s135 = sphi 0, %s121
      %s141 = sphi 0, %s143
      %s144 = sphi 0, %s141
      %s145 = sphi 0, %s144
      %s161 = sphi 0, %s145
      %s165 = sphi 0, %s165
      %s167 = sphi 0, %s165
      %s168 = sphi 0, %s167
      %s182 = sphi 0, %s168
      %s186 = sphi 0, %s186
      %s188 = sphi 0, %s186
      %s189 = sphi 0, %s188
      %s203 = sphi 0, %s189
      %s207 = sphi 0, %s207
      %s209 = sphi 0, %s207
      %s210 = sphi 0, %s209
      %s224 = sphi 0, %s210
      %s228 = sphi 0, %s228
      %s230 = sphi 0, %s228
      %s231 = sphi 0, %s230
      %s245 = sphi 0, %s231
      %s249 = sphi 0, %s249
      %s251 = sphi 0, %s249
      %s252 = sphi 0, %s251
      %s266 = sphi 0, %s252
      %s272 = sphi 0, %s274
      %s275 = sphi 0, %s272
      %s276 = sphi 0, %s275
      %s292 = sphi 0, %s276
      %s298 = sphi 0, %s300
      %s301 = sphi 0, %s298
      %s302 = sphi 0, %s301
      %s318 = sphi 0, %s302
    $region4: #{decoding_block.3} parent=1 // loop_header_branch
      %24 = sbr.rel (%p22) target = $region8
    $region5: #{decoding_block.3} parent=1 // loop_body
      %s26 = ssub.s32 %s21, 1
      %s27 = ssub.s32 %s21, 2
      %s28 = sadd.s32 %s21, 1
      %s29 = ssub.s32 %s21, %s28
      %p30 = scmp.eq.s32.totalorder %s29, 0
      %s32 = sadd.s32 %s31, 1
      %s33 = scalar_select %p30, %s31, %s32
      %p36 = pneg %p30
      %p37 = scmp.eq.s32.totalorder %s21, 1
      %p38 = por %p36, %p37
      %p39 = scmp.ne.s32.totalorder %s31, %s34
      %p40 = scmp.eq.s32.totalorder %s21, 0
      %p41 = por %p39, %p40
      %p42 = scmp.ne.s32.totalorder %s31, %s34
      %p43 = scmp.eq.s32.totalorder %s26, 1
      %p44 = por %p42, %p43
      %p45 = scmp.ne.s32.totalorder %s34, %s35
      %p46 = scmp.eq.s32.totalorder %s26, 0
      %p47 = por %p45, %p46
      %p48 = scmp.ne.s32.totalorder %s34, %s35
      %p49 = scmp.eq.s32.totalorder %s27, 1
      %p50 = por %p48, %p49
      %p52 = scmp.ne.s32.totalorder %s35, %s51
      %p53 = scmp.eq.s32.totalorder %s27, 0
      %p54 = por %p52, %p53
      %s56 = sadd.s32 %s55, 1
      %p59 = scmp.eq.s32.totalorder %s21, 1
      %p60 = scmp.ne.s32.totalorder %s55, %s57
      %p61 = scmp.eq.s32.totalorder %s21, 0
      %p62 = por %p60, %p61
      %p63 = scmp.ne.s32.totalorder %s55, %s57
      %p64 = scmp.eq.s32.totalorder %s26, 1
      %p65 = por %p63, %p64
      %p66 = scmp.ne.s32.totalorder %s57, %s58
      %p67 = scmp.eq.s32.totalorder %s26, 0
      %p68 = por %p66, %p67
      %p69 = scmp.ne.s32.totalorder %s57, %s58
      %p70 = scmp.eq.s32.totalorder %s27, 1
      %p71 = por %p69, %p70
      %p73 = scmp.ne.s32.totalorder %s58, %s72
      %p74 = scmp.eq.s32.totalorder %s27, 0
      %p75 = por %p73, %p74
      %s77 = sadd.s32 %s76, 1
      %p80 = scmp.eq.s32.totalorder %s21, 1
      %p81 = scmp.ne.s32.totalorder %s76, %s78
      %p82 = scmp.eq.s32.totalorder %s21, 0
      %p83 = por %p81, %p82
      %p84 = scmp.ne.s32.totalorder %s76, %s78
      %p85 = scmp.eq.s32.totalorder %s26, 1
      %p86 = por %p84, %p85
      %p87 = scmp.ne.s32.totalorder %s78, %s79
      %p88 = scmp.eq.s32.totalorder %s26, 0
      %p89 = por %p87, %p88
      %p90 = scmp.ne.s32.totalorder %s78, %s79
      %p91 = scmp.eq.s32.totalorder %s27, 1
      %p92 = por %p90, %p91
      %p94 = scmp.ne.s32.totalorder %s79, %s93
      %p95 = scmp.eq.s32.totalorder %s27, 0
      %p96 = por %p94, %p95
      %s98 = sadd.s32 %s97, 1
      %p101 = scmp.eq.s32.totalorder %s21, 1
      %p102 = scmp.ne.s32.totalorder %s97, %s99
      %p103 = scmp.eq.s32.totalorder %s21, 0
      %p104 = por %p102, %p103
      %p105 = scmp.ne.s32.totalorder %s97, %s99
      %p106 = scmp.eq.s32.totalorder %s26, 1
      %p107 = por %p105, %p106
      %p108 = scmp.ne.s32.totalorder %s99, %s100
      %p109 = scmp.eq.s32.totalorder %s26, 0
      %p110 = por %p108, %p109
      %p111 = scmp.ne.s32.totalorder %s99, %s100
      %p112 = scmp.eq.s32.totalorder %s27, 1
      %p113 = por %p111, %p112
      %p115 = scmp.ne.s32.totalorder %s100, %s114
      %p116 = scmp.eq.s32.totalorder %s27, 0
      %p117 = por %p115, %p116
      %s119 = sadd.s32 %s118, 1
      %p122 = scmp.eq.s32.totalorder %s21, 1
      %p123 = scmp.ne.s32.totalorder %s118, %s120
      %p124 = scmp.eq.s32.totalorder %s21, 0
      %p125 = por %p123, %p124
      %p126 = scmp.ne.s32.totalorder %s118, %s120
      %p127 = scmp.eq.s32.totalorder %s26, 1
      %p128 = por %p126, %p127
      %p129 = scmp.ne.s32.totalorder %s120, %s121
      %p130 = scmp.eq.s32.totalorder %s26, 0
      %p131 = por %p129, %p130
      %p132 = scmp.ne.s32.totalorder %s120, %s121
      %p133 = scmp.eq.s32.totalorder %s27, 1
      %p134 = por %p132, %p133
      %p136 = scmp.ne.s32.totalorder %s121, %s135
      %p137 = scmp.eq.s32.totalorder %s27, 0
      %p138 = por %p136, %p137
      %s139 = ssub.s32 %s21, %s28
      %p140 = scmp.eq.s32.totalorder %s139, 0
      %s142 = sadd.s32 %s141, 1
      %s143 = scalar_select %p140, %s141, %s142
      %p146 = pneg %p140
      %p147 = scmp.eq.s32.totalorder %s21, 1
      %p148 = por %p146, %p147
      %p149 = scmp.ne.s32.totalorder %s141, %s144
      %p150 = scmp.eq.s32.totalorder %s21, 0
      %p151 = por %p149, %p150
      %p152 = scmp.ne.s32.totalorder %s141, %s144
      %p153 = scmp.eq.s32.totalorder %s26, 1
      %p154 = por %p152, %p153
      %p155 = scmp.ne.s32.totalorder %s144, %s145
      %p156 = scmp.eq.s32.totalorder %s26, 0
      %p157 = por %p155, %p156
      %p158 = scmp.ne.s32.totalorder %s144, %s145
      %p159 = scmp.eq.s32.totalorder %s27, 1
      %p160 = por %p158, %p159
      %p162 = scmp.ne.s32.totalorder %s145, %s161
      %p163 = scmp.eq.s32.totalorder %s27, 0
      %p164 = por %p162, %p163
      %s166 = sadd.s32 %s165, 1
      %p169 = scmp.eq.s32.totalorder %s21, 1
      %p170 = scmp.ne.s32.totalorder %s165, %s167
      %p171 = scmp.eq.s32.totalorder %s21, 0
      %p172 = por %p170, %p171
      %p173 = scmp.ne.s32.totalorder %s165, %s167
      %p174 = scmp.eq.s32.totalorder %s26, 1
      %p175 = por %p173, %p174
      %p176 = scmp.ne.s32.totalorder %s167, %s168
      %p177 = scmp.eq.s32.totalorder %s26, 0
      %p178 = por %p176, %p177
      %p179 = scmp.ne.s32.totalorder %s167, %s168
      %p180 = scmp.eq.s32.totalorder %s27, 1
      %p181 = por %p179, %p180
      %p183 = scmp.ne.s32.totalorder %s168, %s182
      %p184 = scmp.eq.s32.totalorder %s27, 0
      %p185 = por %p183, %p184
      %s187 = sadd.s32 %s186, 1
      %p190 = scmp.eq.s32.totalorder %s21, 1
      %p191 = scmp.ne.s32.totalorder %s186, %s188
      %p192 = scmp.eq.s32.totalorder %s21, 0
      %p193 = por %p191, %p192
      %p194 = scmp.ne.s32.totalorder %s186, %s188
      %p195 = scmp.eq.s32.totalorder %s26, 1
      %p196 = por %p194, %p195
      %p197 = scmp.ne.s32.totalorder %s188, %s189
      %p198 = scmp.eq.s32.totalorder %s26, 0
      %p199 = por %p197, %p198
      %p200 = scmp.ne.s32.totalorder %s188, %s189
      %p201 = scmp.eq.s32.totalorder %s27, 1
      %p202 = por %p200, %p201
      %p204 = scmp.ne.s32.totalorder %s189, %s203
      %p205 = scmp.eq.s32.totalorder %s27, 0
      %p206 = por %p204, %p205
      %s208 = sadd.s32 %s207, 1
      %p211 = scmp.eq.s32.totalorder %s21, 1
      %p212 = scmp.ne.s32.totalorder %s207, %s209
      %p213 = scmp.eq.s32.totalorder %s21, 0
      %p214 = por %p212, %p213
      %p215 = scmp.ne.s32.totalorder %s207, %s209
      %p216 = scmp.eq.s32.totalorder %s26, 1
      %p217 = por %p215, %p216
      %p218 = scmp.ne.s32.totalorder %s209, %s210
      %p219 = scmp.eq.s32.totalorder %s26, 0
      %p220 = por %p218, %p219
      %p221 = scmp.ne.s32.totalorder %s209, %s210
      %p222 = scmp.eq.s32.totalorder %s27, 1
      %p223 = por %p221, %p222
      %p225 = scmp.ne.s32.totalorder %s210, %s224
      %p226 = scmp.eq.s32.totalorder %s27, 0
      %p227 = por %p225, %p226
      %s229 = sadd.s32 %s228, 1
      %p232 = scmp.eq.s32.totalorder %s21, 1
      %p233 = scmp.ne.s32.totalorder %s228, %s230
      %p234 = scmp.eq.s32.totalorder %s21, 0
      %p235 = por %p233, %p234
      %p236 = scmp.ne.s32.totalorder %s228, %s230
      %p237 = scmp.eq.s32.totalorder %s26, 1
      %p238 = por %p236, %p237
      %p239 = scmp.ne.s32.totalorder %s230, %s231
      %p240 = scmp.eq.s32.totalorder %s26, 0
      %p241 = por %p239, %p240
      %p242 = scmp.ne.s32.totalorder %s230, %s231
      %p243 = scmp.eq.s32.totalorder %s27, 1
      %p244 = por %p242, %p243
      %p246 = scmp.ne.s32.totalorder %s231, %s245
      %p247 = scmp.eq.s32.totalorder %s27, 0
      %p248 = por %p246, %p247
      %s250 = sadd.s32 %s249, 1
      %p253 = scmp.eq.s32.totalorder %s21, 1
      %p254 = scmp.ne.s32.totalorder %s249, %s251
      %p255 = scmp.eq.s32.totalorder %s21, 0
      %p256 = por %p254, %p255
      %p257 = scmp.ne.s32.totalorder %s249, %s251
      %p258 = scmp.eq.s32.totalorder %s26, 1
      %p259 = por %p257, %p258
      %p260 = scmp.ne.s32.totalorder %s251, %s252
      %p261 = scmp.eq.s32.totalorder %s26, 0
      %p262 = por %p260, %p261
      %p263 = scmp.ne.s32.totalorder %s251, %s252
      %p264 = scmp.eq.s32.totalorder %s27, 1
      %p265 = por %p263, %p264
      %p267 = scmp.ne.s32.totalorder %s252, %s266
      %p268 = scmp.eq.s32.totalorder %s27, 0
      %p269 = por %p267, %p268
      %s270 = ssub.s32 %s21, %s28
      %p271 = scmp.eq.s32.totalorder %s270, 0
      %s273 = sadd.s32 %s272, 1
      %s274 = scalar_select %p271, %s272, %s273
      %p277 = pneg %p271
      %p278 = scmp.eq.s32.totalorder %s21, 1
      %p279 = por %p277, %p278
      %p280 = scmp.ne.s32.totalorder %s272, %s275
      %p281 = scmp.eq.s32.totalorder %s21, 0
      %p282 = por %p280, %p281
      %p283 = scmp.ne.s32.totalorder %s272, %s275
      %p284 = scmp.eq.s32.totalorder %s26, 1
      %p285 = por %p283, %p284
      %p286 = scmp.ne.s32.totalorder %s275, %s276
      %p287 = scmp.eq.s32.totalorder %s26, 0
      %p288 = por %p286, %p287
      %p289 = scmp.ne.s32.totalorder %s275, %s276
      %p290 = scmp.eq.s32.totalorder %s27, 1
      %p291 = por %p289, %p290
      %p293 = scmp.ne.s32.totalorder %s276, %s292
      %p294 = scmp.eq.s32.totalorder %s27, 0
      %p295 = por %p293, %p294
      %s296 = ssub.s32 %s21, %s28
      %p297 = scmp.eq.s32.totalorder %s296, 0
      %s299 = sadd.s32 %s298, 1
      %s300 = scalar_select %p297, %s298, %s299
      %p303 = pneg %p297
      %p304 = scmp.eq.s32.totalorder %s21, 1
      %p305 = por %p303, %p304
      %p306 = scmp.ne.s32.totalorder %s298, %s301
      %p307 = scmp.eq.s32.totalorder %s21, 0
      %p308 = por %p306, %p307
      %p309 = scmp.ne.s32.totalorder %s298, %s301
      %p310 = scmp.eq.s32.totalorder %s26, 1
      %p311 = por %p309, %p310
      %p312 = scmp.ne.s32.totalorder %s301, %s302
      %p313 = scmp.eq.s32.totalorder %s26, 0
      %p314 = por %p312, %p313
      %p315 = scmp.ne.s32.totalorder %s301, %s302
      %p316 = scmp.eq.s32.totalorder %s27, 1
      %p317 = por %p315, %p316
      %p319 = scmp.ne.s32.totalorder %s302, %s318
      %p320 = scmp.eq.s32.totalorder %s27, 0
      %p321 = por %p319, %p320
      %p322 = scmp.le.s32.totalorder 1, %s21
      %p323 = scmp.lt.s32.totalorder %s21, 3
      %p324 = pnand %p322, %p323
      %p325 = pneg %p324
      // Predicated region
      $region9: #{decoding_block.3} parent=5 // pred_check
        _
      $region10: #{decoding_block.3} parent=5 // pred_check_branch
        %327 = sbr.rel (%p324) target = $region12
      $region11: #{decoding_block.3} parent=5 // pred_region
        %s328 = ssub.s32 %s21, 1
        // Predicated region
        $region13: #{decoding_block.3} parent=11 // pred_check
          %p329 = pneg %p68
        $region14: #{decoding_block.3} parent=11 // pred_check_branch
          %331 = sbr.rel (%p329) target = $region16
        $region15: #{decoding_block.3} parent=11 // pred_region
          _
        $region16: #{decoding_block.3} parent=11 // pred_fallthru
          _
        // Predicated region
        $region17: #{decoding_block.3} parent=11 // pred_check
          %p332 = pneg %p89
        $region18: #{decoding_block.3} parent=11 // pred_check_branch
          %334 = sbr.rel (%p332) target = $region20
        $region19: #{decoding_block.3} parent=11 // pred_region
          _
        $region20: #{decoding_block.3} parent=11 // pred_fallthru
          _
        // Predicated region
        $region21: #{decoding_block.3} parent=11 // pred_check
          %p335 = pneg %p110
        $region22: #{decoding_block.3} parent=11 // pred_check_branch
          %337 = sbr.rel (%p335) target = $region24
        $region23: #{decoding_block.3} parent=11 // pred_region
          _
        $region24: #{decoding_block.3} parent=11 // pred_fallthru
          _
        // Predicated region
        $region25: #{decoding_block.3} parent=11 // pred_check
          %p338 = pneg %p131
        $region26: #{decoding_block.3} parent=11 // pred_check_branch
          %340 = sbr.rel (%p338) target = $region28
        $region27: #{decoding_block.3} parent=11 // pred_region
          _
        $region28: #{decoding_block.3} parent=11 // pred_fallthru
          _
        // Predicated region
        $region29: #{decoding_block.3} parent=11 // pred_check
          %p341 = pneg %p178
        $region30: #{decoding_block.3} parent=11 // pred_check_branch
          %343 = sbr.rel (%p341) target = $region32
        $region31: #{decoding_block.3} parent=11 // pred_region
          _
        $region32: #{decoding_block.3} parent=11 // pred_fallthru
          _
        // Predicated region
        $region33: #{decoding_block.3} parent=11 // pred_check
          %p344 = pneg %p199
        $region34: #{decoding_block.3} parent=11 // pred_check_branch
          %346 = sbr.rel (%p344) target = $region36
        $region35: #{decoding_block.3} parent=11 // pred_region
          _
        $region36: #{decoding_block.3} parent=11 // pred_fallthru
          _
        // Predicated region
        $region37: #{decoding_block.3} parent=11 // pred_check
          %p347 = pneg %p220
        $region38: #{decoding_block.3} parent=11 // pred_check_branch
          %349 = sbr.rel (%p347) target = $region40
        $region39: #{decoding_block.3} parent=11 // pred_region
          _
        $region40: #{decoding_block.3} parent=11 // pred_fallthru
          _
        // Predicated region
        $region41: #{decoding_block.3} parent=11 // pred_check
          %p350 = pneg %p241
        $region42: #{decoding_block.3} parent=11 // pred_check_branch
          %352 = sbr.rel (%p350) target = $region44
        $region43: #{decoding_block.3} parent=11 // pred_region
          _
        $region44: #{decoding_block.3} parent=11 // pred_fallthru
          _
        // Predicated region
        $region45: #{decoding_block.3} parent=11 // pred_check
          %p353 = pneg %p262
        $region46: #{decoding_block.3} parent=11 // pred_check_branch
          %355 = sbr.rel (%p353) target = $region48
        $region47: #{decoding_block.3} parent=11 // pred_region
          _
        $region48: #{decoding_block.3} parent=11 // pred_fallthru
          _
      $region12: #{decoding_block.3} parent=5 // pred_fallthru
        _
      %p356 = scmp.lt.s32.totalorder %s21, 2
      // Predicated region
      $region49: #{decoding_block.3} parent=5 // pred_check
        %p357 = pneg %p356
      $region50: #{decoding_block.3} parent=5 // pred_check_branch
        %359 = sbr.rel (%p357) target = $region52
      $region51: #{decoding_block.3} parent=5 // pred_region
        // Predicated region
        $region53: #{decoding_block.3} parent=51 // pred_check
          %p360 = pneg %p41
        $region54: #{decoding_block.3} parent=51 // pred_check_branch
          %362 = sbr.rel (%p360) target = $region56
        $region55: #{decoding_block.3} parent=51 // pred_region
          %p363 = scmp.lt.s32.totalorder %s21, 1
          %s364 = scalar_select %p363, %s21, 1
          %s365 = scalar_lea.vmem %s0, %s364
        $region56: #{decoding_block.3} parent=51 // pred_fallthru
          _
        // Predicated region
        $region57: #{decoding_block.3} parent=51 // pred_check
          %p366 = pneg %p151
        $region58: #{decoding_block.3} parent=51 // pred_check_branch
          %368 = sbr.rel (%p366) target = $region60
        $region59: #{decoding_block.3} parent=51 // pred_region
          %p369 = scmp.lt.s32.totalorder %s21, 1
          %s370 = scalar_select %p369, %s21, 1
          %s371 = smul.addr %s370, 8
          %s372 = smul.addr %s371, 8
          %s373 = scalar_lea.vmem %s5, %s372
        $region60: #{decoding_block.3} parent=51 // pred_fallthru
          _
        // Predicated region
        $region61: #{decoding_block.3} parent=51 // pred_check
          %p374 = pneg %p282
        $region62: #{decoding_block.3} parent=51 // pred_check_branch
          %376 = sbr.rel (%p374) target = $region64
        $region63: #{decoding_block.3} parent=51 // pred_region
          %p377 = scmp.lt.s32.totalorder %s21, 1
          %s378 = scalar_select %p377, %s21, 1
          %s379 = smul.addr %s378, 8
          %s380 = smul.addr %s379, 8
          %s381 = scalar_lea.vmem %s11, %s380
        $region64: #{decoding_block.3} parent=51 // pred_fallthru
          _
      $region52: #{decoding_block.3} parent=5 // pred_fallthru
        _
      %p382 = scmp.le.s32.totalorder 1, %s21
      %p383 = scmp.lt.s32.totalorder %s21, 3
      %p384 = pnand %p382, %p383
      %p385 = pneg %p384
      // Predicated region
      $region65: #{decoding_block.3} parent=5 // pred_check
        _
      $region66: #{decoding_block.3} parent=5 // pred_check_branch
        %387 = sbr.rel (%p384) target = $region68
      $region67: #{decoding_block.3} parent=5 // pred_region
        %s388 = ssub.s32 %s21, 1
        %p389 = scmp.lt.s32.totalorder %s26, 1
        %s390 = scalar_select %p389, %s26, 1
        %s391 = scalar_lea.vmem %s0, %s390
        %p392 = pneg %p47
        %p393 = pneg %p44
        %p394 = pneg %p68
        %p395 = pneg %p65
        %p396 = pneg %p89
        %p397 = pneg %p86
        %p398 = pneg %p110
        %p399 = pneg %p107
        %p400 = pneg %p131
        %p401 = pneg %p128
        %p402 = scmp.lt.s32.totalorder %s26, 1
        %s403 = scalar_select %p402, %s26, 1
        %s404 = smul.addr %s403, 8
        %s405 = smul.addr %s404, 8
        %s406 = scalar_lea.vmem %s5, %s405
        %p407 = pneg %p157
        %p408 = pneg %p154
        %p409 = pneg %p178
        %p410 = pneg %p175
        %p411 = pneg %p199
        %p412 = pneg %p196
        %p413 = pneg %p220
        %p414 = pneg %p217
        %p415 = pneg %p241
        %p416 = pneg %p238
        %p417 = pneg %p262
        %p418 = pneg %p259
        %p419 = scmp.lt.s32.totalorder %s26, 1
        %s420 = scalar_select %p419, %s26, 1
        %s421 = smul.addr %s420, 8
        %s422 = smul.addr %s421, 8
        %s423 = scalar_lea.vmem %s11, %s422
        %p424 = pneg %p288
        %p425 = pneg %p285
        %p426 = pneg %p314
        %p427 = pneg %p311
        %s428 = sand.u32 %s301, 1
        %s429 = scalar_lea.sflag [#allocation4], %s428
        %s430 = sand.u32 %s301, 1
        %s431 = smul.addr %s430, 64
        %s432 = scalar_lea.vmem [#allocation3], %s431
        %p433 = scmp.lt.s32.totalorder %s26, 1
        %s434 = scalar_select %p433, %s26, 1
        %s435 = scalar_lea.vmem %s0, %s434
        %p436 = scmp.lt.s32.totalorder %s26, 1
        %s437 = scalar_select %p436, %s26, 1
        %s438 = smul.addr %s437, 8
        %s439 = smul.addr %s438, 8
        %s440 = scalar_lea.vmem %s5, %s439
        %p441 = scmp.lt.s32.totalorder %s26, 1
        %s442 = scalar_select %p441, %s26, 1
        %s443 = smul.addr %s442, 8
        %s444 = smul.addr %s443, 8
        %s445 = scalar_lea.vmem %s11, %s444
        %v447 = vld [vmem:[%s440] sm:$0xff]
        %v448 = vld [vmem:[%s440 + $0x8] sm:$0xff]
        %v449 = vld [vmem:[%s440 + $0x10] sm:$0xff]
        %v450 = vld [vmem:[%s440 + $0x18] sm:$0xff]
        %v451 = vld [vmem:[%s440 + $0x20] sm:$0xff]
        %v452 = vld [vmem:[%s440 + $0x28] sm:$0xff]
        %v453 = vld [vmem:[%s440 + $0x30] sm:$0xff]
        %v454 = vld [vmem:[%s440 + $0x38] sm:$0xff]
        %v455 = vld [vmem:[%s435] sm:$0x1]
        %v456 = vld [vmem:[%s1] sm:$0xff]
        %v457 = vld [vmem:[%s2] sm:$0x1]
        %vm458 = vcmask 64512
        %v460 = vsel %vm458, %v455, 0
        %462 = vmatprep.subr.mxu0 0.0
        %463 = vmatpush1.msra.mxu0 0.0
        %464 = vmatprep.subr.mxu0 0.0
        %465 = vmatpush1.msra.mxu0 0.0
        %466 = vmatprep.subr.mxu0 0.0
        %467 = vmatpush1.msra.mxu0 0.0
        %468 = vmatprep.subr.mxu0 0.0
        %469 = vmatpush1.msra.mxu0 0.0
        %470 = vmatprep.subr.mxu0 0.0
        %471 = vmatpush1.msra.mxu0 0.0
        %472 = vmatprep.subr.mxu0 0.0
        %473 = vmatpush1.msra.mxu0 0.0
        %474 = vmatprep.subr.mxu0 0.0
        %475 = vmatpush1.msra.mxu0 0.0
        %476 = vmatprep.subr.mxu0 0.0
        %477 = vmatpush1.msra.mxu0 0.0
        %478 = vmatprep.subr.mxu0 0.0
        %479 = vmatpush1.msra.mxu0 0.0
        %480 = vmatprep.subr.mxu0 0.0
        %481 = vmatpush1.msra.mxu0 0.0
        %482 = vmatprep.subr.mxu0 0.0
        %483 = vmatpush1.msra.mxu0 0.0
        %484 = vmatprep.subr.mxu0 0.0
        %485 = vmatpush1.msra.mxu0 0.0
        %486 = vmatprep.subr.mxu0 0.0
        %487 = vmatpush1.msra.mxu0 0.0
        %488 = vmatprep.subr.mxu0 0.0
        %489 = vmatpush1.msra.mxu0 0.0
        %490 = vmatprep.subr.mxu0 0.0
        %491 = vmatpush1.msra.mxu0 0.0
        %492 = vmatprep.subr.mxu0 0.0
        %493 = vmatpush1.msra.mxu0 %v456
        %494 = vmatprep.subr.mxu0 0.0
        %495 = vmatpush2.msra.mxu0 0.0
        %496 = vmatprep.subr.mxu0 0.0
        %497 = vmatpush2.msra.mxu0 0.0
        %498 = vmatprep.subr.mxu0 0.0
        %499 = vmatpush2.msra.mxu0 0.0
        %500 = vmatprep.subr.mxu0 0.0
        %501 = vmatpush2.msra.mxu0 0.0
        %502 = vmatprep.subr.mxu0 0.0
        %503 = vmatpush2.msra.mxu0 0.0
        %504 = vmatprep.subr.mxu0 0.0
        %505 = vmatpush2.msra.mxu0 0.0
        %506 = vmatprep.subr.mxu0 0.0
        %507 = vmatpush2.msra.mxu0 0.0
        %508 = vmatprep.subr.mxu0 0.0
        %509 = vmatpush2.msra.mxu0 0.0
        %510 = vmatprep.subr.mxu0 0.0
        %511 = vmatpush2.msra.mxu0 0.0
        %512 = vmatprep.subr.mxu0 0.0
        %513 = vmatpush2.msra.mxu0 0.0
        %514 = vmatprep.subr.mxu0 0.0
        %515 = vmatpush2.msra.mxu0 0.0
        %516 = vmatprep.subr.mxu0 0.0
        %517 = vmatpush2.msra.mxu0 0.0
        %518 = vmatprep.subr.mxu0 0.0
        %519 = vmatpush2.msra.mxu0 0.0
        %520 = vmatprep.subr.mxu0 0.0
        %521 = vmatpush2.msra.mxu0 0.0
        %522 = vmatprep.subr.mxu0 0.0
        %523 = vmatpush2.msra.mxu0 0.0
        %524 = vmatprep.subr.mxu0 0.0
        %525 = vmatpush2.msra.mxu0 0.0
        %526 = vmatprep.mubr.f32.mxu0 0.0
        %527 = vmatmul.mubr.f32.gmra.mxu0 %v460
        %v528 = vpop.f32.mrf.mxu0
        %v529 = vadd.f32 %v457, %v528
        %v530 = vpop.f32.mrf.mxu0
        %531 = vdwg.mxu0
        %v532 = vmin.f32 %v529, 20.0
        %v533 = vmul.f32 %v532, 1.442695
        %v534 = vpow.pop %v533
        %v535 = vadd.f32 %v534, 1.0
        %v536 = vmul.f32 %v535, %v535
        %v537 = vadd.f32 %v536, 1.0
        %v538 = vrcp.pop %v537
        %v539 = vmul.f32 %v538, 2.0
        %v540 = vsub.f32 1.0, %v539
        %v541 = vmul.f32 %v529, %v540
        %v542 = vld [vmem:[%s3] sm:$0xff]
        %v543 = vld [vmem:[%s3 + $0x8] sm:$0xff]
        %v544 = vld [vmem:[%s3 + $0x10] sm:$0xff]
        %v545 = vld [vmem:[%s3 + $0x18] sm:$0xff]
        %v546 = vld [vmem:[%s3 + $0x20] sm:$0xff]
        %v547 = vld [vmem:[%s3 + $0x28] sm:$0xff]
        %v548 = vld [vmem:[%s3 + $0x30] sm:$0xff]
        %v549 = vld [vmem:[%s3 + $0x38] sm:$0xff]
        %v550 = vld [vmem:[%s3 + $0x40] sm:$0xff]
        %v551 = vld [vmem:[%s3 + $0x48] sm:$0xff]
        %v552 = vld [vmem:[%s3 + $0x50] sm:$0xff]
        %v553 = vld [vmem:[%s3 + $0x58] sm:$0xff]
        %v554 = vld [vmem:[%s3 + $0x60] sm:$0xff]
        %v555 = vld [vmem:[%s3 + $0x68] sm:$0xff]
        %v556 = vld [vmem:[%s3 + $0x70] sm:$0xff]
        %v557 = vld [vmem:[%s3 + $0x78] sm:$0xff]
        %v558 = vld [vmem:[%s4] sm:$0x1]
        %559 = vmatprep.subr.mxu0 0.0
        %560 = vmatpush1.msra.mxu0 %v557
        %561 = vmatprep.subr.mxu0 0.0
        %562 = vmatpush1.msra.mxu0 %v556
        %563 = vmatprep.subr.mxu0 0.0
        %564 = vmatpush1.msra.mxu0 %v555
        %565 = vmatprep.subr.mxu0 0.0
        %566 = vmatpush1.msra.mxu0 %v554
        %567 = vmatprep.subr.mxu0 0.0
        %568 = vmatpush1.msra.mxu0 %v553
        %569 = vmatprep.subr.mxu0 0.0
        %570 = vmatpush1.msra.mxu0 %v552
        %571 = vmatprep.subr.mxu0 0.0
        %572 = vmatpush1.msra.mxu0 %v551
        %573 = vmatprep.subr.mxu0 0.0
        %574 = vmatpush1.msra.mxu0 %v550
        %575 = vmatprep.subr.mxu0 0.0
        %576 = vmatpush1.msra.mxu0 %v549
        %577 = vmatprep.subr.mxu0 0.0
        %578 = vmatpush1.msra.mxu0 %v548
        %579 = vmatprep.subr.mxu0 0.0
        %580 = vmatpush1.msra.mxu0 %v547
        %581 = vmatprep.subr.mxu0 0.0
        %582 = vmatpush1.msra.mxu0 %v546
        %583 = vmatprep.subr.mxu0 0.0
        %584 = vmatpush1.msra.mxu0 %v545
        %585 = vmatprep.subr.mxu0 0.0
        %586 = vmatpush1.msra.mxu0 %v544
        %587 = vmatprep.subr.mxu0 0.0
        %588 = vmatpush1.msra.mxu0 %v543
        %589 = vmatprep.subr.mxu0 0.0
        %590 = vmatpush1.msra.mxu0 %v542
        %591 = vmatprep.subr.mxu0 0.0
        %592 = vmatpush2.msra.mxu0 0.0
        %593 = vmatprep.subr.mxu0 0.0
        %594 = vmatpush2.msra.mxu0 0.0
        %595 = vmatprep.subr.mxu0 0.0
        %596 = vmatpush2.msra.mxu0 0.0
        %597 = vmatprep.subr.mxu0 0.0
        %598 = vmatpush2.msra.mxu0 0.0
        %599 = vmatprep.subr.mxu0 0.0
        %600 = vmatpush2.msra.mxu0 0.0
        %601 = vmatprep.subr.mxu0 0.0
        %602 = vmatpush2.msra.mxu0 0.0
        %603 = vmatprep.subr.mxu0 0.0
        %604 = vmatpush2.msra.mxu0 0.0
        %605 = vmatprep.subr.mxu0 0.0
        %606 = vmatpush2.msra.mxu0 0.0
        %607 = vmatprep.subr.mxu0 0.0
        %608 = vmatpush2.msra.mxu0 0.0
        %609 = vmatprep.subr.mxu0 0.0
        %610 = vmatpush2.msra.mxu0 0.0
        %611 = vmatprep.subr.mxu0 0.0
        %612 = vmatpush2.msra.mxu0 0.0
        %613 = vmatprep.subr.mxu0 0.0
        %614 = vmatpush2.msra.mxu0 0.0
        %615 = vmatprep.subr.mxu0 0.0
        %616 = vmatpush2.msra.mxu0 0.0
        %617 = vmatprep.subr.mxu0 0.0
        %618 = vmatpush2.msra.mxu0 0.0
        %619 = vmatprep.subr.mxu0 0.0
        %620 = vmatpush2.msra.mxu0 0.0
        %621 = vmatprep.subr.mxu0 0.0
        %622 = vmatpush2.msra.mxu0 0.0
        %623 = vmatprep.mubr.f32.mxu0 0.0
        %624 = vmatmul.mubr.f32.gmra.mxu0 %v541
        %v625 = vpop.f32.mrf.mxu0
        %v626 = vadd.f32 %v558, %v625
        %v627 = vpop.f32.mrf.mxu0
        %628 = vdwg.mxu0
        %v629 = vadd.f32 %v447, %v448
        %v630 = vadd.f32 %v629, %v449
        %v631 = vadd.f32 %v630, %v450
        %v632 = vadd.f32 %v631, %v451
        %v633 = vadd.f32 %v632, %v452
        %v634 = vadd.f32 %v633, %v453
        %v635 = vadd.f32 %v634, %v454
        %v636 = vrot.slane %v635, 4
        %v637 = vadd.f32 %v635, %v636
        %v638 = vrot.slane %v637, 2
        %v639 = vadd.f32 %v637, %v638
        %v640 = vrot.slane %v639, 1
        %v641 = vadd.f32 %v639, %v640
        %v642 = vmul.f32 %v447, %v447
        %v643 = vmul.f32 %v448, %v448
        %v644 = vmul.f32 %v449, %v449
        %v645 = vmul.f32 %v450, %v450
        %v646 = vmul.f32 %v451, %v451
        %v647 = vmul.f32 %v452, %v452
        %v648 = vmul.f32 %v453, %v453
        %v649 = vmul.f32 %v454, %v454
        %v650 = vadd.f32 %v642, %v643
        %v651 = vadd.f32 %v650, %v644
        %v652 = vadd.f32 %v651, %v645
        %v653 = vadd.f32 %v652, %v646
        %v654 = vadd.f32 %v653, %v647
        %v655 = vadd.f32 %v654, %v648
        %v656 = vadd.f32 %v655, %v649
        %v657 = vrot.slane %v656, 4
        %v658 = vadd.f32 %v656, %v657
        %v659 = vrot.slane %v658, 2
        %v660 = vadd.f32 %v658, %v659
        %v661 = vrot.slane %v660, 1
        %v662 = vadd.f32 %v660, %v661
        %v663 = vmul.f32 %v626, 2.0
        %v664 = vmul.f32 %v663, %v641
        %v665 = vadd.f32 %v662, %v664
        %v666 = vmul.f32 %v626, 64.0
        %v667 = vmul.f32 %v666, %v626
        %v668 = vadd.f32 %v665, %v667
        %v669 = vadd.f32 %v641, %v666
        %v671 = vrot.slane %v668, 7
        %vm673 = vcmask 1040384
        %v674 = vsel %vm673, %v669, %v671
        %v675 = vld [vmem:[%s8] sm:$0xff]
        %v676 = vld [vmem:[%s8 + $0x8] sm:$0xff]
        %v677 = vld [vmem:[%s8 + $0x10] sm:$0xff]
        %v678 = vld [vmem:[%s8 + $0x18] sm:$0xff]
        %v679 = vld [vmem:[%s8 + $0x20] sm:$0xff]
        %v680 = vld [vmem:[%s8 + $0x28] sm:$0xff]
        %v681 = vld [vmem:[%s8 + $0x30] sm:$0xff]
        %v682 = vld [vmem:[%s8 + $0x38] sm:$0xff]
        %v683 = vld [vmem:[%s8 + $0x40] sm:$0xff]
        %v684 = vld [vmem:[%s8 + $0x48] sm:$0xff]
        %v685 = vld [vmem:[%s8 + $0x50] sm:$0xff]
        %v686 = vld [vmem:[%s8 + $0x58] sm:$0xff]
        %v687 = vld [vmem:[%s8 + $0x60] sm:$0xff]
        %v688 = vld [vmem:[%s8 + $0x68] sm:$0xff]
        %v689 = vld [vmem:[%s8 + $0x70] sm:$0xff]
        %v690 = vld [vmem:[%s8 + $0x78] sm:$0xff]
        %691 = vmatprep.subr.mxu0 0.0
        %692 = vmatpush1.msra.mxu0 %v690
        %693 = vmatprep.subr.mxu0 0.0
        %694 = vmatpush1.msra.mxu0 %v689
        %695 = vmatprep.subr.mxu0 0.0
        %696 = vmatpush1.msra.mxu0 %v688
        %697 = vmatprep.subr.mxu0 0.0
        %698 = vmatpush1.msra.mxu0 %v687
        %699 = vmatprep.subr.mxu0 0.0
        %700 = vmatpush1.msra.mxu0 %v686
        %701 = vmatprep.subr.mxu0 0.0
        %702 = vmatpush1.msra.mxu0 %v685
        %703 = vmatprep.subr.mxu0 0.0
        %704 = vmatpush1.msra.mxu0 %v684
        %705 = vmatprep.subr.mxu0 0.0
        %706 = vmatpush1.msra.mxu0 %v683
        %707 = vmatprep.subr.mxu0 0.0
        %708 = vmatpush1.msra.mxu0 %v682
        %709 = vmatprep.subr.mxu0 0.0
        %710 = vmatpush1.msra.mxu0 %v681
        %711 = vmatprep.subr.mxu0 0.0
        %712 = vmatpush1.msra.mxu0 %v680
        %713 = vmatprep.subr.mxu0 0.0
        %714 = vmatpush1.msra.mxu0 %v679
        %715 = vmatprep.subr.mxu0 0.0
        %716 = vmatpush1.msra.mxu0 %v678
        %717 = vmatprep.subr.mxu0 0.0
        %718 = vmatpush1.msra.mxu0 %v677
        %719 = vmatprep.subr.mxu0 0.0
        %720 = vmatpush1.msra.mxu0 %v676
        %721 = vmatprep.subr.mxu0 0.0
        %722 = vmatpush1.msra.mxu0 %v675
        %723 = vmatprep.subr.mxu0 0.0
        %724 = vmatpush2.msra.mxu0 0.0
        %725 = vmatprep.subr.mxu0 0.0
        %726 = vmatpush2.msra.mxu0 0.0
        %727 = vmatprep.subr.mxu0 0.0
        %728 = vmatpush2.msra.mxu0 0.0
        %729 = vmatprep.subr.mxu0 0.0
        %730 = vmatpush2.msra.mxu0 0.0
        %731 = vmatprep.subr.mxu0 0.0
        %732 = vmatpush2.msra.mxu0 0.0
        %733 = vmatprep.subr.mxu0 0.0
        %734 = vmatpush2.msra.mxu0 0.0
        %735 = vmatprep.subr.mxu0 0.0
        %736 = vmatpush2.msra.mxu0 0.0
        %737 = vmatprep.subr.mxu0 0.0
        %738 = vmatpush2.msra.mxu0 0.0
        %739 = vmatprep.subr.mxu0 0.0
        %740 = vmatpush2.msra.mxu0 0.0
        %741 = vmatprep.subr.mxu0 0.0
        %742 = vmatpush2.msra.mxu0 0.0
        %743 = vmatprep.subr.mxu0 0.0
        %744 = vmatpush2.msra.mxu0 0.0
        %745 = vmatprep.subr.mxu0 0.0
        %746 = vmatpush2.msra.mxu0 0.0
        %747 = vmatprep.subr.mxu0 0.0
        %748 = vmatpush2.msra.mxu0 0.0
        %749 = vmatprep.subr.mxu0 0.0
        %750 = vmatpush2.msra.mxu0 0.0
        %751 = vmatprep.subr.mxu0 0.0
        %752 = vmatpush2.msra.mxu0 0.0
        %753 = vmatprep.subr.mxu0 0.0
        %754 = vmatpush2.msra.mxu0 0.0
        %755 = vmatprep.mubr.f32.mxu0 0.0
        %756 = vmatmul.mubr.f32.gmra.mxu0 %v674
        %v757 = vpop.f32.mrf.mxu0
        %v758 = vadd.f32 0.0, %v757
        %v759 = vpop.f32.mrf.mxu0
        %760 = vdwg.mxu0
        %v761 = vrcp.pop 256.0
        %v762 = vmul.f32 %v758, %v761
        %v763 = vmul.f32 %v762, %v762
        %v765 = vrot.slane %v763, 7
        %v767 = vsub.f32 %v762, %v765
        %v768 = vadd.f32 %v767, 1e-05
        %v769 = vrsqrt.pop %v768
        %v770 = vld [vmem:[%s6] sm:$0x1]
        %v772 = vlaneseq
        %v773 = vshrl.u32 %v772, 7
        %v774 = vsub.s32 0, %v773
        %v775 = vrot.slane %v770, %v774
        %v777 = vmul.f32 %v769, %v775
        %v778 = vld [vmem:[%s7] sm:$0x1]
        %v780 = vrot.slane %v777, 1
        %v782 = vmul.f32 %v762, %v780
        %v783 = vsub.f32 %v778, %v782
        %v784 = vmul.f32 %v626, %v780
        %v785 = vadd.f32 %v783, %v784
        %v786 = vlaneseq
        %v787 = vshrl.u32 %v786, 7
        %v788 = vsub.s32 1, %v787
        %v789 = vrot.slane %v777, %v788
        %v790 = vmul.f32 %v447, %v789
        %v791 = vmul.f32 %v448, %v789
        %v792 = vmul.f32 %v449, %v789
        %v793 = vmul.f32 %v450, %v789
        %v794 = vmul.f32 %v451, %v789
        %v795 = vmul.f32 %v452, %v789
        %v796 = vmul.f32 %v453, %v789
        %v797 = vmul.f32 %v454, %v789
        %v799 = vlaneseq
        %v800 = vshrl.u32 %v799, 7
        %v801 = vsub.s32 0, %v800
        %v802 = vrot.slane %v785, %v801
        %v804 = vadd.f32 %v790, %v802
        %v805 = vadd.f32 %v791, %v802
        %v806 = vadd.f32 %v792, %v802
        %v807 = vadd.f32 %v793, %v802
        %v808 = vadd.f32 %v794, %v802
        %v809 = vadd.f32 %v795, %v802
        %v810 = vadd.f32 %v796, %v802
        %v811 = vadd.f32 %v797, %v802
        %v812 = vmin.f32 %v804, 20.0
        %v813 = vmin.f32 %v805, 20.0
        %v814 = vmin.f32 %v806, 20.0
        %v815 = vmin.f32 %v807, 20.0
        %v816 = vmin.f32 %v808, 20.0
        %v817 = vmin.f32 %v809, 20.0
        %v818 = vmin.f32 %v810, 20.0
        %v819 = vmin.f32 %v811, 20.0
        %v820 = vmul.f32 %v812, 1.442695
        %v821 = vpow.pop %v820
        %v822 = vmul.f32 %v813, 1.442695
        %v823 = vpow.pop %v822
        %v824 = vmul.f32 %v814, 1.442695
        %v825 = vpow.pop %v824
        %v826 = vmul.f32 %v815, 1.442695
        %v827 = vpow.pop %v826
        %v828 = vmul.f32 %v816, 1.442695
        %v829 = vpow.pop %v828
        %v830 = vmul.f32 %v817, 1.442695
        %v831 = vpow.pop %v830
        %v832 = vmul.f32 %v818, 1.442695
        %v833 = vpow.pop %v832
        %v834 = vmul.f32 %v819, 1.442695
        %v835 = vpow.pop %v834
        %v836 = vadd.f32 %v821, 1.0
        %v837 = vadd.f32 %v823, 1.0
        %v838 = vadd.f32 %v825, 1.0
        %v839 = vadd.f32 %v827, 1.0
        %v840 = vadd.f32 %v829, 1.0
        %v841 = vadd.f32 %v831, 1.0
        %v842 = vadd.f32 %v833, 1.0
        %v843 = vadd.f32 %v835, 1.0
        %v844 = vmul.f32 %v836, %v836
        %v845 = vmul.f32 %v837, %v837
        %v846 = vmul.f32 %v838, %v838
        %v847 = vmul.f32 %v839, %v839
        %v848 = vmul.f32 %v840, %v840
        %v849 = vmul.f32 %v841, %v841
        %v850 = vmul.f32 %v842, %v842
        %v851 = vmul.f32 %v843, %v843
        %v852 = vadd.f32 %v844, 1.0
        %v853 = vadd.f32 %v845, 1.0
        %v854 = vadd.f32 %v846, 1.0
        %v855 = vadd.f32 %v847, 1.0
        %v856 = vadd.f32 %v848, 1.0
        %v857 = vadd.f32 %v849, 1.0
        %v858 = vadd.f32 %v850, 1.0
        %v859 = vadd.f32 %v851, 1.0
        %v860 = vrcp.pop %v852
        %v861 = vrcp.pop %v853
        %v862 = vrcp.pop %v854
        %v863 = vrcp.pop %v855
        %v864 = vrcp.pop %v856
        %v865 = vrcp.pop %v857
        %v866 = vrcp.pop %v858
        %v867 = vrcp.pop %v859
        %v868 = vmul.f32 %v860, 2.0
        %v869 = vmul.f32 %v861, 2.0
        %v870 = vmul.f32 %v862, 2.0
        %v871 = vmul.f32 %v863, 2.0
        %v872 = vmul.f32 %v864, 2.0
        %v873 = vmul.f32 %v865, 2.0
        %v874 = vmul.f32 %v866, 2.0
        %v875 = vmul.f32 %v867, 2.0
        %v876 = vsub.f32 1.0, %v868
        %v877 = vsub.f32 1.0, %v869
        %v878 = vsub.f32 1.0, %v870
        %v879 = vsub.f32 1.0, %v871
        %v880 = vsub.f32 1.0, %v872
        %v881 = vsub.f32 1.0, %v873
        %v882 = vsub.f32 1.0, %v874
        %v883 = vsub.f32 1.0, %v875
        %v884 = vmul.f32 %v804, %v876
        %v885 = vmul.f32 %v805, %v877
        %v886 = vmul.f32 %v806, %v878
        %v887 = vmul.f32 %v807, %v879
        %v888 = vmul.f32 %v808, %v880
        %v889 = vmul.f32 %v809, %v881
        %v890 = vmul.f32 %v810, %v882
        %v891 = vmul.f32 %v811, %v883
        %892 = vst [vmem:[#allocation2] sm:$0xff] 0.0
        %893 = vst [vmem:[#allocation2 + $0x8] sm:$0x3] 0.0
        %894 = vst [vmem:[#allocation2 + $0x10] sm:$0xff] 0.0
        %895 = vst [vmem:[#allocation2 + $0x18] sm:$0x3] 0.0
        %896 = vst [vmem:[#allocation2 + $0x20] sm:$0xff] 0.0
        %897 = vst [vmem:[#allocation2 + $0x28] sm:$0x3] 0.0
        %898 = vst [vmem:[#allocation2 + $0x30] sm:$0xff] 0.0
        %899 = vst [vmem:[#allocation2 + $0x38] sm:$0x3] 0.0
        %900 = vst [vmem:[#allocation2 + $0x40] sm:$0xff] 0.0
        %901 = vst [vmem:[#allocation2 + $0x48] sm:$0x3] 0.0
        %902 = vst [vmem:[#allocation2 + $0x50] sm:$0xff] 0.0
        %903 = vst [vmem:[#allocation2 + $0x58] sm:$0x3] 0.0
        %904 = vst [vmem:[#allocation2 + $0x60] sm:$0xff] 0.0
        %905 = vst [vmem:[#allocation2 + $0x68] sm:$0x3] 0.0
        %906 = vst [vmem:[#allocation2 + $0x70] sm:$0xff] 0.0
        %907 = vst [vmem:[#allocation2 + $0x78] sm:$0x3] 0.0
        %908 = vst [vmem:[#allocation2 + $0x80] sm:$0xff] 0.0
        %909 = vst [vmem:[#allocation2 + $0x88] sm:$0x3] 0.0
        %910 = vst [vmem:[#allocation2 + $0x90] sm:$0xff] 0.0
        %911 = vst [vmem:[#allocation2 + $0x98] sm:$0x3] 0.0
        %s912 = scalar_lea.vmem [#allocation2], 16
        %913 = vst [vmem:[%s912 + $0x1] sm:$0xff] %v884
        %914 = vst [vmem:[%s912 + $0x11] sm:$0xff] %v885
        %915 = vst [vmem:[%s912 + $0x21] sm:$0xff] %v886
        %916 = vst [vmem:[%s912 + $0x31] sm:$0xff] %v887
        %917 = vst [vmem:[%s912 + $0x41] sm:$0xff] %v888
        %918 = vst [vmem:[%s912 + $0x51] sm:$0xff] %v889
        %919 = vst [vmem:[%s912 + $0x61] sm:$0xff] %v890
        %920 = vst [vmem:[%s912 + $0x71] sm:$0xff] %v891
        %v921 = vld [vmem:[#allocation2] sm:$0xff]
        %v922 = vld [vmem:[#allocation2 + $0x8] sm:$0x3]
        %v923 = vld [vmem:[#allocation2 + $0x10] sm:$0xff]
        %v924 = vld [vmem:[#allocation2 + $0x18] sm:$0x3]
        %v925 = vld [vmem:[#allocation2 + $0x20] sm:$0xff]
        %v926 = vld [vmem:[#allocation2 + $0x28] sm:$0x3]
        %v927 = vld [vmem:[#allocation2 + $0x30] sm:$0xff]
        %v928 = vld [vmem:[#allocation2 + $0x38] sm:$0x3]
        %v929 = vld [vmem:[#allocation2 + $0x40] sm:$0xff]
        %v930 = vld [vmem:[#allocation2 + $0x48] sm:$0x3]
        %v931 = vld [vmem:[#allocation2 + $0x50] sm:$0xff]
        %v932 = vld [vmem:[#allocation2 + $0x58] sm:$0x3]
        %v933 = vld [vmem:[#allocation2 + $0x60] sm:$0xff]
        %v934 = vld [vmem:[#allocation2 + $0x68] sm:$0x3]
        %v935 = vld [vmem:[#allocation2 + $0x70] sm:$0xff]
        %v936 = vld [vmem:[#allocation2 + $0x78] sm:$0x3]
        %v937 = vld [vmem:[#allocation2 + $0x80] sm:$0xff]
        %v938 = vld [vmem:[#allocation2 + $0x88] sm:$0x3]
        %v939 = vld [vmem:[#allocation2 + $0x90] sm:$0xff]
        %v940 = vld [vmem:[#allocation2 + $0x98] sm:$0x3]
        %vm957 = vcmask 1046528
        %v958 = vrot.slane %v921, 1
        %v959 = vrot.slane %v922, 1
        %v960 = vsel %vm957, %v958, %v959
        %v961 = vrot.slane %v923, 1
        %v962 = vrot.slane %v924, 1
        %v963 = vsel %vm957, %v961, %v962
        %v964 = vrot.slane %v925, 1
        %v965 = vrot.slane %v926, 1
        %v966 = vsel %vm957, %v964, %v965
        %v967 = vrot.slane %v927, 1
        %v968 = vrot.slane %v928, 1
        %v969 = vsel %vm957, %v967, %v968
        %v970 = vrot.slane %v929, 1
        %v971 = vrot.slane %v930, 1
        %v972 = vsel %vm957, %v970, %v971
        %v973 = vrot.slane %v931, 1
        %v974 = vrot.slane %v932, 1
        %v975 = vsel %vm957, %v973, %v974
        %v976 = vrot.slane %v933, 1
        %v977 = vrot.slane %v934, 1
        %v978 = vsel %vm957, %v976, %v977
        %v979 = vrot.slane %v935, 1
        %v980 = vrot.slane %v936, 1
        %v981 = vsel %vm957, %v979, %v980
        %vm990 = vcmask 1045504
        %v991 = vrot.slane %v921, 2
        %v992 = vrot.slane %v922, 2
        %v993 = vsel %vm990, %v991, %v992
        %v994 = vrot.slane %v923, 2
        %v995 = vrot.slane %v924, 2
        %v996 = vsel %vm990, %v994, %v995
        %v997 = vrot.slane %v925, 2
        %v998 = vrot.slane %v926, 2
        %v999 = vsel %vm990, %v997, %v998
        %v1000 = vrot.slane %v927, 2
        %v1001 = vrot.slane %v928, 2
        %v1002 = vsel %vm990, %v1000, %v1001
        %v1003 = vrot.slane %v929, 2
        %v1004 = vrot.slane %v930, 2
        %v1005 = vsel %vm990, %v1003, %v1004
        %v1006 = vrot.slane %v931, 2
        %v1007 = vrot.slane %v932, 2
        %v1008 = vsel %vm990, %v1006, %v1007
        %v1009 = vrot.slane %v933, 2
        %v1010 = vrot.slane %v934, 2
        %v1011 = vsel %vm990, %v1009, %v1010
        %v1012 = vrot.slane %v935, 2
        %v1013 = vrot.slane %v936, 2
        %v1014 = vsel %vm990, %v1012, %v1013
        %v1025 = vrot.slane %v937, 1
        %v1026 = vrot.slane %v938, 1
        %v1027 = vsel %vm957, %v1025, %v1026
        %v1029 = vrot.slane %v937, 2
        %v1030 = vrot.slane %v938, 2
        %v1031 = vsel %vm990, %v1029, %v1030
        %v1035 = vrot.slane %v939, 1
        %v1036 = vrot.slane %v940, 1
        %v1037 = vsel %vm957, %v1035, %v1036
        %v1039 = vrot.slane %v939, 2
        %v1040 = vrot.slane %v940, 2
        %v1041 = vsel %vm990, %v1039, %v1040
        %v1043 = vpack.c.bf16 %v923, %v921
        %v1044 = vpack.c.bf16 %v963, %v960
        %v1045 = vpack.c.bf16 %v996, %v993
        %v1046 = vpack.c.bf16 %v925, %v923
        %v1047 = vpack.c.bf16 %v966, %v963
        %v1048 = vpack.c.bf16 %v999, %v996
        %v1049 = vpack.c.bf16 %v927, %v925
        %v1050 = vpack.c.bf16 %v969, %v966
        %v1051 = vpack.c.bf16 %v1002, %v999
        %v1052 = vpack.c.bf16 %v929, %v927
        %v1053 = vpack.c.bf16 %v972, %v969
        %v1054 = vpack.c.bf16 %v1005, %v1002
        %v1055 = vpack.c.bf16 %v931, %v929
        %v1056 = vpack.c.bf16 %v975, %v972
        %v1057 = vpack.c.bf16 %v1008, %v1005
        %v1058 = vpack.c.bf16 %v933, %v931
        %v1059 = vpack.c.bf16 %v978, %v975
        %v1060 = vpack.c.bf16 %v1011, %v1008
        %v1061 = vpack.c.bf16 %v935, %v933
        %v1062 = vpack.c.bf16 %v981, %v978
        %v1063 = vpack.c.bf16 %v1014, %v1011
        %v1064 = vpack.c.bf16 %v937, %v935
        %v1065 = vpack.c.bf16 %v1027, %v981
        %v1066 = vpack.c.bf16 %v1031, %v1014
        %v1067 = vpack.c.bf16 %v939, %v937
        %v1068 = vpack.c.bf16 %v1037, %v1027
        %v1069 = vpack.c.bf16 %v1041, %v1031
        %v1070 = vld [vmem:[%s9] sm:$0xf]
        %v1071 = vld [vmem:[%s9 + $0x4] sm:$0xf]
        %v1072 = vld [vmem:[%s9 + $0x8] sm:$0xf]
        %v1073 = vld [vmem:[%s9 + $0xc] sm:$0xf]
        %v1074 = vld [vmem:[%s9 + $0x10] sm:$0xf]
        %v1075 = vld [vmem:[%s9 + $0x14] sm:$0xf]
        %v1076 = vld [vmem:[%s9 + $0x18] sm:$0xf]
        %v1077 = vld [vmem:[%s9 + $0x1c] sm:$0xf]
        %v1078 = vld [vmem:[%s9 + $0x20] sm:$0xf]
        %v1079 = vld [vmem:[%s9 + $0x24] sm:$0xf]
        %v1080 = vld [vmem:[%s9 + $0x28] sm:$0xf]
        %v1081 = vld [vmem:[%s9 + $0x2c] sm:$0xf]
        %v1082 = vld [vmem:[%s9 + $0x30] sm:$0xf]
        %v1083 = vld [vmem:[%s9 + $0x34] sm:$0xf]
        %v1084 = vld [vmem:[%s9 + $0x38] sm:$0xf]
        %v1085 = vld [vmem:[%s9 + $0x3c] sm:$0xf]
        %v1086 = vld [vmem:[%s9 + $0x40] sm:$0xf]
        %v1087 = vld [vmem:[%s9 + $0x44] sm:$0xf]
        %v1088 = vld [vmem:[%s9 + $0x48] sm:$0xf]
        %v1089 = vld [vmem:[%s9 + $0x4c] sm:$0xf]
        %v1090 = vld [vmem:[%s9 + $0x50] sm:$0xf]
        %v1091 = vld [vmem:[%s9 + $0x54] sm:$0xf]
        %v1092 = vld [vmem:[%s9 + $0x58] sm:$0xf]
        %v1093 = vld [vmem:[%s9 + $0x5c] sm:$0xf]
        %v1094 = vld [vmem:[%s9 + $0x60] sm:$0xf]
        %v1095 = vld [vmem:[%s9 + $0x64] sm:$0xf]
        %v1096 = vld [vmem:[%s9 + $0x68] sm:$0xf]
        %v1097 = vld [vmem:[%s9 + $0x6c] sm:$0xf]
        %v1098 = vld [vmem:[%s9 + $0x70] sm:$0xf]
        %v1099 = vld [vmem:[%s9 + $0x74] sm:$0xf]
        %v1100 = vld [vmem:[%s9 + $0x78] sm:$0xf]
        %v1101 = vld [vmem:[%s9 + $0x7c] sm:$0xf]
        %v1102 = vld [vmem:[%s9 + $0x80] sm:$0xf]
        %v1103 = vld [vmem:[%s9 + $0x84] sm:$0xf]
        %v1104 = vld [vmem:[%s9 + $0x88] sm:$0xf]
        %v1105 = vld [vmem:[%s9 + $0x8c] sm:$0xf]
        %v1106 = vld [vmem:[%s9 + $0x90] sm:$0xf]
        %v1107 = vld [vmem:[%s9 + $0x94] sm:$0xf]
        %v1108 = vld [vmem:[%s9 + $0x98] sm:$0xf]
        %v1109 = vld [vmem:[%s9 + $0x9c] sm:$0xf]
        %v1110 = vld [vmem:[%s9 + $0xa0] sm:$0xf]
        %v1111 = vld [vmem:[%s9 + $0xa4] sm:$0xf]
        %v1112 = vld [vmem:[%s9 + $0xa8] sm:$0xf]
        %v1113 = vld [vmem:[%s9 + $0xac] sm:$0xf]
        %v1114 = vld [vmem:[%s9 + $0xb0] sm:$0xf]
        %v1115 = vld [vmem:[%s9 + $0xb4] sm:$0xf]
        %v1116 = vld [vmem:[%s9 + $0xb8] sm:$0xf]
        %v1117 = vld [vmem:[%s9 + $0xbc] sm:$0xf]
        %v1118 = vld [vmem:[%s9 + $0xc0] sm:$0xf]
        %v1119 = vld [vmem:[%s9 + $0xc4] sm:$0xf]
        %v1120 = vld [vmem:[%s9 + $0xc8] sm:$0xf]
        %v1121 = vld [vmem:[%s9 + $0xcc] sm:$0xf]
        %v1122 = vld [vmem:[%s9 + $0xd0] sm:$0xf]
        %v1123 = vld [vmem:[%s9 + $0xd4] sm:$0xf]
        %v1124 = vld [vmem:[%s9 + $0xd8] sm:$0xf]
        %v1125 = vld [vmem:[%s9 + $0xdc] sm:$0xf]
        %v1126 = vld [vmem:[%s9 + $0xe0] sm:$0xf]
        %v1127 = vld [vmem:[%s9 + $0xe4] sm:$0xf]
        %v1128 = vld [vmem:[%s9 + $0xe8] sm:$0xf]
        %v1129 = vld [vmem:[%s9 + $0xec] sm:$0xf]
        %v1130 = vld [vmem:[%s9 + $0xf0] sm:$0xf]
        %v1131 = vld [vmem:[%s9 + $0xf4] sm:$0xf]
        %v1132 = vld [vmem:[%s9 + $0xf8] sm:$0xf]
        %v1133 = vld [vmem:[%s9 + $0xfc] sm:$0xf]
        %v1134 = vld [vmem:[%s9 + $0x100] sm:$0xf]
        %v1135 = vld [vmem:[%s9 + $0x104] sm:$0xf]
        %v1136 = vld [vmem:[%s9 + $0x108] sm:$0xf]
        %v1137 = vld [vmem:[%s9 + $0x10c] sm:$0xf]
        %v1138 = vld [vmem:[%s9 + $0x110] sm:$0xf]
        %v1139 = vld [vmem:[%s9 + $0x114] sm:$0xf]
        %v1140 = vld [vmem:[%s9 + $0x118] sm:$0xf]
        %v1141 = vld [vmem:[%s9 + $0x11c] sm:$0xf]
        %v1142 = vld [vmem:[%s9 + $0x120] sm:$0xf]
        %v1143 = vld [vmem:[%s9 + $0x124] sm:$0xf]
        %v1144 = vld [vmem:[%s9 + $0x128] sm:$0xf]
        %v1145 = vld [vmem:[%s9 + $0x12c] sm:$0xf]
        %v1146 = vld [vmem:[%s9 + $0x130] sm:$0xf]
        %v1147 = vld [vmem:[%s9 + $0x134] sm:$0xf]
        %v1148 = vld [vmem:[%s9 + $0x138] sm:$0xf]
        %v1149 = vld [vmem:[%s9 + $0x13c] sm:$0xf]
        %v1150 = vld [vmem:[%s9 + $0x140] sm:$0xf]
        %v1151 = vld [vmem:[%s9 + $0x144] sm:$0xf]
        %v1152 = vld [vmem:[%s9 + $0x148] sm:$0xf]
        %v1153 = vld [vmem:[%s9 + $0x14c] sm:$0xf]
        %v1154 = vld [vmem:[%s9 + $0x150] sm:$0xf]
        %v1155 = vld [vmem:[%s9 + $0x154] sm:$0xf]
        %v1156 = vld [vmem:[%s9 + $0x158] sm:$0xf]
        %v1157 = vld [vmem:[%s9 + $0x15c] sm:$0xf]
        %v1158 = vld [vmem:[%s9 + $0x160] sm:$0xf]
        %v1159 = vld [vmem:[%s9 + $0x164] sm:$0xf]
        %v1160 = vld [vmem:[%s9 + $0x168] sm:$0xf]
        %v1161 = vld [vmem:[%s9 + $0x16c] sm:$0xf]
        %v1162 = vld [vmem:[%s9 + $0x170] sm:$0xf]
        %v1163 = vld [vmem:[%s9 + $0x174] sm:$0xf]
        %v1164 = vld [vmem:[%s9 + $0x178] sm:$0xf]
        %v1165 = vld [vmem:[%s9 + $0x17c] sm:$0xf]
        %v1166 = vld [vmem:[%s9 + $0x180] sm:$0xf]
        %v1167 = vld [vmem:[%s9 + $0x184] sm:$0xf]
        %v1168 = vld [vmem:[%s9 + $0x188] sm:$0xf]
        %v1169 = vld [vmem:[%s9 + $0x18c] sm:$0xf]
        %v1170 = vld [vmem:[%s9 + $0x190] sm:$0xf]
        %v1171 = vld [vmem:[%s9 + $0x194] sm:$0xf]
        %v1172 = vld [vmem:[%s9 + $0x198] sm:$0xf]
        %v1173 = vld [vmem:[%s9 + $0x19c] sm:$0xf]
        %v1174 = vld [vmem:[%s9 + $0x1a0] sm:$0xf]
        %v1175 = vld [vmem:[%s9 + $0x1a4] sm:$0xf]
        %v1176 = vld [vmem:[%s9 + $0x1a8] sm:$0xf]
        %v1177 = vld [vmem:[%s9 + $0x1ac] sm:$0xf]
        %v1178 = vld [vmem:[%s9 + $0x1b0] sm:$0xf]
        %v1179 = vld [vmem:[%s9 + $0x1b4] sm:$0xf]
        %v1180 = vld [vmem:[%s9 + $0x1b8] sm:$0xf]
        %v1181 = vld [vmem:[%s9 + $0x1bc] sm:$0xf]
        %v1182 = vld [vmem:[%s9 + $0x1c0] sm:$0xf]
        %v1183 = vld [vmem:[%s9 + $0x1c4] sm:$0xf]
        %v1184 = vld [vmem:[%s9 + $0x1c8] sm:$0xf]
        %v1185 = vld [vmem:[%s9 + $0x1cc] sm:$0xf]
        %v1186 = vld [vmem:[%s9 + $0x1d0] sm:$0xf]
        %v1187 = vld [vmem:[%s9 + $0x1d4] sm:$0xf]
        %v1188 = vld [vmem:[%s9 + $0x1d8] sm:$0xf]
        %v1189 = vld [vmem:[%s9 + $0x1dc] sm:$0xf]
        %v1190 = vld [vmem:[%s9 + $0x1e0] sm:$0xf]
        %v1191 = vld [vmem:[%s9 + $0x1e4] sm:$0xf]
        %v1192 = vld [vmem:[%s9 + $0x1e8] sm:$0xf]
        %v1193 = vld [vmem:[%s9 + $0x1ec] sm:$0xf]
        %v1194 = vld [vmem:[%s9 + $0x1f0] sm:$0xf]
        %v1195 = vld [vmem:[%s9 + $0x1f4] sm:$0xf]
        %v1196 = vld [vmem:[%s9 + $0x1f8] sm:$0xf]
        %v1197 = vld [vmem:[%s9 + $0x1fc] sm:$0xf]
        %v1198 = vld [vmem:[%s9 + $0x200] sm:$0xf]
        %v1199 = vld [vmem:[%s9 + $0x204] sm:$0xf]
        %v1200 = vld [vmem:[%s9 + $0x208] sm:$0xf]
        %v1201 = vld [vmem:[%s9 + $0x20c] sm:$0xf]
        %v1202 = vld [vmem:[%s9 + $0x210] sm:$0xf]
        %v1203 = vld [vmem:[%s9 + $0x214] sm:$0xf]
        %v1204 = vld [vmem:[%s9 + $0x218] sm:$0xf]
        %v1205 = vld [vmem:[%s9 + $0x21c] sm:$0xf]
        %v1206 = vld [vmem:[%s9 + $0x220] sm:$0xf]
        %v1207 = vld [vmem:[%s9 + $0x224] sm:$0xf]
        %v1208 = vld [vmem:[%s9 + $0x228] sm:$0xf]
        %v1209 = vld [vmem:[%s9 + $0x22c] sm:$0xf]
        %v1210 = vld [vmem:[%s9 + $0x230] sm:$0xf]
        %v1211 = vld [vmem:[%s9 + $0x234] sm:$0xf]
        %v1212 = vld [vmem:[%s9 + $0x238] sm:$0xf]
        %v1213 = vld [vmem:[%s9 + $0x23c] sm:$0xf]
        %v1358 = vunpack.c.l.b16 %v1070
        %v1359 = vunpack.c.l.b16 %v1071
        %v1360 = vunpack.c.l.b16 %v1072
        %v1361 = vunpack.c.l.b16 %v1073
        %v1362 = vunpack.c.l.b16 %v1074
        %v1363 = vunpack.c.l.b16 %v1075
        %v1364 = vunpack.c.l.b16 %v1076
        %v1365 = vunpack.c.l.b16 %v1077
        %v1366 = vunpack.c.l.b16 %v1078
        %v1367 = vunpack.c.l.b16 %v1079
        %v1368 = vunpack.c.l.b16 %v1080
        %v1369 = vunpack.c.l.b16 %v1081
        %v1370 = vunpack.c.l.b16 %v1082
        %v1371 = vunpack.c.l.b16 %v1083
        %v1372 = vunpack.c.l.b16 %v1084
        %v1373 = vunpack.c.l.b16 %v1085
        %v1374 = vunpack.c.l.b16 %v1086
        %v1375 = vunpack.c.l.b16 %v1087
        %v1376 = vunpack.c.l.b16 %v1088
        %v1377 = vunpack.c.l.b16 %v1089
        %v1378 = vunpack.c.l.b16 %v1090
        %v1379 = vunpack.c.l.b16 %v1091
        %v1380 = vunpack.c.l.b16 %v1092
        %v1381 = vunpack.c.l.b16 %v1093
        %v1382 = vunpack.c.l.b16 %v1094
        %v1383 = vunpack.c.l.b16 %v1095
        %v1384 = vunpack.c.l.b16 %v1096
        %v1385 = vunpack.c.l.b16 %v1097
        %v1386 = vunpack.c.l.b16 %v1098
        %v1387 = vunpack.c.l.b16 %v1099
        %v1388 = vunpack.c.l.b16 %v1100
        %v1389 = vunpack.c.l.b16 %v1101
        %v1390 = vunpack.c.l.b16 %v1102
        %v1391 = vunpack.c.l.b16 %v1103
        %v1392 = vunpack.c.l.b16 %v1104
        %v1393 = vunpack.c.l.b16 %v1105
        %v1394 = vunpack.c.l.b16 %v1106
        %v1395 = vunpack.c.l.b16 %v1107
        %v1396 = vunpack.c.l.b16 %v1108
        %v1397 = vunpack.c.l.b16 %v1109
        %v1398 = vunpack.c.l.b16 %v1110
        %v1399 = vunpack.c.l.b16 %v1111
        %v1400 = vunpack.c.l.b16 %v1112
        %v1401 = vunpack.c.l.b16 %v1113
        %v1402 = vunpack.c.l.b16 %v1114
        %v1403 = vunpack.c.l.b16 %v1115
        %v1404 = vunpack.c.l.b16 %v1116
        %v1405 = vunpack.c.l.b16 %v1117
        %v1406 = vunpack.c.l.b16 %v1118
        %v1407 = vunpack.c.l.b16 %v1119
        %v1408 = vunpack.c.l.b16 %v1120
        %v1409 = vunpack.c.l.b16 %v1121
        %v1410 = vunpack.c.l.b16 %v1122
        %v1411 = vunpack.c.l.b16 %v1123
        %v1412 = vunpack.c.l.b16 %v1124
        %v1413 = vunpack.c.l.b16 %v1125
        %v1414 = vunpack.c.l.b16 %v1126
        %v1415 = vunpack.c.l.b16 %v1127
        %v1416 = vunpack.c.l.b16 %v1128
        %v1417 = vunpack.c.l.b16 %v1129
        %v1418 = vunpack.c.l.b16 %v1130
        %v1419 = vunpack.c.l.b16 %v1131
        %v1420 = vunpack.c.l.b16 %v1132
        %v1421 = vunpack.c.l.b16 %v1133
        %v1422 = vunpack.c.l.b16 %v1134
        %v1423 = vunpack.c.l.b16 %v1135
        %v1424 = vunpack.c.l.b16 %v1136
        %v1425 = vunpack.c.l.b16 %v1137
        %v1426 = vunpack.c.l.b16 %v1138
        %v1427 = vunpack.c.l.b16 %v1139
        %v1428 = vunpack.c.l.b16 %v1140
        %v1429 = vunpack.c.l.b16 %v1141
        %v1430 = vunpack.c.l.b16 %v1142
        %v1431 = vunpack.c.l.b16 %v1143
        %v1432 = vunpack.c.l.b16 %v1144
        %v1433 = vunpack.c.l.b16 %v1145
        %v1434 = vunpack.c.l.b16 %v1146
        %v1435 = vunpack.c.l.b16 %v1147
        %v1436 = vunpack.c.l.b16 %v1148
        %v1437 = vunpack.c.l.b16 %v1149
        %v1438 = vunpack.c.l.b16 %v1150
        %v1439 = vunpack.c.l.b16 %v1151
        %v1440 = vunpack.c.l.b16 %v1152
        %v1441 = vunpack.c.l.b16 %v1153
        %v1442 = vunpack.c.l.b16 %v1154
        %v1443 = vunpack.c.l.b16 %v1155
        %v1444 = vunpack.c.l.b16 %v1156
        %v1445 = vunpack.c.l.b16 %v1157
        %v1446 = vunpack.c.l.b16 %v1158
        %v1447 = vunpack.c.l.b16 %v1159
        %v1448 = vunpack.c.l.b16 %v1160
        %v1449 = vunpack.c.l.b16 %v1161
        %v1450 = vunpack.c.l.b16 %v1162
        %v1451 = vunpack.c.l.b16 %v1163
        %v1452 = vunpack.c.l.b16 %v1164
        %v1453 = vunpack.c.l.b16 %v1165
        %v1454 = vunpack.c.l.b16 %v1166
        %v1455 = vunpack.c.l.b16 %v1167
        %v1456 = vunpack.c.l.b16 %v1168
        %v1457 = vunpack.c.l.b16 %v1169
        %v1458 = vunpack.c.l.b16 %v1170
        %v1459 = vunpack.c.l.b16 %v1171
        %v1460 = vunpack.c.l.b16 %v1172
        %v1461 = vunpack.c.l.b16 %v1173
        %v1462 = vunpack.c.l.b16 %v1174
        %v1463 = vunpack.c.l.b16 %v1175
        %v1464 = vunpack.c.l.b16 %v1176
        %v1465 = vunpack.c.l.b16 %v1177
        %v1466 = vunpack.c.l.b16 %v1178
        %v1467 = vunpack.c.l.b16 %v1179
        %v1468 = vunpack.c.l.b16 %v1180
        %v1469 = vunpack.c.l.b16 %v1181
        %v1470 = vunpack.c.l.b16 %v1182
        %v1471 = vunpack.c.l.b16 %v1183
        %v1472 = vunpack.c.l.b16 %v1184
        %v1473 = vunpack.c.l.b16 %v1185
        %v1474 = vunpack.c.l.b16 %v1186
        %v1475 = vunpack.c.l.b16 %v1187
        %v1476 = vunpack.c.l.b16 %v1188
        %v1477 = vunpack.c.l.b16 %v1189
        %v1478 = vunpack.c.l.b16 %v1190
        %v1479 = vunpack.c.l.b16 %v1191
        %v1480 = vunpack.c.l.b16 %v1192
        %v1481 = vunpack.c.l.b16 %v1193
        %v1482 = vunpack.c.l.b16 %v1194
        %v1483 = vunpack.c.l.b16 %v1195
        %v1484 = vunpack.c.l.b16 %v1196
        %v1485 = vunpack.c.l.b16 %v1197
        %v1486 = vunpack.c.l.b16 %v1198
        %v1487 = vunpack.c.l.b16 %v1199
        %v1488 = vunpack.c.l.b16 %v1200
        %v1489 = vunpack.c.l.b16 %v1201
        %v1490 = vunpack.c.l.b16 %v1202
        %v1491 = vunpack.c.l.b16 %v1203
        %v1492 = vunpack.c.l.b16 %v1204
        %v1493 = vunpack.c.l.b16 %v1205
        %v1494 = vunpack.c.l.b16 %v1206
        %v1495 = vunpack.c.l.b16 %v1207
        %v1496 = vunpack.c.l.b16 %v1208
        %v1497 = vunpack.c.l.b16 %v1209
        %v1498 = vunpack.c.l.b16 %v1210
        %v1499 = vunpack.c.l.b16 %v1211
        %v1500 = vunpack.c.l.b16 %v1212
        %v1501 = vunpack.c.l.b16 %v1213
        %v1502 = vpack.c.b16 %v1359, %v1358
        %v1503 = vpack.c.b16 %v1361, %v1360
        %v1504 = vpack.c.b16 %v1363, %v1362
        %v1505 = vpack.c.b16 %v1365, %v1364
        %v1506 = vpack.c.b16 %v1367, %v1366
        %v1507 = vpack.c.b16 %v1369, %v1368
        %v1508 = vpack.c.b16 %v1371, %v1370
        %v1509 = vpack.c.b16 %v1373, %v1372
        %v1510 = vpack.c.b16 %v1375, %v1374
        %v1511 = vpack.c.b16 %v1377, %v1376
        %v1512 = vpack.c.b16 %v1379, %v1378
        %v1513 = vpack.c.b16 %v1381, %v1380
        %v1514 = vpack.c.b16 %v1383, %v1382
        %v1515 = vpack.c.b16 %v1385, %v1384
        %v1516 = vpack.c.b16 %v1387, %v1386
        %v1517 = vpack.c.b16 %v1389, %v1388
        %v1518 = vpack.c.b16 %v1391, %v1390
        %v1519 = vpack.c.b16 %v1393, %v1392
        %v1520 = vpack.c.b16 %v1395, %v1394
        %v1521 = vpack.c.b16 %v1397, %v1396
        %v1522 = vpack.c.b16 %v1399, %v1398
        %v1523 = vpack.c.b16 %v1401, %v1400
        %v1524 = vpack.c.b16 %v1403, %v1402
        %v1525 = vpack.c.b16 %v1405, %v1404
        %v1526 = vpack.c.b16 %v1407, %v1406
        %v1527 = vpack.c.b16 %v1409, %v1408
        %v1528 = vpack.c.b16 %v1411, %v1410
        %v1529 = vpack.c.b16 %v1413, %v1412
        %v1530 = vpack.c.b16 %v1415, %v1414
        %v1531 = vpack.c.b16 %v1417, %v1416
        %v1532 = vpack.c.b16 %v1419, %v1418
        %v1533 = vpack.c.b16 %v1421, %v1420
        %v1534 = vpack.c.b16 %v1423, %v1422
        %v1535 = vpack.c.b16 %v1425, %v1424
        %v1536 = vpack.c.b16 %v1427, %v1426
        %v1537 = vpack.c.b16 %v1429, %v1428
        %v1538 = vpack.c.b16 %v1431, %v1430
        %v1539 = vpack.c.b16 %v1433, %v1432
        %v1540 = vpack.c.b16 %v1435, %v1434
        %v1541 = vpack.c.b16 %v1437, %v1436
        %v1542 = vpack.c.b16 %v1439, %v1438
        %v1543 = vpack.c.b16 %v1441, %v1440
        %v1544 = vpack.c.b16 %v1443, %v1442
        %v1545 = vpack.c.b16 %v1445, %v1444
        %v1546 = vpack.c.b16 %v1447, %v1446
        %v1547 = vpack.c.b16 %v1449, %v1448
        %v1548 = vpack.c.b16 %v1451, %v1450
        %v1549 = vpack.c.b16 %v1453, %v1452
        %v1550 = vpack.c.b16 %v1455, %v1454
        %v1551 = vpack.c.b16 %v1457, %v1456
        %v1552 = vpack.c.b16 %v1459, %v1458
        %v1553 = vpack.c.b16 %v1461, %v1460
        %v1554 = vpack.c.b16 %v1463, %v1462
        %v1555 = vpack.c.b16 %v1465, %v1464
        %v1556 = vpack.c.b16 %v1467, %v1466
        %v1557 = vpack.c.b16 %v1469, %v1468
        %v1558 = vpack.c.b16 %v1471, %v1470
        %v1559 = vpack.c.b16 %v1473, %v1472
        %v1560 = vpack.c.b16 %v1475, %v1474
        %v1561 = vpack.c.b16 %v1477, %v1476
        %v1562 = vpack.c.b16 %v1479, %v1478
        %v1563 = vpack.c.b16 %v1481, %v1480
        %v1564 = vpack.c.b16 %v1483, %v1482
        %v1565 = vpack.c.b16 %v1485, %v1484
        %v1566 = vpack.c.b16 %v1487, %v1486
        %v1567 = vpack.c.b16 %v1489, %v1488
        %v1568 = vpack.c.b16 %v1491, %v1490
        %v1569 = vpack.c.b16 %v1493, %v1492
        %v1570 = vpack.c.b16 %v1495, %v1494
        %v1571 = vpack.c.b16 %v1497, %v1496
        %v1572 = vpack.c.b16 %v1499, %v1498
        %v1573 = vpack.c.b16 %v1501, %v1500
        %1646 = vmatprep.subr.bf16.mxu0 0
        %1647 = vmatpush1.bf16.msra.mxu0 %v1509
        %1648 = vmatprep.subr.bf16.mxu0 0
        %1649 = vmatpush1.bf16.msra.mxu0 %v1508
        %1650 = vmatprep.subr.bf16.mxu0 0
        %1651 = vmatpush1.bf16.msra.mxu0 %v1507
        %1652 = vmatprep.subr.bf16.mxu0 0
        %1653 = vmatpush1.bf16.msra.mxu0 %v1506
        %1654 = vmatprep.subr.bf16.mxu0 0
        %1655 = vmatpush1.bf16.msra.mxu0 %v1505
        %1656 = vmatprep.subr.bf16.mxu0 0
        %1657 = vmatpush1.bf16.msra.mxu0 %v1504
        %1658 = vmatprep.subr.bf16.mxu0 0
        %1659 = vmatpush1.bf16.msra.mxu0 %v1503
        %1660 = vmatprep.subr.bf16.mxu0 0
        %1661 = vmatpush1.bf16.msra.mxu0 %v1502
        %1662 = vmatprep.subr.bf16.mxu0 0
        %1663 = vmatpush2.bf16.msra.mxu0 %v1517
        %1664 = vmatprep.subr.bf16.mxu0 0
        %1665 = vmatpush2.bf16.msra.mxu0 %v1516
        %1666 = vmatprep.subr.bf16.mxu0 0
        %1667 = vmatpush2.bf16.msra.mxu0 %v1515
        %1668 = vmatprep.subr.bf16.mxu0 0
        %1669 = vmatpush2.bf16.msra.mxu0 %v1514
        %1670 = vmatprep.subr.bf16.mxu0 0
        %1671 = vmatpush2.bf16.msra.mxu0 %v1513
        %1672 = vmatprep.subr.bf16.mxu0 0
        %1673 = vmatpush2.bf16.msra.mxu0 %v1512
        %1674 = vmatprep.subr.bf16.mxu0 0
        %1675 = vmatpush2.bf16.msra.mxu0 %v1511
        %1676 = vmatprep.subr.bf16.mxu0 0
        %1677 = vmatpush2.bf16.msra.mxu0 %v1510
        %1678 = vmatprep.mubr.bf16.mxu0 %v1044
        %1679 = vmatmul.mubr.bf16.gmra.mxu0 %v1043
        %v1680 = vpop.f32.mrf.mxu0
        %v1681 = vadd.f32 0.0, %v1680
        %v1682 = vpop.f32.mrf.mxu0
        %v1683 = vpop.f32.mrf.mxu0
        %v1684 = vadd.f32 0.0, %v1683
        %v1685 = vpop.f32.mrf.mxu0
        %1686 = vmatprep.mubr.bf16.mxu0 %v1050
        %1687 = vmatmul.mubr.bf16.gmra.mxu0 %v1049
        %v1688 = vpop.f32.mrf.mxu0
        %v1689 = vadd.f32 0.0, %v1688
        %v1690 = vpop.f32.mrf.mxu0
        %v1691 = vpop.f32.mrf.mxu0
        %v1692 = vadd.f32 0.0, %v1691
        %v1693 = vpop.f32.mrf.mxu0
        %1694 = vmatprep.mubr.bf16.mxu0 %v1056
        %1695 = vmatmul.mubr.bf16.gmra.mxu0 %v1055
        %v1696 = vpop.f32.mrf.mxu0
        %v1697 = vadd.f32 0.0, %v1696
        %v1698 = vpop.f32.mrf.mxu0
        %v1699 = vpop.f32.mrf.mxu0
        %v1700 = vadd.f32 0.0, %v1699
        %v1701 = vpop.f32.mrf.mxu0
        %1702 = vmatprep.mubr.bf16.mxu0 %v1062
        %1703 = vmatmul.mubr.bf16.gmra.mxu0 %v1061
        %v1704 = vpop.f32.mrf.mxu0
        %v1705 = vadd.f32 0.0, %v1704
        %v1706 = vpop.f32.mrf.mxu0
        %v1707 = vpop.f32.mrf.mxu0
        %v1708 = vadd.f32 0.0, %v1707
        %v1709 = vpop.f32.mrf.mxu0
        %1710 = vdwg.mxu0
        %1711 = vmatprep.subr.bf16.mxu0 0
        %1712 = vmatpush1.bf16.msra.mxu0 %v1525
        %1713 = vmatprep.subr.bf16.mxu0 0
        %1714 = vmatpush1.bf16.msra.mxu0 %v1524
        %1715 = vmatprep.subr.bf16.mxu0 0
        %1716 = vmatpush1.bf16.msra.mxu0 %v1523
        %1717 = vmatprep.subr.bf16.mxu0 0
        %1718 = vmatpush1.bf16.msra.mxu0 %v1522
        %1719 = vmatprep.subr.bf16.mxu0 0
        %1720 = vmatpush1.bf16.msra.mxu0 %v1521
        %1721 = vmatprep.subr.bf16.mxu0 0
        %1722 = vmatpush1.bf16.msra.mxu0 %v1520
        %1723 = vmatprep.subr.bf16.mxu0 0
        %1724 = vmatpush1.bf16.msra.mxu0 %v1519
        %1725 = vmatprep.subr.bf16.mxu0 0
        %1726 = vmatpush1.bf16.msra.mxu0 %v1518
        %1727 = vmatprep.subr.bf16.mxu0 0
        %1728 = vmatpush2.bf16.msra.mxu0 %v1533
        %1729 = vmatprep.subr.bf16.mxu0 0
        %1730 = vmatpush2.bf16.msra.mxu0 %v1532
        %1731 = vmatprep.subr.bf16.mxu0 0
        %1732 = vmatpush2.bf16.msra.mxu0 %v1531
        %1733 = vmatprep.subr.bf16.mxu0 0
        %1734 = vmatpush2.bf16.msra.mxu0 %v1530
        %1735 = vmatprep.subr.bf16.mxu0 0
        %1736 = vmatpush2.bf16.msra.mxu0 %v1529
        %1737 = vmatprep.subr.bf16.mxu0 0
        %1738 = vmatpush2.bf16.msra.mxu0 %v1528
        %1739 = vmatprep.subr.bf16.mxu0 0
        %1740 = vmatpush2.bf16.msra.mxu0 %v1527
        %1741 = vmatprep.subr.bf16.mxu0 0
        %1742 = vmatpush2.bf16.msra.mxu0 %v1526
        %1743 = vmatprep.mubr.bf16.mxu0 %v1046
        %1744 = vmatmul.mubr.bf16.gmra.mxu0 %v1045
        %v1745 = vpop.f32.mrf.mxu0
        %v1746 = vadd.f32 %v1681, %v1745
        %v1747 = vpop.f32.mrf.mxu0
        %v1748 = vpop.f32.mrf.mxu0
        %v1749 = vadd.f32 %v1684, %v1748
        %v1750 = vpop.f32.mrf.mxu0
        %1751 = vmatprep.mubr.bf16.mxu0 %v1052
        %1752 = vmatmul.mubr.bf16.gmra.mxu0 %v1051
        %v1753 = vpop.f32.mrf.mxu0
        %v1754 = vadd.f32 %v1689, %v1753
        %v1755 = vpop.f32.mrf.mxu0
        %v1756 = vpop.f32.mrf.mxu0
        %v1757 = vadd.f32 %v1692, %v1756
        %v1758 = vpop.f32.mrf.mxu0
        %1759 = vmatprep.mubr.bf16.mxu0 %v1058
        %1760 = vmatmul.mubr.bf16.gmra.mxu0 %v1057
        %v1761 = vpop.f32.mrf.mxu0
        %v1762 = vadd.f32 %v1697, %v1761
        %v1763 = vpop.f32.mrf.mxu0
        %v1764 = vpop.f32.mrf.mxu0
        %v1765 = vadd.f32 %v1700, %v1764
        %v1766 = vpop.f32.mrf.mxu0
        %1767 = vmatprep.mubr.bf16.mxu0 %v1064
        %1768 = vmatmul.mubr.bf16.gmra.mxu0 %v1063
        %v1769 = vpop.f32.mrf.mxu0
        %v1770 = vadd.f32 %v1705, %v1769
        %v1771 = vpop.f32.mrf.mxu0
        %v1772 = vpop.f32.mrf.mxu0
        %v1773 = vadd.f32 %v1708, %v1772
        %v1774 = vpop.f32.mrf.mxu0
        %1775 = vdwg.mxu0
        %1776 = vmatprep.subr.bf16.mxu0 0
        %1777 = vmatpush1.bf16.msra.mxu0 %v1541
        %1778 = vmatprep.subr.bf16.mxu0 0
        %1779 = vmatpush1.bf16.msra.mxu0 %v1540
        %1780 = vmatprep.subr.bf16.mxu0 0
        %1781 = vmatpush1.bf16.msra.mxu0 %v1539
        %1782 = vmatprep.subr.bf16.mxu0 0
        %1783 = vmatpush1.bf16.msra.mxu0 %v1538
        %1784 = vmatprep.subr.bf16.mxu0 0
        %1785 = vmatpush1.bf16.msra.mxu0 %v1537
        %1786 = vmatprep.subr.bf16.mxu0 0
        %1787 = vmatpush1.bf16.msra.mxu0 %v1536
        %1788 = vmatprep.subr.bf16.mxu0 0
        %1789 = vmatpush1.bf16.msra.mxu0 %v1535
        %1790 = vmatprep.subr.bf16.mxu0 0
        %1791 = vmatpush1.bf16.msra.mxu0 %v1534
        %1792 = vmatprep.subr.bf16.mxu0 0
        %1793 = vmatpush2.bf16.msra.mxu0 %v1549
        %1794 = vmatprep.subr.bf16.mxu0 0
        %1795 = vmatpush2.bf16.msra.mxu0 %v1548
        %1796 = vmatprep.subr.bf16.mxu0 0
        %1797 = vmatpush2.bf16.msra.mxu0 %v1547
        %1798 = vmatprep.subr.bf16.mxu0 0
        %1799 = vmatpush2.bf16.msra.mxu0 %v1546
        %1800 = vmatprep.subr.bf16.mxu0 0
        %1801 = vmatpush2.bf16.msra.mxu0 %v1545
        %1802 = vmatprep.subr.bf16.mxu0 0
        %1803 = vmatpush2.bf16.msra.mxu0 %v1544
        %1804 = vmatprep.subr.bf16.mxu0 0
        %1805 = vmatpush2.bf16.msra.mxu0 %v1543
        %1806 = vmatprep.subr.bf16.mxu0 0
        %1807 = vmatpush2.bf16.msra.mxu0 %v1542
        %1808 = vmatprep.mubr.bf16.mxu0 %v1048
        %1809 = vmatmul.mubr.bf16.gmra.mxu0 %v1047
        %v1810 = vpop.f32.mrf.mxu0
        %v1811 = vadd.f32 %v1746, %v1810
        %v1812 = vpop.f32.mrf.mxu0
        %v1813 = vpop.f32.mrf.mxu0
        %v1814 = vadd.f32 %v1749, %v1813
        %v1815 = vpop.f32.mrf.mxu0
        %1816 = vmatprep.mubr.bf16.mxu0 %v1054
        %1817 = vmatmul.mubr.bf16.gmra.mxu0 %v1053
        %v1818 = vpop.f32.mrf.mxu0
        %v1819 = vadd.f32 %v1754, %v1818
        %v1820 = vpop.f32.mrf.mxu0
        %v1821 = vpop.f32.mrf.mxu0
        %v1822 = vadd.f32 %v1757, %v1821
        %v1823 = vpop.f32.mrf.mxu0
        %1824 = vmatprep.mubr.bf16.mxu0 %v1060
        %1825 = vmatmul.mubr.bf16.gmra.mxu0 %v1059
        %v1826 = vpop.f32.mrf.mxu0
        %v1827 = vadd.f32 %v1762, %v1826
        %v1828 = vpop.f32.mrf.mxu0
        %v1829 = vpop.f32.mrf.mxu0
        %v1830 = vadd.f32 %v1765, %v1829
        %v1831 = vpop.f32.mrf.mxu0
        %1832 = vmatprep.mubr.bf16.mxu0 %v1066
        %1833 = vmatmul.mubr.bf16.gmra.mxu0 %v1065
        %v1834 = vpop.f32.mrf.mxu0
        %v1835 = vadd.f32 %v1770, %v1834
        %v1836 = vpop.f32.mrf.mxu0
        %v1837 = vpop.f32.mrf.mxu0
        %v1838 = vadd.f32 %v1773, %v1837
        %v1839 = vpop.f32.mrf.mxu0
        %1840 = vdwg.mxu0
        %1841 = vmatprep.subr.bf16.mxu0 0
        %1842 = vmatpush1.bf16.msra.mxu0 %v1557
        %1843 = vmatprep.subr.bf16.mxu0 0
        %1844 = vmatpush1.bf16.msra.mxu0 %v1556
        %1845 = vmatprep.subr.bf16.mxu0 0
        %1846 = vmatpush1.bf16.msra.mxu0 %v1555
        %1847 = vmatprep.subr.bf16.mxu0 0
        %1848 = vmatpush1.bf16.msra.mxu0 %v1554
        %1849 = vmatprep.subr.bf16.mxu0 0
        %1850 = vmatpush1.bf16.msra.mxu0 %v1553
        %1851 = vmatprep.subr.bf16.mxu0 0
        %1852 = vmatpush1.bf16.msra.mxu0 %v1552
        %1853 = vmatprep.subr.bf16.mxu0 0
        %1854 = vmatpush1.bf16.msra.mxu0 %v1551
        %1855 = vmatprep.subr.bf16.mxu0 0
        %1856 = vmatpush1.bf16.msra.mxu0 %v1550
        %1857 = vmatprep.subr.bf16.mxu0 0
        %1858 = vmatpush2.bf16.msra.mxu0 %v1565
        %1859 = vmatprep.subr.bf16.mxu0 0
        %1860 = vmatpush2.bf16.msra.mxu0 %v1564
        %1861 = vmatprep.subr.bf16.mxu0 0
        %1862 = vmatpush2.bf16.msra.mxu0 %v1563
        %1863 = vmatprep.subr.bf16.mxu0 0
        %1864 = vmatpush2.bf16.msra.mxu0 %v1562
        %1865 = vmatprep.subr.bf16.mxu0 0
        %1866 = vmatpush2.bf16.msra.mxu0 %v1561
        %1867 = vmatprep.subr.bf16.mxu0 0
        %1868 = vmatpush2.bf16.msra.mxu0 %v1560
        %1869 = vmatprep.subr.bf16.mxu0 0
        %1870 = vmatpush2.bf16.msra.mxu0 %v1559
        %1871 = vmatprep.subr.bf16.mxu0 0
        %1872 = vmatpush2.bf16.msra.mxu0 %v1558
        %1873 = vmatprep.mubr.bf16.mxu0 %v1050
        %1874 = vmatmul.mubr.bf16.gmra.mxu0 %v1049
        %v1875 = vpop.f32.mrf.mxu0
        %v1876 = vadd.f32 %v1811, %v1875
        %v1877 = vpop.f32.mrf.mxu0
        %v1878 = vpop.f32.mrf.mxu0
        %v1879 = vadd.f32 %v1814, %v1878
        %v1880 = vpop.f32.mrf.mxu0
        %1881 = vmatprep.mubr.bf16.mxu0 %v1056
        %1882 = vmatmul.mubr.bf16.gmra.mxu0 %v1055
        %v1883 = vpop.f32.mrf.mxu0
        %v1884 = vadd.f32 %v1819, %v1883
        %v1885 = vpop.f32.mrf.mxu0
        %v1886 = vpop.f32.mrf.mxu0
        %v1887 = vadd.f32 %v1822, %v1886
        %v1888 = vpop.f32.mrf.mxu0
        %1889 = vmatprep.mubr.bf16.mxu0 %v1062
        %1890 = vmatmul.mubr.bf16.gmra.mxu0 %v1061
        %v1891 = vpop.f32.mrf.mxu0
        %v1892 = vadd.f32 %v1827, %v1891
        %v1893 = vpop.f32.mrf.mxu0
        %v1894 = vpop.f32.mrf.mxu0
        %v1895 = vadd.f32 %v1830, %v1894
        %v1896 = vpop.f32.mrf.mxu0
        %1897 = vmatprep.mubr.bf16.mxu0 %v1068
        %1898 = vmatmul.mubr.bf16.gmra.mxu0 %v1067
        %v1899 = vpop.f32.mrf.mxu0
        %v1900 = vadd.f32 %v1835, %v1899
        %v1901 = vpop.f32.mrf.mxu0
        %v1902 = vpop.f32.mrf.mxu0
        %v1903 = vadd.f32 %v1838, %v1902
        %v1904 = vpop.f32.mrf.mxu0
        %1905 = vdwg.mxu0
        %1906 = vmatprep.subr.bf16.mxu0 0
        %1907 = vmatpush1.bf16.msra.mxu0 %v1573
        %1908 = vmatprep.subr.bf16.mxu0 0
        %1909 = vmatpush1.bf16.msra.mxu0 %v1572
        %1910 = vmatprep.subr.bf16.mxu0 0
        %1911 = vmatpush1.bf16.msra.mxu0 %v1571
        %1912 = vmatprep.subr.bf16.mxu0 0
        %1913 = vmatpush1.bf16.msra.mxu0 %v1570
        %1914 = vmatprep.subr.bf16.mxu0 0
        %1915 = vmatpush1.bf16.msra.mxu0 %v1569
        %1916 = vmatprep.subr.bf16.mxu0 0
        %1917 = vmatpush1.bf16.msra.mxu0 %v1568
        %1918 = vmatprep.subr.bf16.mxu0 0
        %1919 = vmatpush1.bf16.msra.mxu0 %v1567
        %1920 = vmatprep.subr.bf16.mxu0 0
        %1921 = vmatpush1.bf16.msra.mxu0 %v1566
        %1922 = vmatprep.subr.bf16.mxu0 0
        %1923 = vmatpush2.bf16.msra.mxu0 0
        %1924 = vmatprep.subr.bf16.mxu0 0
        %1925 = vmatpush2.bf16.msra.mxu0 0
        %1926 = vmatprep.subr.bf16.mxu0 0
        %1927 = vmatpush2.bf16.msra.mxu0 0
        %1928 = vmatprep.subr.bf16.mxu0 0
        %1929 = vmatpush2.bf16.msra.mxu0 0
        %1930 = vmatprep.subr.bf16.mxu0 0
        %1931 = vmatpush2.bf16.msra.mxu0 0
        %1932 = vmatprep.subr.bf16.mxu0 0
        %1933 = vmatpush2.bf16.msra.mxu0 0
        %1934 = vmatprep.subr.bf16.mxu0 0
        %1935 = vmatpush2.bf16.msra.mxu0 0
        %1936 = vmatprep.subr.bf16.mxu0 0
        %1937 = vmatpush2.bf16.msra.mxu0 0
        %1938 = vmatprep.mubr.bf16.mxu0 0
        %1939 = vmatmul.mubr.bf16.gmra.mxu0 %v1051
        %v1940 = vpop.f32.mrf.mxu0
        %v1941 = vadd.f32 %v1876, %v1940
        %v1942 = vpop.f32.mrf.mxu0
        %v1943 = vpop.f32.mrf.mxu0
        %v1944 = vadd.f32 %v1879, %v1943
        %v1945 = vpop.f32.mrf.mxu0
        %1946 = vmatprep.mubr.bf16.mxu0 0
        %1947 = vmatmul.mubr.bf16.gmra.mxu0 %v1057
        %v1948 = vpop.f32.mrf.mxu0
        %v1949 = vadd.f32 %v1884, %v1948
        %v1950 = vpop.f32.mrf.mxu0
        %v1951 = vpop.f32.mrf.mxu0
        %v1952 = vadd.f32 %v1887, %v1951
        %v1953 = vpop.f32.mrf.mxu0
        %1954 = vmatprep.mubr.bf16.mxu0 0
        %1955 = vmatmul.mubr.bf16.gmra.mxu0 %v1063
        %v1956 = vpop.f32.mrf.mxu0
        %v1957 = vadd.f32 %v1892, %v1956
        %v1958 = vpop.f32.mrf.mxu0
        %v1959 = vpop.f32.mrf.mxu0
        %v1960 = vadd.f32 %v1895, %v1959
        %v1961 = vpop.f32.mrf.mxu0
        %1962 = vmatprep.mubr.bf16.mxu0 0
        %1963 = vmatmul.mubr.bf16.gmra.mxu0 %v1069
        %v1964 = vpop.f32.mrf.mxu0
        %v1965 = vadd.f32 %v1900, %v1964
        %v1966 = vpop.f32.mrf.mxu0
        %v1967 = vpop.f32.mrf.mxu0
        %v1968 = vadd.f32 %v1903, %v1967
        %v1969 = vpop.f32.mrf.mxu0
        %1970 = vdwg.mxu0
        %v1971 = vld [vmem:[%s10] sm:$0x1]
        %v1973 = vlaneseq
        %v1974 = vshrl.u32 %v1973, 7
        %v1975 = vsub.s32 0, %v1974
        %v1976 = vrot.slane %v1971, %v1975
        %v1978 = vadd.f32 %v1941, %v1976
        %v1979 = vadd.f32 %v1944, %v1976
        %v1980 = vadd.f32 %v1949, %v1976
        %v1981 = vadd.f32 %v1952, %v1976
        %v1982 = vadd.f32 %v1957, %v1976
        %v1983 = vadd.f32 %v1960, %v1976
        %v1984 = vadd.f32 %v1965, %v1976
        %v1985 = vadd.f32 %v1968, %v1976
        %v1986 = vld [vmem:[%s445] sm:$0xff]
        %v1987 = vld [vmem:[%s445 + $0x8] sm:$0xff]
        %v1988 = vld [vmem:[%s445 + $0x10] sm:$0xff]
        %v1989 = vld [vmem:[%s445 + $0x18] sm:$0xff]
        %v1990 = vld [vmem:[%s445 + $0x20] sm:$0xff]
        %v1991 = vld [vmem:[%s445 + $0x28] sm:$0xff]
        %v1992 = vld [vmem:[%s445 + $0x30] sm:$0xff]
        %v1993 = vld [vmem:[%s445 + $0x38] sm:$0xff]
        %v1994 = vadd.f32 %v1978, %v1986
        %v1995 = vadd.f32 %v1979, %v1987
        %v1996 = vadd.f32 %v1980, %v1988
        %v1997 = vadd.f32 %v1981, %v1989
        %v1998 = vadd.f32 %v1982, %v1990
        %v1999 = vadd.f32 %v1983, %v1991
        %v2000 = vadd.f32 %v1984, %v1992
        %v2001 = vadd.f32 %v1985, %v1993
        %vm2002 = vcmask 261120
        %2003 = vst.msk [vmem:[%s432] sm:$0xff] %vm2002, %v1994
        %2004 = vst.msk [vmem:[%s432 + $0x8] sm:$0xff] %vm2002, %v1995
        %2005 = vst.msk [vmem:[%s432 + $0x10] sm:$0xff] %vm2002, %v1996
        %2006 = vst.msk [vmem:[%s432 + $0x18] sm:$0xff] %vm2002, %v1997
        %2007 = vst.msk [vmem:[%s432 + $0x20] sm:$0xff] %vm2002, %v1998
        %2008 = vst.msk [vmem:[%s432 + $0x28] sm:$0xff] %vm2002, %v1999
        %2009 = vst.msk [vmem:[%s432 + $0x30] sm:$0xff] %vm2002, %v2000
        %2010 = vst.msk [vmem:[%s432 + $0x38] sm:$0xff] %vm2002, %v2001
        %s2011 = sand.u32 %s301, 1
        %s2012 = scalar_lea.sflag [#allocation4], %s2011
        %s2013 = sand.u32 %s301, 1
        %s2014 = smul.addr %s2013, 64
        %s2015 = scalar_lea.vmem [#allocation3], %s2014
        // Predicated region
        $region69: #{decoding_block.3} parent=67 // pred_check
          %p2016 = pneg %p311
        $region70: #{decoding_block.3} parent=67 // pred_check_branch
          %2018 = sbr.rel (%p2016) target = $region72
        $region71: #{decoding_block.3} parent=67 // pred_region
          %s2020 = ssub.s32 1024, 1024
          %2021 = vsyncadd %s2012, %s2020
          %s2022 = smul.addr %s26, 8
          %s2023 = smul.addr %s2022, 128
          %s2024 = scalar_lea.hbm %s12, %s2023
          %s2025 = sshll.u32 %s2015, 4
          %s2026 = int_to_ptr.vmem [resolvable:$true] %s2025
          %2031 = dma.vmem_to_hbm [thread:$0]  %s2026, 1024, %s2024, %s2012, 128, 128, 8
        $region72: #{decoding_block.3} parent=67 // pred_fallthru
          _
      $region68: #{decoding_block.3} parent=5 // pred_fallthru
        _
      %p2032 = scmp.le.s32.totalorder 2, %s21
      // Predicated region
      $region73: #{decoding_block.3} parent=5 // pred_check
        %p2033 = pneg %p2032
      $region74: #{decoding_block.3} parent=5 // pred_check_branch
        %2035 = sbr.rel (%p2033) target = $region76
      $region75: #{decoding_block.3} parent=5 // pred_region
        %s2036 = ssub.s32 %s21, 2
        // Predicated region
        $region77: #{decoding_block.3} parent=75 // pred_check
          %p2037 = pneg %p317
        $region78: #{decoding_block.3} parent=75 // pred_check_branch
          %2039 = sbr.rel (%p2037) target = $region80
        $region79: #{decoding_block.3} parent=75 // pred_region
          %s2040 = sand.u32 %s302, 1
          %s2041 = scalar_lea.sflag [#allocation4], %s2040
          %s2042 = sand.u32 %s302, 1
          %s2043 = smul.addr %s2042, 64
          %s2044 = scalar_lea.vmem [#allocation3], %s2043
          %2045 = dma.done %s2041, 1024
        $region80: #{decoding_block.3} parent=75 // pred_fallthru
          _
      $region76: #{decoding_block.3} parent=5 // pred_fallthru
        _
    $region6: #{decoding_block.3} parent=1 // loop_footer
      %s25 = sadd.s32 1, %s21
    $region7: #{decoding_block.3} parent=1 // loop_footer_branch
      %20 = sbr.rel target = $region3
    $region8: #{decoding_block.3} parent=1 // loop_exit
      _
    %2046 = vsyncpa [#allocation4], 1
    %s2047 = scalar_lea.sflag [#allocation4], 1
    %2048 = vsyncpa %s2047, 1

</llo_original>
